<compile_context>
chip_gen: v7x
topology: tpu7x:2x2x1
jax: 0.10.0
libtpu: 0.0.40
codegen_flags: <defaults>
</compile_context>

<pallas_src>
import functools
import math

import jax
import jax.numpy as jnp
from jax import lax
from jax.experimental import pallas as pl
from jax.experimental.pallas import tpu as pltpu


# ----------------------------------------------------------------- helpers --
def _round_up(x, m):
    return (x + m - 1) // m * m


def _choose_tm(m, cap):
    """Largest tile <= cap that divides m and is a multiple of 8, else m."""
    if m <= cap:
        return m
    for d in range(cap, 7, -1):
        if m % d == 0 and d % 8 == 0:
            return d
    return m


def _cparams(sem, est_bytes):
    """dimension_semantics + explicit VMEM budget (defaults are 16/32 MiB on
    v5e / v6e-v7x; cap well below v7x's 64 MiB physical VMEM)."""
    lim = int(min(1.5 * est_bytes + (8 << 20), 48 << 20))
    return pltpu.CompilerParams(dimension_semantics=sem, vmem_limit_bytes=lim)


# ----------------------------------------------- stride-1 conv (slab path) --
def _conv_slab_kernel(a_hbm, w_ref, b_ref, o_ref, slab, sem, *,
                      tm, halo, hp, n_kh, taps, mb):
    """One (batch, row-tile) step of a stride-1 conv.

    DMAs a single (tm + halo)-row slab of the padded channels-last activation
    (double-buffered across the row-tile axis, prefetching the next tile),
    then accumulates one (tm, kW*Cin) @ (kW*Cin, Cout) MXU matmul per (kd, kh)
    tap from static slices of the slab.  Weights/bias are VMEM-resident
    (constant index_map -> fetched once per core)."""
    ni = pl.program_id(0)
    mi = pl.program_id(1)
    rows = tm + halo
    slot = mi % 2

    def slab_copy(m_idx, sl):
        return pltpu.make_async_copy(
            a_hbm.at[ni, pl.ds(m_idx * tm, rows), :], slab.at[sl], sem.at[sl])

    @pl.when(mi == 0)
    def _():
        slab_copy(0, 0).start()                 # prime first tile of this batch

    if mb > 1:
        @pl.when(mi + 1 < mb)
        def _():
            slab_copy(mi + 1, 1 - slot).start()  # prefetch next row tile

    # Wait on the exact descriptor that was started for this tile (identical
    # src slice whether it was primed above or prefetched by the previous
    # step), so semaphore bookkeeping always matches.
    slab_copy(mi, slot).wait()

    acc = None
    for t in range(taps):
        kd, kh = divmod(t, n_kh)
        roff = kd * hp + kh                      # static row offset of this tap
        a = slab[slot, pl.ds(roff, tm), :]
        part = jnp.dot(a, w_ref[t], preferred_element_type=jnp.float32)
        acc = part if acc is None else acc + part
    o_ref[0] = (acc + b_ref[...]).astype(o_ref.dtype)


@functools.partial(jax.jit, static_argnames=("kernel", "padding", "cout"))
def _conv3d_slab_impl(x, wtap, bias, *, kernel, padding, cout):
    """Stride-1 Conv3d, channels-last, single output column (Wo == 1)."""
    kD, kH, kW = kernel
    pD, pH, pW = padding
    n, D, H, W, cin = x.shape
    Hp, Wp = H + 2 * pH, W + 2 * pW
    assert Wp == kW, "slab conv assumes the padded W extent equals kW (Wo == 1)"
    Do, Ho = D + 2 * pD - kD + 1, Hp - kH + 1
    kwc, taps = kW * cin, kD * kH
    halo = (kD - 1) * Hp + (kH - 1)

    M = Do * Hp                        # Do planes of Hp rows; wrap rows dropped below
    Mp = _round_up(M, 8)
    need = Mp + halo                   # highest padded row any tap may touch
    extra_d = max(0, -(-need // Hp) - (D + 2 * pD))
    xp = jnp.pad(x, ((0, 0), (pD, pD + extra_d), (pH, pH), (pW, pW), (0, 0)))
    Q = (D + 2 * pD + extra_d) * Hp
    a_src = xp.reshape(n, Q, kwc)

    tm = _choose_tm(Mp, 2048)
    mb = Mp // tm
    rows = tm + halo
    assert mb * tm + halo <= Q

    est = (2 * taps * kwc * cout * 2        # resident weights (double-buffered)
           + 2 * rows * kwc * 2             # slab double buffer
           + 2 * tm * cout * 2              # output double buffer
           + 4 * tm * cout * 4              # fp32 accumulation temporaries
           + 2 * tm * kwc * 2)              # slab-slice staging
    out = pl.pallas_call(
        functools.partial(_conv_slab_kernel, tm=tm, halo=halo, hp=Hp,
                          n_kh=kH, taps=taps, mb=mb),
        out_shape=jax.ShapeDtypeStruct((n, Mp, cout), jnp.bfloat16),
        grid=(n, mb),
        in_specs=[
            pl.BlockSpec(memory_space=pl.ANY),                          # activations (HBM)
            pl.BlockSpec((taps, kwc, cout), lambda ni, mi: (0, 0, 0)),  # weights, resident
            pl.BlockSpec((1, cout), lambda ni, mi: (0, 0)),             # bias, resident
        ],
        out_specs=pl.BlockSpec((1, tm, cout), lambda ni, mi: (ni, mi, 0)),
        scratch_shapes=[
            pltpu.VMEM((2, rows, kwc), jnp.bfloat16),   # slab double buffer
            pltpu.SemaphoreType.DMA((2,)),
        ],
        compiler_params=_cparams(("parallel", "arbitrary"), est),
    )(a_src, wtap, bias)

    out = out[:, :M].reshape(n, Do, Hp, cout)[:, :, :Ho, :]   # drop wrap rows
    return out.reshape(n, Do, Ho, 1, cout)


# ------------------------------------------- strided conv (im2col + matmul) --
def _mm_bias_kernel(a_ref, w_ref, b_ref, o_ref):
    o_ref[...] = (jnp.dot(a_ref[...], w_ref[...],
                          preferred_element_type=jnp.float32)
                  + b_ref[...]).astype(o_ref.dtype)


def _dense_matmul_call(a, w, bias, out_dtype):
    M, K = a.shape
    C = w.shape[-1]
    tm = _choose_tm(M, 1024)
    mb = M // tm
    est = (2 * tm * K * a.dtype.itemsize + 2 * K * C * w.dtype.itemsize
           + 4 * tm * C * 4)
    return pl.pallas_call(
        _mm_bias_kernel,
        out_shape=jax.ShapeDtypeStruct((M, C), out_dtype),
        grid=(mb,),
        in_specs=[pl.BlockSpec((tm, K), lambda i: (i, 0)),
                  pl.BlockSpec((K, C), lambda i: (0, 0)),   # weight fetched once
                  pl.BlockSpec((1, C), lambda i: (0, 0))],
        out_specs=pl.BlockSpec((tm, C), lambda i: (i, 0)),
        compiler_params=_cparams(("parallel",), est),
    )(a, w, bias)


@functools.partial(jax.jit, static_argnames=("kernel", "stride", "padding", "cout"))
def _conv3d_im2col_impl(x, wcol, bias, *, kernel, stride, padding, cout):
    """Strided Conv3d: JAX-side im2col (K = kD*kH*kW*Cin) + one MXU matmul."""
    kD, kH, kW = kernel
    sD, sH, sW = stride
    pD, pH, pW = padding
    n, D, H, W, cin = x.shape
    Do = (D + 2 * pD - kD) // sD + 1
    Ho = (H + 2 * pH - kH) // sH + 1
    Wo = (W + 2 * pW - kW) // sW + 1
    # TODO(synk): Wo > 1 would need a sliding kw window; not needed for ARTNet.
    assert Wo == 1, "this ARTNet lowering assumes a single output column (Wo == 1)"
    xp = jnp.pad(x, ((0, 0), (pD, pD), (pH, pH), (pW, pW), (0, 0)))
    cols = []
    for kd in range(kD):
        for kh in range(kH):
            s = lax.slice(
                xp, (0, kd, kh, 0, 0),
                (n, kd + sD * (Do - 1) + 1, kh + sH * (Ho - 1) + 1, kW, cin),
                (1, sD, sH, 1, 1))
            cols.append(s.reshape(n * Do * Ho, kW * cin))
    a2 = jnp.concatenate(cols, axis=-1)            # K ordered (kd, kh, kw, cin)
    out = _dense_matmul_call(a2, wcol, bias, jnp.bfloat16)
    return out.reshape(n, Do, Ho, 1, cout)


def conv3d(p, x):
    if "wtap" in p:
        return _conv3d_slab_impl(x, p["wtap"], p["bias"], kernel=p["kernel"],
                                 padding=p["padding"], cout=p["cout"])
    return _conv3d_im2col_impl(x, p["wcol"], p["bias"], kernel=p["kernel"],
                               stride=p["stride"], padding=p["padding"],
                               cout=p["cout"])


# ------------------------------------------------------- 1x1x1 / reduction --
@jax.jit
def _conv1x1_impl(x, wmat, bias):
    cin = x.shape[-1]
    cout = wmat.shape[-1]
    out = _dense_matmul_call(x.reshape(-1, cin), wmat, bias, jnp.bfloat16)
    return out.reshape(x.shape[:-1] + (cout,))


def _dual_mm_kernel(a1_ref, a2_ref, w1_ref, w2_ref, o_ref):
    acc = jnp.dot(a1_ref[...], w1_ref[...], preferred_element_type=jnp.float32)
    acc = acc + jnp.dot(a2_ref[...], w2_ref[...], preferred_element_type=jnp.float32)
    o_ref[...] = acc.astype(o_ref.dtype)


@jax.jit
def _reduction_impl(x_rel, x_dual, w1, w2):
    """SMART reduction: relu(cat(rel, app)) -> 1x1x1 conv, as a dual matmul.
    x_dual is the fused 128-channel (rel|app) tensor; w2's first 64 rows are
    zero so only the appearance half contributes."""
    c1, c2 = x_rel.shape[-1], x_dual.shape[-1]
    cout = w1.shape[-1]
    a1 = x_rel.reshape(-1, c1)
    a2 = x_dual.reshape(-1, c2)
    M = a1.shape[0]
    tm = _choose_tm(M, 1024)
    mb = M // tm
    est = 2 * tm * (c1 + c2) * 2 + 2 * (c1 + c2) * cout * 2 + 4 * tm * cout * 4
    out = pl.pallas_call(
        _dual_mm_kernel,
        out_shape=jax.ShapeDtypeStruct((M, cout), jnp.bfloat16),
        grid=(mb,),
        in_specs=[pl.BlockSpec((tm, c1), lambda i: (i, 0)),
                  pl.BlockSpec((tm, c2), lambda i: (i, 0)),
                  pl.BlockSpec((c1, cout), lambda i: (0, 0)),
                  pl.BlockSpec((c2, cout), lambda i: (0, 0))],
        out_specs=pl.BlockSpec((tm, cout), lambda i: (i, 0)),
        compiler_params=_cparams(("parallel",), est),
    )(a1, a2, w1, w2)
    return out.reshape(x_rel.shape[:-1] + (cout,))


# ----------------------------------------------- BatchNorm (train mode) -----
def _stats_kernel(x_ref, sum_ref, sq_ref):
    # (1, C) outputs use a constant index_map and accumulate across the single
    # "arbitrary" grid axis (sequential on one core by construction).
    @pl.when(pl.program_id(0) == 0)
    def _():
        sum_ref[...] = jnp.zeros_like(sum_ref)
        sq_ref[...] = jnp.zeros_like(sq_ref)
    x = x_ref[...].astype(jnp.float32)
    sum_ref[...] += jnp.sum(x, axis=0, keepdims=True)
    sq_ref[...] += jnp.sum(x * x, axis=0, keepdims=True)


def _add_stats_kernel(x_ref, r_ref, s_ref, sum_ref, sq_ref):
    @pl.when(pl.program_id(0) == 0)
    def _():
        sum_ref[...] = jnp.zeros_like(sum_ref)
        sq_ref[...] = jnp.zeros_like(sq_ref)
    s = x_ref[...].astype(jnp.float32) + r_ref[...].astype(jnp.float32)
    s_ref[...] = s.astype(s_ref.dtype)
    sum_ref[...] += jnp.sum(s, axis=0, keepdims=True)
    sq_ref[...] += jnp.sum(s * s, axis=0, keepdims=True)


def _affine_kernel(x_ref, sc_ref, sh_ref, o_ref, *, act, split):
    y = x_ref[...].astype(jnp.float32) * sc_ref[...] + sh_ref[...]
    if act == "relu":
        y = jnp.maximum(y, 0.0)
    elif act == "square":
        y = y * y
    elif act == "split":           # channels [0, split): square, rest: relu
        cidx = lax.broadcasted_iota(jnp.int32, y.shape, 1)
        y = jnp.where(cidx < split, y * y, jnp.maximum(y, 0.0))
    o_ref[...] = y.astype(o_ref.dtype)


def _bn_scale_shift(ssum, ssq, count, gamma, beta, eps=1e-5):
    mean = ssum[0] / count
    var = jnp.maximum(ssq[0] / count - mean * mean, 0.0)   # biased batch variance
    scale = gamma / jnp.sqrt(var + eps)
    shift = beta - mean * scale
    return scale.reshape(1, -1), shift.reshape(1, -1)


def _affine_call(x2, scale, shift, act, split):
    M, C = x2.shape
    tm = _choose_tm(M, 2048)
    est = 4 * tm * C * 2 + 4 * tm * C * 4
    return pl.pallas_call(
        functools.partial(_affine_kernel, act=act, split=split),
        out_shape=jax.ShapeDtypeStruct((M, C), jnp.bfloat16),
        grid=(M // tm,),
        in_specs=[pl.BlockSpec((tm, C), lambda i: (i, 0)),
                  pl.BlockSpec((1, C), lambda i: (0, 0)),
                  pl.BlockSpec((1, C), lambda i: (0, 0))],
        out_specs=pl.BlockSpec((tm, C), lambda i: (i, 0)),
        compiler_params=_cparams(("parallel",), est),
    )(x2, scale, shift)


def _stats_call(x2):
    M, C = x2.shape
    tm = _choose_tm(M, 2048)
    est = 2 * tm * C * 2 + 2 * tm * C * 4
    return pl.pallas_call(
        _stats_kernel,
        out_shape=(jax.ShapeDtypeStruct((1, C), jnp.float32),
                   jax.ShapeDtypeStruct((1, C), jnp.float32)),
        grid=(M // tm,),
        in_specs=[pl.BlockSpec((tm, C), lambda i: (i, 0))],
        out_specs=(pl.BlockSpec((1, C), lambda i: (0, 0)),
                   pl.BlockSpec((1, C), lambda i: (0, 0))),
        compiler_params=_cparams(("arbitrary",), est),
    )(x2)


@functools.partial(jax.jit, static_argnames=("act", "split"))
def _batchnorm_impl(x, gamma, beta, *, act, split):
    C = x.shape[-1]
    x2 = x.reshape(-1, C)
    M = x2.shape[0]
    ssum, ssq = _stats_call(x2)
    scale, shift = _bn_scale_shift(ssum, ssq, float(M), gamma, beta)
    return _affine_call(x2, scale, shift, act, split).reshape(x.shape)


@jax.jit
def _batchnorm_residual_impl(x, res, gamma, beta):
    """(x + res) -> train-mode BN -> relu.  Also returns the pre-BN sum."""
    C = x.shape[-1]
    x2 = x.reshape(-1, C)
    r2 = res.reshape(-1, C)
    M = x2.shape[0]
    tm = _choose_tm(M, 2048)
    est = 6 * tm * C * 2 + 4 * tm * C * 4
    s2, ssum, ssq = pl.pallas_call(
        _add_stats_kernel,
        out_shape=(jax.ShapeDtypeStruct((M, C), jnp.bfloat16),
                   jax.ShapeDtypeStruct((1, C), jnp.float32),
                   jax.ShapeDtypeStruct((1, C), jnp.float32)),
        grid=(M // tm,),
        in_specs=[pl.BlockSpec((tm, C), lambda i: (i, 0)),
                  pl.BlockSpec((tm, C), lambda i: (i, 0))],
        out_specs=(pl.BlockSpec((tm, C), lambda i: (i, 0)),
                   pl.BlockSpec((1, C), lambda i: (0, 0)),
                   pl.BlockSpec((1, C), lambda i: (0, 0))),
        compiler_params=_cparams(("arbitrary",), est),
    )(x2, r2)
    scale, shift = _bn_scale_shift(ssum, ssq, float(M), gamma, beta)
    y = _affine_call(s2, scale, shift, "relu", 0)
    return y.reshape(x.shape), s2.reshape(x.shape)


def batchnorm(x, p, act="none", split=0):
    return _batchnorm_impl(x, p["gamma"], p["beta"], act=act, split=split)


def batchnorm_residual(x, res, p):
    return _batchnorm_residual_impl(x, res, p["gamma"], p["beta"])


# ----------------------------------------------------------- head kernels ---
def _mean_kernel(x_ref, o_ref):
    o_ref[...] = jnp.mean(x_ref[...].astype(jnp.float32), axis=1)


@jax.jit
def _head_impl(x, fc_w, fc_b):
    nb, D, H, W, C = x.shape
    # TODO(synk): general sliding-window AvgPool3d not needed (window == extent).
    assert (D, H, W) == (7, 7, 1), "ARTNet head expects a 7x7x1 feature map"
    x3 = x.reshape(nb, D * H * W, C)
    pooled = pl.pallas_call(
        _mean_kernel,
        out_shape=jax.ShapeDtypeStruct((nb, C), jnp.float32),
        grid=(1,),
        in_specs=[pl.BlockSpec((nb, D * H * W, C), lambda i: (0, 0, 0))],
        out_specs=pl.BlockSpec((nb, C), lambda i: (0, 0)),
    )(x3)
    return _dense_matmul_call(pooled, fc_w, fc_b, jnp.float32)


# -------------------------------------------------------- parameter init ----
def init_bn(c):
    return {"gamma": jnp.ones((c,), jnp.float32),
            "beta": jnp.zeros((c,), jnp.float32)}


def _uniform(key, shape, bound):
    return jax.random.uniform(key, shape, jnp.float32, -bound, bound)


def _init_conv_w(key, cout, cin, kernel):
    kD, kH, kW = kernel
    bound = 1.0 / math.sqrt(cin * kD * kH * kW)
    kw_key, kb_key = jax.random.split(key)
    return _uniform(kw_key, (cout, cin, kD, kH, kW), bound), _uniform(kb_key, (cout,), bound)


def _pack_conv(w, b, kernel, stride, padding):
    cout, cin, kD, kH, kW = w.shape
    wt = jnp.transpose(w, (2, 3, 4, 1, 0))              # (kD, kH, kW, cin, cout)
    p = {"bias": b.reshape(1, cout), "cout": int(cout),
         "kernel": kernel, "stride": stride, "padding": padding}
    if stride == (1, 1, 1):
        # per-(kd,kh) tap slabs, rows ordered (kw, cin) to match the slab layout
        p["wtap"] = wt.reshape(kD * kH, kW * cin, cout).astype(jnp.bfloat16)
    else:
        # im2col weight matrix, K ordered (kd, kh, kw, cin)
        p["wcol"] = wt.reshape(kD * kH * kW * cin, cout).astype(jnp.bfloat16)
    return p


def init_conv(key, cin, cout, kernel, stride, padding):
    w, b = _init_conv_w(key, cout, cin, kernel)
    return _pack_conv(w, b, kernel, stride, padding)


def init_smart(key, cin, cout, kernel, stride, padding):
    """SMART block with the relation (kW) and appearance (kW=1) convs fused
    into a single 128-output conv (appearance weights embedded at the padded-W
    position of the real column, zeros elsewhere)."""
    kD, kH, kW = kernel
    pW = padding[2]
    k = jax.random.split(key, 4)
    w_rel, b_rel = _init_conv_w(k[0], 64, cin, kernel)
    w_app, b_app = _init_conv_w(k[1], 64, cin, (kD, kH, 1))
    w_app_e = jnp.zeros((64, cin, kD, kH, kW), jnp.float32)
    w_app_e = w_app_e.at[:, :, :, :, pW].set(w_app[:, :, :, :, 0])
    conv = _pack_conv(jnp.concatenate([w_rel, w_app_e], axis=0),
                      jnp.concatenate([b_rel, b_app], axis=0),
                      kernel, stride, padding)

    # CrossChannelPool (1x1x1, 64->32, weights 0.5), extended to the fused
    # 128-channel input with zero rows for the appearance half.
    _, ccp_b_key = jax.random.split(k[2])
    ccp_w = jnp.concatenate([jnp.full((64, 32), 0.5, jnp.float32),
                             jnp.zeros((64, 32), jnp.float32)], axis=0)
    ccp = {"wmat": ccp_w.astype(jnp.bfloat16),
           "bias": _uniform(ccp_b_key, (32,), 1.0 / math.sqrt(64)).reshape(1, 32)}

    # reduction (1x1x1, 96->cout, no bias); w2 zero-padded so it only acts on
    # the appearance half of the fused 128-channel tensor.
    w_red = _uniform(k[3], (cout, 96), 1.0 / math.sqrt(96)).T      # (96, cout)
    w1 = w_red[:32].astype(jnp.bfloat16)
    w2 = jnp.concatenate([jnp.zeros((64, cout), jnp.float32),
                          w_red[32:]], axis=0).astype(jnp.bfloat16)
    return {"conv": conv, "bn_dual": init_bn(128), "ccp": ccp,
            "bn2": init_bn(32), "w1": w1, "w2": w2}


def init_c3d_smart(key, cin, cout, kernel, stride, padding):
    k = jax.random.split(key, 2)
    return {"conv": init_conv(k[0], cin, cout, kernel, stride, padding),
            "bn": init_bn(cout),
            "smart": init_smart(k[1], cout, cout, kernel, (1, 1, 1), padding)}


def init_conv5(key, cin, stride):
    k = jax.random.split(key, 2)
    return {"conv_a": init_conv(k[0], cin, 512, (3, 3, 3), stride, (1, 1, 1)),
            "bn": init_bn(512),
            "conv_b": init_conv(k[1], 512, 512, (3, 3, 3), (1, 1, 1), (1, 1, 1))}


def init_artnet(key, num_classes=2):
    ks = jax.random.split(key, 13)
    p = {
        "conv1": init_smart(ks[0], 3, 64, (7, 7, 3), (2, 2, 2), (3, 3, 1)),
        "conv1_bn": init_bn(64),
        "conv2_1": init_c3d_smart(ks[1], 64, 64, (3, 3, 3), (1, 1, 1), (1, 1, 1)),
        "resnet2a_bn": init_bn(64),
        "conv2_2": init_c3d_smart(ks[2], 64, 64, (3, 3, 3), (1, 1, 1), (1, 1, 1)),
        "resnet2b_bn": init_bn(64),
        "resnet3a_down": init_conv(ks[3], 64, 128, (3, 3, 3), (2, 2, 2), (1, 1, 1)),
        "conv3_1": init_c3d_smart(ks[4], 64, 128, (3, 3, 3), (2, 2, 2), (1, 1, 1)),
        "resnet3a_bn": init_bn(128),
        "conv3_2": init_c3d_smart(ks[5], 128, 128, (3, 3, 3), (1, 1, 1), (1, 1, 1)),
        "resnet3b_bn": init_bn(128),
        "resnet4a_down": init_conv(ks[6], 128, 256, (3, 3, 3), (2, 2, 2), (1, 1, 1)),
        "conv4_1": init_c3d_smart(ks[7], 128, 256, (3, 3, 3), (2, 2, 2), (1, 1, 1)),
        "resnet4a_bn": init_bn(256),
        "conv4_2": init_c3d_smart(ks[8], 256, 256, (3, 3, 3), (1, 1, 1), (1, 1, 1)),
        "resnet4b_bn": init_bn(256),
        "resnet5a_down": init_conv(ks[9], 256, 512, (3, 3, 3), (2, 2, 2), (1, 1, 1)),
        "conv5_1": init_conv5(ks[10], 256, (2, 2, 2)),
        "resnet5a_bn": init_bn(512),
        "conv5_2": init_conv5(ks[11], 512, (1, 1, 1)),
        "resnet5b_bn": init_bn(512),
    }
    bound = 1.0 / math.sqrt(512)
    kw_key, kb_key = jax.random.split(ks[12])
    p["fc8_w"] = _uniform(kw_key, (512, num_classes), bound)
    p["fc8_b"] = _uniform(kb_key, (1, num_classes), bound)
    return p


# ------------------------------------------------------------ model graph ---
def smart_forward(p, x):
    y = conv3d(p["conv"], x)                      # fused rel|app conv -> 128 ch
    # rel half: BN + SquarePool; app half: BN + (post-concat) ReLU, all fused.
    y = batchnorm(y, p["bn_dual"], act="split", split=64)
    rel = _conv1x1_impl(y, p["ccp"]["wmat"], p["ccp"]["bias"])   # CrossChannelPool
    rel = batchnorm(rel, p["bn2"], act="relu")    # relu(cat) folded in
    return _reduction_impl(rel, y, p["w1"], p["w2"])


def c3d_smart_forward(p, x):
    out = conv3d(p["conv"], x)
    out = batchnorm(out, p["bn"], act="relu")
    return smart_forward(p["smart"], out)


def conv5_forward(p, x):
    out = conv3d(p["conv_a"], x)
    out = batchnorm(out, p["bn"], act="relu")
    return conv3d(p["conv_b"], out)


def resnet_block(x, identity, block_fn, block_p, bn_p, downsample=None, bn_relu=False):
    x = block_fn(block_p, x)
    if downsample is not None:
        identity = conv3d(downsample, identity)
    y, summed = batchnorm_residual(x, identity, bn_p)     # add + BN + relu fused
    return y, (y if bn_relu else summed)


def artnet_forward(p, x):
    n = x.shape[0]
    x = x.astype(jnp.bfloat16)
    # torch: x.view(N, s2, s3, s4, s1) -- a raw reshape, then treated as NCDHW.
    x = x.reshape(n, x.shape[2], x.shape[3], x.shape[4], x.shape[1])
    x = jnp.transpose(x, (0, 2, 3, 4, 1))                 # -> (N, D, H, W, C)
    x = smart_forward(p["conv1"], x)
    identity = x
    x = batchnorm(x, p["conv1_bn"], act="relu")
    x, identity = resnet_block(x, identity, c3d_smart_forward, p["conv2_1"], p["resnet2a_bn"])
    x, identity = resnet_block(x, identity, c3d_smart_forward, p["conv2_2"], p["resnet2b_bn"], bn_relu=True)
    x, identity = resnet_block(x, identity, c3d_smart_forward, p["conv3_1"], p["resnet3a_bn"], downsample=p["resnet3a_down"])
    x, identity = resnet_block(x, identity, c3d_smart_forward, p["conv3_2"], p["resnet3b_bn"], bn_relu=True)
    x, identity = resnet_block(x, identity, c3d_smart_forward, p["conv4_1"], p["resnet4a_bn"], downsample=p["resnet4a_down"])
    x, identity = resnet_block(x, identity, c3d_smart_forward, p["conv4_2"], p["resnet4b_bn"], bn_relu=True)
    x, identity = resnet_block(x, identity, conv5_forward, p["conv5_1"], p["resnet5a_bn"], downsample=p["resnet5a_down"])
    x, identity = resnet_block(x, identity, conv5_forward, p["conv5_2"], p["resnet5b_bn"])
    return _head_impl(x, p["fc8_w"], p["fc8_b"])          # AvgPool3d(7,7,1) + fc8


# ------------------------------------------------------------------- main ---
if __name__ == "__main__":
    key = jax.random.PRNGKey(0)
    pkey, xkey = jax.random.split(key)
    params = init_artnet(pkey, num_classes=2)
    # PyTorch-side input (N, T, 3, H, W); the forward's .view makes it NCDHW
    # (N, 3, H, W, T).  H = W = 112 is the smallest round size compatible with
    # the AvgPool3d(7, 7, 1) head after the stride-2 stages; T = 2 keeps the
    # temporal axis minimal.
    x = jax.random.normal(xkey, (2, 2, 3, 112, 112), jnp.float32)
    out = artnet_forward(params, x)
    out = jax.block_until_ready(out)
    assert out.shape == (2, 2) and out.dtype == jnp.float32
    assert bool(jnp.all(jnp.isfinite(out)))
    print("KERNEL_OK")
</pallas_src>

<mosaic_0001>
module attributes {stable_mosaic.version = 11 : i64} {
  func.func @_mm_bias_kernel(%arg0: i32, %arg1: memref<896x441xbf16, #tpu.memory_space<vmem>>, %arg2: memref<441x128xbf16, #tpu.memory_space<vmem>>, %arg3: memref<1x128xf32, #tpu.memory_space<vmem>>, %arg4: memref<896x128xbf16, #tpu.memory_space<vmem>>) attributes {dimension_semantics = [#tpu.dimension_semantics<parallel>], iteration_bounds = array<i64: 7>, scalar_prefetch = 0 : i64, scratch_operands = 0 : i64, tpu.core_type = #tpu.core_type<tc>, window_params = [{transform_indices = @transform_0, window_bounds = array<i64: 896, 441>}, {pipeline_mode = #tpu.pipeline_mode<synchronous>, transform_indices = @transform_1, window_bounds = array<i64: 441, 128>}, {pipeline_mode = #tpu.pipeline_mode<synchronous>, transform_indices = @transform_2, window_bounds = array<i64: 1, 128>}, {transform_indices = @transform_3, window_bounds = array<i64: 896, 128>}]} {
    %c0 = arith.constant 0 : index
    %c0_0 = arith.constant 0 : index
    %0 = vector.load %arg1[%c0, %c0_0] : memref<896x441xbf16, #tpu.memory_space<vmem>>, vector<896x441xbf16>
    %c0_1 = arith.constant 0 : index
    %c0_2 = arith.constant 0 : index
    %1 = vector.load %arg2[%c0_1, %c0_2] : memref<441x128xbf16, #tpu.memory_space<vmem>>, vector<441x128xbf16>
    %cst = arith.constant dense<0.000000e+00> : vector<896x128xf32>
    %2 = tpu.matmul %0, %1, %cst {dimension_numbers = #tpu.dot_dimension_numbers<[1], [0], [0], [1], [0, 0, 1, 1], [], []>} : vector<896x441xbf16>, vector<441x128xbf16>, vector<896x128xf32> -> vector<896x128xf32>
    %c0_3 = arith.constant 0 : index
    %c0_4 = arith.constant 0 : index
    %3 = vector.load %arg3[%c0_3, %c0_4] : memref<1x128xf32, #tpu.memory_space<vmem>>, vector<1x128xf32>
    %4 = vector.broadcast %3 : vector<1x128xf32> to vector<896x128xf32>
    %5 = arith.addf %2, %4 : vector<896x128xf32>
    %6 = arith.truncf %5 : vector<896x128xf32> to vector<896x128xbf16>
    %c0_5 = arith.constant 0 : index
    %c0_6 = arith.constant 0 : index
    %7 = vector.load %arg4[%c0_5, %c0_6] : memref<896x128xbf16, #tpu.memory_space<vmem>>, vector<896x128xbf16>
    tpu.vector_store %arg4[%c0_5, %c0_6], %6 {strides = array<i32>} : memref<896x128xbf16, #tpu.memory_space<vmem>>, vector<896x128xbf16>,
    return
  }
  func.func @transform_0(%arg0: i32) -> (i32, i32) {
    %c0_i32 = arith.constant 0 : i32
    %c0_i32_0 = arith.constant 0 : i32
    return %arg0, %c0_i32 : i32, i32
  }
  func.func @transform_1(%arg0: i32) -> (i32, i32) {
    %c0_i32 = arith.constant 0 : i32
    %c0_i32_0 = arith.constant 0 : i32
    %c0_i32_1 = arith.constant 0 : i32
    return %c0_i32, %c0_i32_0 : i32, i32
  }
  func.func @transform_2(%arg0: i32) -> (i32, i32) {
    %c0_i32 = arith.constant 0 : i32
    %c0_i32_0 = arith.constant 0 : i32
    %c0_i32_1 = arith.constant 0 : i32
    return %c0_i32, %c0_i32_0 : i32, i32
  }
  func.func @transform_3(%arg0: i32) -> (i32, i32) {
    %c0_i32 = arith.constant 0 : i32
    %c0_i32_0 = arith.constant 0 : i32
    return %arg0, %c0_i32 : i32, i32
  }
}

</mosaic_0001>

<llo_original>
// kernel: _conv3d_im2col_impl.1
$region0: #{_conv3d_im2col_impl.1}
  #allocation0 [shape = 'u32[]', space=smem, size = 0x4, offset = 0x4, fixed_abs, tag = 'smem constant byte address 0x4 - core index']
  #allocation1 [shape = 'u32[144,128]{1,0:T(1,128)}', space=vmem, size = 0x12000, scoped, tag = 'internal scratch']
  %s0 = inlined_call_operand.vmem [shape: bf16[6272,441], index: 0, kind: input, shape index: {}]
  %s1 = inlined_call_operand.vmem [shape: bf16[441,128], index: 1, kind: input, shape index: {}]
  %s2 = inlined_call_operand.vmem [shape: f32[1,128], index: 2, kind: input, shape index: {}]
  %s3 = inlined_call_operand.hbm [shape: bf16[6272,128], index: 3, kind: output, shape index: {}]
  %s4 = sld [smem:[#allocation0]]
  $region45: #{_conv3d_im2col_impl.1} parent=0
    _
  %s6 = ssub.s32 1, %s4
  %s7 = scalar_select 0, %s6, %s4
  $region1: #{_conv3d_im2col_impl.1} parent=0
    #allocation2 [shape = 'u8[458752]{0}', space=vmem, size = 0x70000, scoped, tag = 'output window, operand 0']
    #allocation3 [shape = 's32[2]{0}', space=sflag, size = 0x8, scoped, tag = 'scoped memory for _conv3d_im2col_impl.1']
    %8 = vsyncpa [#allocation3], 0
    %s9 = scalar_lea.sflag [#allocation3], 1
    %10 = vsyncpa %s9, 0
    loop: start=0, step=1, limit=9
    $region2: #{_conv3d_im2col_impl.1} parent=1 // loop_pre_header
      _
    $region3: #{_conv3d_im2col_impl.1} parent=1 // loop_header
      %s12 = sphi 0, %s16
      %p13 = scmp.ge.s32.totalorder %s12, 9
      %s22 = sphi 0, %s24
      %s25 = sphi 0, %s22
      %s26 = sphi 0, %s25
      %s42 = sphi 0, %s26
      %s46 = sphi 0, %s46
      %s48 = sphi 0, %s46
      %s49 = sphi 0, %s48
      %s63 = sphi 0, %s49
      %s67 = sphi 0, %s67
      %s69 = sphi 0, %s67
      %s70 = sphi 0, %s69
      %s84 = sphi 0, %s70
      %s90 = sphi 0, %s92
      %s93 = sphi 0, %s90
      %s94 = sphi 0, %s93
      %s110 = sphi 0, %s94
    $region4: #{_conv3d_im2col_impl.1} parent=1 // loop_header_branch
      %15 = sbr.rel (%p13) target = $region8
    $region5: #{_conv3d_im2col_impl.1} parent=1 // loop_body
      %s17 = ssub.s32 %s12, 1
      %s18 = ssub.s32 %s12, 2
      %s19 = sadd.s32 %s12, 1
      %s20 = ssub.s32 %s12, %s19
      %p21 = scmp.eq.s32.totalorder %s20, 0
      %s23 = sadd.s32 %s22, 1
      %s24 = scalar_select %p21, %s22, %s23
      %p27 = pneg %p21
      %p28 = scmp.eq.s32.totalorder %s12, 6
      %p29 = por %p27, %p28
      %p30 = scmp.ne.s32.totalorder %s22, %s25
      %p31 = scmp.eq.s32.totalorder %s12, 0
      %p32 = por %p30, %p31
      %p33 = scmp.ne.s32.totalorder %s22, %s25
      %p34 = scmp.eq.s32.totalorder %s17, 6
      %p35 = por %p33, %p34
      %p36 = scmp.ne.s32.totalorder %s25, %s26
      %p37 = scmp.eq.s32.totalorder %s17, 0
      %p38 = por %p36, %p37
      %p39 = scmp.ne.s32.totalorder %s25, %s26
      %p40 = scmp.eq.s32.totalorder %s18, 6
      %p41 = por %p39, %p40
      %p43 = scmp.ne.s32.totalorder %s26, %s42
      %p44 = scmp.eq.s32.totalorder %s18, 0
      %p45 = por %p43, %p44
      %s47 = sadd.s32 %s46, 1
      %p50 = scmp.eq.s32.totalorder %s12, 6
      %p51 = scmp.ne.s32.totalorder %s46, %s48
      %p52 = scmp.eq.s32.totalorder %s12, 0
      %p53 = por %p51, %p52
      %p54 = scmp.ne.s32.totalorder %s46, %s48
      %p55 = scmp.eq.s32.totalorder %s17, 6
      %p56 = por %p54, %p55
      %p57 = scmp.ne.s32.totalorder %s48, %s49
      %p58 = scmp.eq.s32.totalorder %s17, 0
      %p59 = por %p57, %p58
      %p60 = scmp.ne.s32.totalorder %s48, %s49
      %p61 = scmp.eq.s32.totalorder %s18, 6
      %p62 = por %p60, %p61
      %p64 = scmp.ne.s32.totalorder %s49, %s63
      %p65 = scmp.eq.s32.totalorder %s18, 0
      %p66 = por %p64, %p65
      %s68 = sadd.s32 %s67, 1
      %p71 = scmp.eq.s32.totalorder %s12, 6
      %p72 = scmp.ne.s32.totalorder %s67, %s69
      %p73 = scmp.eq.s32.totalorder %s12, 0
      %p74 = por %p72, %p73
      %p75 = scmp.ne.s32.totalorder %s67, %s69
      %p76 = scmp.eq.s32.totalorder %s17, 6
      %p77 = por %p75, %p76
      %p78 = scmp.ne.s32.totalorder %s69, %s70
      %p79 = scmp.eq.s32.totalorder %s17, 0
      %p80 = por %p78, %p79
      %p81 = scmp.ne.s32.totalorder %s69, %s70
      %p82 = scmp.eq.s32.totalorder %s18, 6
      %p83 = por %p81, %p82
      %p85 = scmp.ne.s32.totalorder %s70, %s84
      %p86 = scmp.eq.s32.totalorder %s18, 0
      %p87 = por %p85, %p86
      %s88 = ssub.s32 %s12, %s19
      %p89 = scmp.eq.s32.totalorder %s88, 0
      %s91 = sadd.s32 %s90, 1
      %s92 = scalar_select %p89, %s90, %s91
      %p95 = pneg %p89
      %p96 = scmp.eq.s32.totalorder %s12, 6
      %p97 = por %p95, %p96
      %p98 = scmp.ne.s32.totalorder %s90, %s93
      %p99 = scmp.eq.s32.totalorder %s12, 0
      %p100 = por %p98, %p99
      %p101 = scmp.ne.s32.totalorder %s90, %s93
      %p102 = scmp.eq.s32.totalorder %s17, 6
      %p103 = por %p101, %p102
      %p104 = scmp.ne.s32.totalorder %s93, %s94
      %p105 = scmp.eq.s32.totalorder %s17, 0
      %p106 = por %p104, %p105
      %p107 = scmp.ne.s32.totalorder %s93, %s94
      %p108 = scmp.eq.s32.totalorder %s18, 6
      %p109 = por %p107, %p108
      %p111 = scmp.ne.s32.totalorder %s94, %s110
      %p112 = scmp.eq.s32.totalorder %s18, 0
      %p113 = por %p111, %p112
      %p114 = scmp.le.s32.totalorder 1, %s12
      %p115 = scmp.lt.s32.totalorder %s12, 8
      %p116 = pnand %p114, %p115
      %p117 = pneg %p116
      // Predicated region
      $region9: #{_conv3d_im2col_impl.1} parent=5 // pred_check
        _
      $region10: #{_conv3d_im2col_impl.1} parent=5 // pred_check_branch
        %119 = sbr.rel (%p116) target = $region12
      $region11: #{_conv3d_im2col_impl.1} parent=5 // pred_region
        %s120 = ssub.s32 %s12, 1
        // Predicated region
        $region13: #{_conv3d_im2col_impl.1} parent=11 // pred_check
          %p121 = pneg %p59
        $region14: #{_conv3d_im2col_impl.1} parent=11 // pred_check_branch
          %123 = sbr.rel (%p121) target = $region16
        $region15: #{_conv3d_im2col_impl.1} parent=11 // pred_region
          _
        $region16: #{_conv3d_im2col_impl.1} parent=11 // pred_fallthru
          _
        // Predicated region
        $region17: #{_conv3d_im2col_impl.1} parent=11 // pred_check
          %p124 = pneg %p80
        $region18: #{_conv3d_im2col_impl.1} parent=11 // pred_check_branch
          %126 = sbr.rel (%p124) target = $region20
        $region19: #{_conv3d_im2col_impl.1} parent=11 // pred_region
          _
        $region20: #{_conv3d_im2col_impl.1} parent=11 // pred_fallthru
          _
      $region12: #{_conv3d_im2col_impl.1} parent=5 // pred_fallthru
        _
      %p127 = scmp.lt.s32.totalorder %s12, 7
      // Predicated region
      $region21: #{_conv3d_im2col_impl.1} parent=5 // pred_check
        %p128 = pneg %p127
      $region22: #{_conv3d_im2col_impl.1} parent=5 // pred_check_branch
        %130 = sbr.rel (%p128) target = $region24
      $region23: #{_conv3d_im2col_impl.1} parent=5 // pred_region
        // Predicated region
        $region25: #{_conv3d_im2col_impl.1} parent=23 // pred_check
          %p131 = pneg %p32
        $region26: #{_conv3d_im2col_impl.1} parent=23 // pred_check_branch
          %133 = sbr.rel (%p131) target = $region28
        $region27: #{_conv3d_im2col_impl.1} parent=23 // pred_region
          %s134 = smul.u32 112, %s12
          %p135 = scmp.lt.s32.totalorder %s134, 783
          %s136 = scalar_select %p135, %s134, 783
          %s137 = smul.addr %s136, 4
          %s138 = smul.addr %s137, 4
          %s139 = scalar_lea.vmem %s0, %s138
          %s140 = smul.u32 112, %s12
        $region28: #{_conv3d_im2col_impl.1} parent=23 // pred_fallthru
          _
      $region24: #{_conv3d_im2col_impl.1} parent=5 // pred_fallthru
        _
      %p141 = scmp.le.s32.totalorder 1, %s12
      %p142 = scmp.lt.s32.totalorder %s12, 8
      %p143 = pnand %p141, %p142
      %p144 = pneg %p143
      // Predicated region
      $region29: #{_conv3d_im2col_impl.1} parent=5 // pred_check
        _
      $region30: #{_conv3d_im2col_impl.1} parent=5 // pred_check_branch
        %146 = sbr.rel (%p143) target = $region32
      $region31: #{_conv3d_im2col_impl.1} parent=5 // pred_region
        %s147 = ssub.s32 %s12, 1
        %s148 = smul.u32 112, %s17
        %p149 = scmp.lt.s32.totalorder %s148, 783
        %s150 = scalar_select %p149, %s148, 783
        %s151 = smul.addr %s150, 4
        %s152 = smul.addr %s151, 4
        %s153 = scalar_lea.vmem %s0, %s152
        %p154 = pneg %p38
        %p155 = pneg %p35
        %p156 = pneg %p59
        %p157 = pneg %p56
        %p158 = pneg %p80
        %p159 = pneg %p77
        %p160 = pneg %p106
        %p161 = pneg %p103
        %s162 = sand.u32 %s93, 1
        %s163 = scalar_lea.sflag [#allocation3], %s162
        %s164 = sand.u32 %s93, 1
        %s165 = smul.addr %s164, 448
        %s166 = scalar_lea.vmem [#allocation2], %s165
        %s167 = smul.u32 112, %s17
        %p168 = scmp.lt.s32.totalorder %s167, 783
        %s169 = scalar_select %p168, %s167, 783
        %s170 = smul.addr %s169, 4
        %s171 = smul.addr %s170, 4
        %s172 = scalar_lea.vmem %s0, %s171
        %s173 = smul.u32 112, %s17
        %s174 = smul.u32 112, %s17
        %v176 = vld [vmem:[%s172] sm:$0xff]
        %v177 = vld [vmem:[%s172 + $0x8] sm:$0xff]
        %v178 = vld [vmem:[%s172 + $0x10] sm:$0xff]
        %v179 = vld [vmem:[%s172 + $0x18] sm:$0xff]
        %v180 = vld [vmem:[%s172 + $0x20] sm:$0xff]
        %v181 = vld [vmem:[%s172 + $0x28] sm:$0xff]
        %v182 = vld [vmem:[%s172 + $0x30] sm:$0xff]
        %v183 = vld [vmem:[%s172 + $0x38] sm:$0xff]
        %v184 = vld [vmem:[%s172 + $0x40] sm:$0xff]
        %v185 = vld [vmem:[%s172 + $0x48] sm:$0xff]
        %v186 = vld [vmem:[%s172 + $0x50] sm:$0xff]
        %v187 = vld [vmem:[%s172 + $0x58] sm:$0xff]
        %v188 = vld [vmem:[%s172 + $0x60] sm:$0xff]
        %v189 = vld [vmem:[%s172 + $0x68] sm:$0xff]
        %v190 = vld [vmem:[%s172 + $0x70] sm:$0xff]
        %v191 = vld [vmem:[%s172 + $0x78] sm:$0xff]
        %v192 = vld [vmem:[%s172 + $0x80] sm:$0xff]
        %v193 = vld [vmem:[%s172 + $0x88] sm:$0xff]
        %v194 = vld [vmem:[%s172 + $0x90] sm:$0xff]
        %v195 = vld [vmem:[%s172 + $0x98] sm:$0xff]
        %v196 = vld [vmem:[%s172 + $0xa0] sm:$0xff]
        %v197 = vld [vmem:[%s172 + $0xa8] sm:$0xff]
        %v198 = vld [vmem:[%s172 + $0xb0] sm:$0xff]
        %v199 = vld [vmem:[%s172 + $0xb8] sm:$0xff]
        %v200 = vld [vmem:[%s172 + $0xc0] sm:$0xff]
        %v201 = vld [vmem:[%s172 + $0xc8] sm:$0xff]
        %v202 = vld [vmem:[%s172 + $0xd0] sm:$0xff]
        %v203 = vld [vmem:[%s172 + $0xd8] sm:$0xff]
        %v204 = vld [vmem:[%s172 + $0xe0] sm:$0xff]
        %v205 = vld [vmem:[%s172 + $0xe8] sm:$0xff]
        %v206 = vld [vmem:[%s172 + $0xf0] sm:$0xff]
        %v207 = vld [vmem:[%s172 + $0xf8] sm:$0xff]
        %v208 = vld [vmem:[%s172 + $0x100] sm:$0xff]
        %v209 = vld [vmem:[%s172 + $0x108] sm:$0xff]
        %v210 = vld [vmem:[%s172 + $0x110] sm:$0xff]
        %v211 = vld [vmem:[%s172 + $0x118] sm:$0xff]
        %v212 = vld [vmem:[%s172 + $0x120] sm:$0xff]
        %v213 = vld [vmem:[%s172 + $0x128] sm:$0xff]
        %v214 = vld [vmem:[%s172 + $0x130] sm:$0xff]
        %v215 = vld [vmem:[%s172 + $0x138] sm:$0xff]
        %v216 = vld [vmem:[%s172 + $0x140] sm:$0xff]
        %v217 = vld [vmem:[%s172 + $0x148] sm:$0xff]
        %v218 = vld [vmem:[%s172 + $0x150] sm:$0xff]
        %v219 = vld [vmem:[%s172 + $0x158] sm:$0xff]
        %v220 = vld [vmem:[%s172 + $0x160] sm:$0xff]
        %v221 = vld [vmem:[%s172 + $0x168] sm:$0xff]
        %v222 = vld [vmem:[%s172 + $0x170] sm:$0xff]
        %v223 = vld [vmem:[%s172 + $0x178] sm:$0xff]
        %v224 = vld [vmem:[%s172 + $0x180] sm:$0xff]
        %v225 = vld [vmem:[%s172 + $0x188] sm:$0xff]
        %v226 = vld [vmem:[%s172 + $0x190] sm:$0xff]
        %v227 = vld [vmem:[%s172 + $0x198] sm:$0xff]
        %v228 = vld [vmem:[%s172 + $0x1a0] sm:$0xff]
        %v229 = vld [vmem:[%s172 + $0x1a8] sm:$0xff]
        %v230 = vld [vmem:[%s172 + $0x1b0] sm:$0xff]
        %v231 = vld [vmem:[%s172 + $0x1b8] sm:$0xff]
        %v232 = vld [vmem:[%s172 + $0x1c0] sm:$0xff]
        %v233 = vld [vmem:[%s172 + $0x1c8] sm:$0xff]
        %v234 = vld [vmem:[%s172 + $0x1d0] sm:$0xff]
        %v235 = vld [vmem:[%s172 + $0x1d8] sm:$0xff]
        %v236 = vld [vmem:[%s172 + $0x1e0] sm:$0xff]
        %v237 = vld [vmem:[%s172 + $0x1e8] sm:$0xff]
        %v238 = vld [vmem:[%s172 + $0x1f0] sm:$0xff]
        %v239 = vld [vmem:[%s172 + $0x1f8] sm:$0xff]
        %v240 = vld [vmem:[%s172 + $0x200] sm:$0xff]
        %v241 = vld [vmem:[%s172 + $0x208] sm:$0xff]
        %v242 = vld [vmem:[%s172 + $0x210] sm:$0xff]
        %v243 = vld [vmem:[%s172 + $0x218] sm:$0xff]
        %v244 = vld [vmem:[%s172 + $0x220] sm:$0xff]
        %v245 = vld [vmem:[%s172 + $0x228] sm:$0xff]
        %v246 = vld [vmem:[%s172 + $0x230] sm:$0xff]
        %v247 = vld [vmem:[%s172 + $0x238] sm:$0xff]
        %v248 = vld [vmem:[%s172 + $0x240] sm:$0xff]
        %v249 = vld [vmem:[%s172 + $0x248] sm:$0xff]
        %v250 = vld [vmem:[%s172 + $0x250] sm:$0xff]
        %v251 = vld [vmem:[%s172 + $0x258] sm:$0xff]
        %v252 = vld [vmem:[%s172 + $0x260] sm:$0xff]
        %v253 = vld [vmem:[%s172 + $0x268] sm:$0xff]
        %v254 = vld [vmem:[%s172 + $0x270] sm:$0xff]
        %v255 = vld [vmem:[%s172 + $0x278] sm:$0xff]
        %v256 = vld [vmem:[%s172 + $0x280] sm:$0xff]
        %v257 = vld [vmem:[%s172 + $0x288] sm:$0xff]
        %v258 = vld [vmem:[%s172 + $0x290] sm:$0xff]
        %v259 = vld [vmem:[%s172 + $0x298] sm:$0xff]
        %v260 = vld [vmem:[%s172 + $0x2a0] sm:$0xff]
        %v261 = vld [vmem:[%s172 + $0x2a8] sm:$0xff]
        %v262 = vld [vmem:[%s172 + $0x2b0] sm:$0xff]
        %v263 = vld [vmem:[%s172 + $0x2b8] sm:$0xff]
        %v264 = vld [vmem:[%s172 + $0x2c0] sm:$0xff]
        %v265 = vld [vmem:[%s172 + $0x2c8] sm:$0xff]
        %v266 = vld [vmem:[%s172 + $0x2d0] sm:$0xff]
        %v267 = vld [vmem:[%s172 + $0x2d8] sm:$0xff]
        %v268 = vld [vmem:[%s172 + $0x2e0] sm:$0xff]
        %v269 = vld [vmem:[%s172 + $0x2e8] sm:$0xff]
        %v270 = vld [vmem:[%s172 + $0x2f0] sm:$0xff]
        %v271 = vld [vmem:[%s172 + $0x2f8] sm:$0xff]
        %v272 = vld [vmem:[%s172 + $0x300] sm:$0xff]
        %v273 = vld [vmem:[%s172 + $0x308] sm:$0xff]
        %v274 = vld [vmem:[%s172 + $0x310] sm:$0xff]
        %v275 = vld [vmem:[%s172 + $0x318] sm:$0xff]
        %v276 = vld [vmem:[%s172 + $0x320] sm:$0xff]
        %v277 = vld [vmem:[%s172 + $0x328] sm:$0xff]
        %v278 = vld [vmem:[%s172 + $0x330] sm:$0xff]
        %v279 = vld [vmem:[%s172 + $0x338] sm:$0xff]
        %v280 = vld [vmem:[%s172 + $0x340] sm:$0xff]
        %v281 = vld [vmem:[%s172 + $0x348] sm:$0xff]
        %v282 = vld [vmem:[%s172 + $0x350] sm:$0xff]
        %v283 = vld [vmem:[%s172 + $0x358] sm:$0xff]
        %v284 = vld [vmem:[%s172 + $0x360] sm:$0xff]
        %v285 = vld [vmem:[%s172 + $0x368] sm:$0xff]
        %v286 = vld [vmem:[%s172 + $0x370] sm:$0xff]
        %v287 = vld [vmem:[%s172 + $0x378] sm:$0xff]
        %v288 = vld [vmem:[%s172 + $0x380] sm:$0xff]
        %v289 = vld [vmem:[%s172 + $0x388] sm:$0xff]
        %v290 = vld [vmem:[%s172 + $0x390] sm:$0xff]
        %v291 = vld [vmem:[%s172 + $0x398] sm:$0xff]
        %v292 = vld [vmem:[%s172 + $0x3a0] sm:$0xff]
        %v293 = vld [vmem:[%s172 + $0x3a8] sm:$0xff]
        %v294 = vld [vmem:[%s172 + $0x3b0] sm:$0xff]
        %v295 = vld [vmem:[%s172 + $0x3b8] sm:$0xff]
        %v296 = vld [vmem:[%s172 + $0x3c0] sm:$0xff]
        %v297 = vld [vmem:[%s172 + $0x3c8] sm:$0xff]
        %v298 = vld [vmem:[%s172 + $0x3d0] sm:$0xff]
        %v299 = vld [vmem:[%s172 + $0x3d8] sm:$0xff]
        %v300 = vld [vmem:[%s172 + $0x3e0] sm:$0xff]
        %v301 = vld [vmem:[%s172 + $0x3e8] sm:$0xff]
        %v302 = vld [vmem:[%s172 + $0x3f0] sm:$0xff]
        %v303 = vld [vmem:[%s172 + $0x3f8] sm:$0xff]
        %v304 = vld [vmem:[%s172 + $0x400] sm:$0xff]
        %v305 = vld [vmem:[%s172 + $0x408] sm:$0xff]
        %v306 = vld [vmem:[%s172 + $0x410] sm:$0xff]
        %v307 = vld [vmem:[%s172 + $0x418] sm:$0xff]
        %v308 = vld [vmem:[%s172 + $0x420] sm:$0xff]
        %v309 = vld [vmem:[%s172 + $0x428] sm:$0xff]
        %v310 = vld [vmem:[%s172 + $0x430] sm:$0xff]
        %v311 = vld [vmem:[%s172 + $0x438] sm:$0xff]
        %v312 = vld [vmem:[%s172 + $0x440] sm:$0xff]
        %v313 = vld [vmem:[%s172 + $0x448] sm:$0xff]
        %v314 = vld [vmem:[%s172 + $0x450] sm:$0xff]
        %v315 = vld [vmem:[%s172 + $0x458] sm:$0xff]
        %v316 = vld [vmem:[%s172 + $0x460] sm:$0xff]
        %v317 = vld [vmem:[%s172 + $0x468] sm:$0xff]
        %v318 = vld [vmem:[%s172 + $0x470] sm:$0xff]
        %v319 = vld [vmem:[%s172 + $0x478] sm:$0xff]
        %v320 = vld [vmem:[%s172 + $0x480] sm:$0xff]
        %v321 = vld [vmem:[%s172 + $0x488] sm:$0xff]
        %v322 = vld [vmem:[%s172 + $0x490] sm:$0xff]
        %v323 = vld [vmem:[%s172 + $0x498] sm:$0xff]
        %v324 = vld [vmem:[%s172 + $0x4a0] sm:$0xff]
        %v325 = vld [vmem:[%s172 + $0x4a8] sm:$0xff]
        %v326 = vld [vmem:[%s172 + $0x4b0] sm:$0xff]
        %v327 = vld [vmem:[%s172 + $0x4b8] sm:$0xff]
        %v328 = vld [vmem:[%s172 + $0x4c0] sm:$0xff]
        %v329 = vld [vmem:[%s172 + $0x4c8] sm:$0xff]
        %v330 = vld [vmem:[%s172 + $0x4d0] sm:$0xff]
        %v331 = vld [vmem:[%s172 + $0x4d8] sm:$0xff]
        %v332 = vld [vmem:[%s172 + $0x4e0] sm:$0xff]
        %v333 = vld [vmem:[%s172 + $0x4e8] sm:$0xff]
        %v334 = vld [vmem:[%s172 + $0x4f0] sm:$0xff]
        %v335 = vld [vmem:[%s172 + $0x4f8] sm:$0xff]
        %v336 = vld [vmem:[%s172 + $0x500] sm:$0xff]
        %v337 = vld [vmem:[%s172 + $0x508] sm:$0xff]
        %v338 = vld [vmem:[%s172 + $0x510] sm:$0xff]
        %v339 = vld [vmem:[%s172 + $0x518] sm:$0xff]
        %v340 = vld [vmem:[%s172 + $0x520] sm:$0xff]
        %v341 = vld [vmem:[%s172 + $0x528] sm:$0xff]
        %v342 = vld [vmem:[%s172 + $0x530] sm:$0xff]
        %v343 = vld [vmem:[%s172 + $0x538] sm:$0xff]
        %v344 = vld [vmem:[%s172 + $0x540] sm:$0xff]
        %v345 = vld [vmem:[%s172 + $0x548] sm:$0xff]
        %v346 = vld [vmem:[%s172 + $0x550] sm:$0xff]
        %v347 = vld [vmem:[%s172 + $0x558] sm:$0xff]
        %v348 = vld [vmem:[%s172 + $0x560] sm:$0xff]
        %v349 = vld [vmem:[%s172 + $0x568] sm:$0xff]
        %v350 = vld [vmem:[%s172 + $0x570] sm:$0xff]
        %v351 = vld [vmem:[%s172 + $0x578] sm:$0xff]
        %v352 = vld [vmem:[%s172 + $0x580] sm:$0xff]
        %v353 = vld [vmem:[%s172 + $0x588] sm:$0xff]
        %v354 = vld [vmem:[%s172 + $0x590] sm:$0xff]
        %v355 = vld [vmem:[%s172 + $0x598] sm:$0xff]
        %v356 = vld [vmem:[%s172 + $0x5a0] sm:$0xff]
        %v357 = vld [vmem:[%s172 + $0x5a8] sm:$0xff]
        %v358 = vld [vmem:[%s172 + $0x5b0] sm:$0xff]
        %v359 = vld [vmem:[%s172 + $0x5b8] sm:$0xff]
        %v360 = vld [vmem:[%s172 + $0x5c0] sm:$0xff]
        %v361 = vld [vmem:[%s172 + $0x5c8] sm:$0xff]
        %v362 = vld [vmem:[%s172 + $0x5d0] sm:$0xff]
        %v363 = vld [vmem:[%s172 + $0x5d8] sm:$0xff]
        %v364 = vld [vmem:[%s172 + $0x5e0] sm:$0xff]
        %v365 = vld [vmem:[%s172 + $0x5e8] sm:$0xff]
        %v366 = vld [vmem:[%s172 + $0x5f0] sm:$0xff]
        %v367 = vld [vmem:[%s172 + $0x5f8] sm:$0xff]
        %v368 = vld [vmem:[%s172 + $0x600] sm:$0xff]
        %v369 = vld [vmem:[%s172 + $0x608] sm:$0xff]
        %v370 = vld [vmem:[%s172 + $0x610] sm:$0xff]
        %v371 = vld [vmem:[%s172 + $0x618] sm:$0xff]
        %v372 = vld [vmem:[%s172 + $0x620] sm:$0xff]
        %v373 = vld [vmem:[%s172 + $0x628] sm:$0xff]
        %v374 = vld [vmem:[%s172 + $0x630] sm:$0xff]
        %v375 = vld [vmem:[%s172 + $0x638] sm:$0xff]
        %v376 = vld [vmem:[%s172 + $0x640] sm:$0xff]
        %v377 = vld [vmem:[%s172 + $0x648] sm:$0xff]
        %v378 = vld [vmem:[%s172 + $0x650] sm:$0xff]
        %v379 = vld [vmem:[%s172 + $0x658] sm:$0xff]
        %v380 = vld [vmem:[%s172 + $0x660] sm:$0xff]
        %v381 = vld [vmem:[%s172 + $0x668] sm:$0xff]
        %v382 = vld [vmem:[%s172 + $0x670] sm:$0xff]
        %v383 = vld [vmem:[%s172 + $0x678] sm:$0xff]
        %v384 = vld [vmem:[%s172 + $0x680] sm:$0xff]
        %v385 = vld [vmem:[%s172 + $0x688] sm:$0xff]
        %v386 = vld [vmem:[%s172 + $0x690] sm:$0xff]
        %v387 = vld [vmem:[%s172 + $0x698] sm:$0xff]
        %v388 = vld [vmem:[%s172 + $0x6a0] sm:$0xff]
        %v389 = vld [vmem:[%s172 + $0x6a8] sm:$0xff]
        %v390 = vld [vmem:[%s172 + $0x6b0] sm:$0xff]
        %v391 = vld [vmem:[%s172 + $0x6b8] sm:$0xff]
        %v392 = vld [vmem:[%s172 + $0x6c0] sm:$0xff]
        %v393 = vld [vmem:[%s172 + $0x6c8] sm:$0xff]
        %v394 = vld [vmem:[%s172 + $0x6d0] sm:$0xff]
        %v395 = vld [vmem:[%s172 + $0x6d8] sm:$0xff]
        %v396 = vld [vmem:[%s172 + $0x6e0] sm:$0xff]
        %v397 = vld [vmem:[%s172 + $0x6e8] sm:$0xff]
        %v398 = vld [vmem:[%s172 + $0x6f0] sm:$0xff]
        %v399 = vld [vmem:[%s172 + $0x6f8] sm:$0xff]
        %v400 = vld [vmem:[%s1] sm:$0xf]
        %v401 = vld [vmem:[%s1 + $0x4] sm:$0xf]
        %v402 = vld [vmem:[%s1 + $0x8] sm:$0xf]
        %v403 = vld [vmem:[%s1 + $0xc] sm:$0xf]
        %v404 = vld [vmem:[%s1 + $0x10] sm:$0xf]
        %v405 = vld [vmem:[%s1 + $0x14] sm:$0xf]
        %v406 = vld [vmem:[%s1 + $0x18] sm:$0xf]
        %v407 = vld [vmem:[%s1 + $0x1c] sm:$0xf]
        %v408 = vld [vmem:[%s1 + $0x20] sm:$0xf]
        %v409 = vld [vmem:[%s1 + $0x24] sm:$0xf]
        %v410 = vld [vmem:[%s1 + $0x28] sm:$0xf]
        %v411 = vld [vmem:[%s1 + $0x2c] sm:$0xf]
        %v412 = vld [vmem:[%s1 + $0x30] sm:$0xf]
        %v413 = vld [vmem:[%s1 + $0x34] sm:$0xf]
        %v414 = vld [vmem:[%s1 + $0x38] sm:$0xf]
        %v415 = vld [vmem:[%s1 + $0x3c] sm:$0xf]
        %v416 = vld [vmem:[%s1 + $0x40] sm:$0xf]
        %v417 = vld [vmem:[%s1 + $0x44] sm:$0xf]
        %v418 = vld [vmem:[%s1 + $0x48] sm:$0xf]
        %v419 = vld [vmem:[%s1 + $0x4c] sm:$0xf]
        %v420 = vld [vmem:[%s1 + $0x50] sm:$0xf]
        %v421 = vld [vmem:[%s1 + $0x54] sm:$0xf]
        %v422 = vld [vmem:[%s1 + $0x58] sm:$0xf]
        %v423 = vld [vmem:[%s1 + $0x5c] sm:$0xf]
        %v424 = vld [vmem:[%s1 + $0x60] sm:$0xf]
        %v425 = vld [vmem:[%s1 + $0x64] sm:$0xf]
        %v426 = vld [vmem:[%s1 + $0x68] sm:$0xf]
        %v427 = vld [vmem:[%s1 + $0x6c] sm:$0xf]
        %v428 = vld [vmem:[%s1 + $0x70] sm:$0xf]
        %v429 = vld [vmem:[%s1 + $0x74] sm:$0xf]
        %v430 = vld [vmem:[%s1 + $0x78] sm:$0xf]
        %v431 = vld [vmem:[%s1 + $0x7c] sm:$0xf]
        %v432 = vld [vmem:[%s1 + $0x80] sm:$0xf]
        %v433 = vld [vmem:[%s1 + $0x84] sm:$0xf]
        %v434 = vld [vmem:[%s1 + $0x88] sm:$0xf]
        %v435 = vld [vmem:[%s1 + $0x8c] sm:$0xf]
        %v436 = vld [vmem:[%s1 + $0x90] sm:$0xf]
        %v437 = vld [vmem:[%s1 + $0x94] sm:$0xf]
        %v438 = vld [vmem:[%s1 + $0x98] sm:$0xf]
        %v439 = vld [vmem:[%s1 + $0x9c] sm:$0xf]
        %v440 = vld [vmem:[%s1 + $0xa0] sm:$0xf]
        %v441 = vld [vmem:[%s1 + $0xa4] sm:$0xf]
        %v442 = vld [vmem:[%s1 + $0xa8] sm:$0xf]
        %v443 = vld [vmem:[%s1 + $0xac] sm:$0xf]
        %v444 = vld [vmem:[%s1 + $0xb0] sm:$0xf]
        %v445 = vld [vmem:[%s1 + $0xb4] sm:$0xf]
        %v446 = vld [vmem:[%s1 + $0xb8] sm:$0xf]
        %v447 = vld [vmem:[%s1 + $0xbc] sm:$0xf]
        %v448 = vld [vmem:[%s1 + $0xc0] sm:$0xf]
        %v449 = vld [vmem:[%s1 + $0xc4] sm:$0xf]
        %v450 = vld [vmem:[%s1 + $0xc8] sm:$0xf]
        %v451 = vld [vmem:[%s1 + $0xcc] sm:$0xf]
        %v452 = vld [vmem:[%s1 + $0xd0] sm:$0xf]
        %v453 = vld [vmem:[%s1 + $0xd4] sm:$0xf]
        %v454 = vld [vmem:[%s1 + $0xd8] sm:$0xf]
        %v455 = vld [vmem:[%s1 + $0xdc] sm:$0x1]
        %v456 = vld [vmem:[%s2] sm:$0x1]
        %v458 = vlaneseq
        %v459 = vshrl.u32 %v458, 7
        %v460 = vsub.s32 0, %v459
        %v461 = vrot.slane %v456, %v460
        %v687 = vunpack.c.l.b16 %v176
        %v688 = vunpack.c.h.b16 %v176
        %v689 = vunpack.c.l.b16 %v177
        %v690 = vunpack.c.h.b16 %v177
        %v691 = vunpack.c.l.b16 %v178
        %v692 = vunpack.c.h.b16 %v178
        %v693 = vunpack.c.l.b16 %v179
        %v694 = vunpack.c.h.b16 %v179
        %v695 = vunpack.c.l.b16 %v180
        %v696 = vunpack.c.h.b16 %v180
        %v697 = vunpack.c.l.b16 %v181
        %v698 = vunpack.c.h.b16 %v181
        %v699 = vunpack.c.l.b16 %v182
        %v700 = vunpack.c.h.b16 %v182
        %v701 = vunpack.c.l.b16 %v183
        %v702 = vunpack.c.h.b16 %v183
        %v703 = vunpack.c.l.b16 %v184
        %v704 = vunpack.c.h.b16 %v184
        %v705 = vunpack.c.l.b16 %v185
        %v706 = vunpack.c.h.b16 %v185
        %v707 = vunpack.c.l.b16 %v186
        %v708 = vunpack.c.h.b16 %v186
        %v709 = vunpack.c.l.b16 %v187
        %v710 = vunpack.c.h.b16 %v187
        %v711 = vunpack.c.l.b16 %v188
        %v712 = vunpack.c.h.b16 %v188
        %v713 = vunpack.c.l.b16 %v189
        %v714 = vunpack.c.h.b16 %v189
        %v715 = vunpack.c.l.b16 %v190
        %v716 = vunpack.c.h.b16 %v190
        %v717 = vunpack.c.l.b16 %v191
        %v718 = vunpack.c.h.b16 %v191
        %v719 = vunpack.c.l.b16 %v192
        %v720 = vunpack.c.h.b16 %v192
        %v721 = vunpack.c.l.b16 %v193
        %v722 = vunpack.c.h.b16 %v193
        %v723 = vunpack.c.l.b16 %v194
        %v724 = vunpack.c.h.b16 %v194
        %v725 = vunpack.c.l.b16 %v195
        %v726 = vunpack.c.h.b16 %v195
        %v727 = vunpack.c.l.b16 %v196
        %v728 = vunpack.c.h.b16 %v196
        %v729 = vunpack.c.l.b16 %v197
        %v730 = vunpack.c.h.b16 %v197
        %v731 = vunpack.c.l.b16 %v198
        %v732 = vunpack.c.h.b16 %v198
        %v733 = vunpack.c.l.b16 %v199
        %v734 = vunpack.c.h.b16 %v199
        %v735 = vunpack.c.l.b16 %v200
        %v736 = vunpack.c.h.b16 %v200
        %v737 = vunpack.c.l.b16 %v201
        %v738 = vunpack.c.h.b16 %v201
        %v739 = vunpack.c.l.b16 %v202
        %v740 = vunpack.c.h.b16 %v202
        %v741 = vunpack.c.l.b16 %v203
        %v742 = vunpack.c.h.b16 %v203
        %v743 = vunpack.c.l.b16 %v204
        %v744 = vunpack.c.h.b16 %v204
        %v745 = vunpack.c.l.b16 %v205
        %v746 = vunpack.c.h.b16 %v205
        %v747 = vunpack.c.l.b16 %v206
        %v748 = vunpack.c.h.b16 %v206
        %v749 = vunpack.c.l.b16 %v207
        %v750 = vunpack.c.h.b16 %v207
        %v751 = vunpack.c.l.b16 %v208
        %v752 = vunpack.c.h.b16 %v208
        %v753 = vunpack.c.l.b16 %v209
        %v754 = vunpack.c.h.b16 %v209
        %v755 = vunpack.c.l.b16 %v210
        %v756 = vunpack.c.h.b16 %v210
        %v757 = vunpack.c.l.b16 %v211
        %v758 = vunpack.c.h.b16 %v211
        %v759 = vunpack.c.l.b16 %v212
        %v760 = vunpack.c.h.b16 %v212
        %v761 = vunpack.c.l.b16 %v213
        %v762 = vunpack.c.h.b16 %v213
        %v763 = vunpack.c.l.b16 %v214
        %v764 = vunpack.c.h.b16 %v214
        %v765 = vunpack.c.l.b16 %v215
        %v766 = vunpack.c.h.b16 %v215
        %v767 = vunpack.c.l.b16 %v216
        %v768 = vunpack.c.h.b16 %v216
        %v769 = vunpack.c.l.b16 %v217
        %v770 = vunpack.c.h.b16 %v217
        %v771 = vunpack.c.l.b16 %v218
        %v772 = vunpack.c.h.b16 %v218
        %v773 = vunpack.c.l.b16 %v219
        %v774 = vunpack.c.h.b16 %v219
        %v775 = vunpack.c.l.b16 %v220
        %v776 = vunpack.c.h.b16 %v220
        %v777 = vunpack.c.l.b16 %v221
        %v778 = vunpack.c.h.b16 %v221
        %v779 = vunpack.c.l.b16 %v222
        %v780 = vunpack.c.h.b16 %v222
        %v781 = vunpack.c.l.b16 %v223
        %v782 = vunpack.c.h.b16 %v223
        %v783 = vunpack.c.l.b16 %v224
        %v784 = vunpack.c.h.b16 %v224
        %v785 = vunpack.c.l.b16 %v225
        %v786 = vunpack.c.h.b16 %v225
        %v787 = vunpack.c.l.b16 %v226
        %v788 = vunpack.c.h.b16 %v226
        %v789 = vunpack.c.l.b16 %v227
        %v790 = vunpack.c.h.b16 %v227
        %v791 = vunpack.c.l.b16 %v228
        %v792 = vunpack.c.h.b16 %v228
        %v793 = vunpack.c.l.b16 %v229
        %v794 = vunpack.c.h.b16 %v229
        %v795 = vunpack.c.l.b16 %v230
        %v796 = vunpack.c.h.b16 %v230
        %v797 = vunpack.c.l.b16 %v231
        %v798 = vunpack.c.h.b16 %v231
        %v799 = vunpack.c.l.b16 %v232
        %v800 = vunpack.c.h.b16 %v232
        %v801 = vunpack.c.l.b16 %v233
        %v802 = vunpack.c.h.b16 %v233
        %v803 = vunpack.c.l.b16 %v234
        %v804 = vunpack.c.h.b16 %v234
        %v805 = vunpack.c.l.b16 %v235
        %v806 = vunpack.c.h.b16 %v235
        %v807 = vunpack.c.l.b16 %v236
        %v808 = vunpack.c.h.b16 %v236
        %v809 = vunpack.c.l.b16 %v237
        %v810 = vunpack.c.h.b16 %v237
        %v811 = vunpack.c.l.b16 %v238
        %v812 = vunpack.c.h.b16 %v238
        %v813 = vunpack.c.l.b16 %v239
        %v814 = vunpack.c.h.b16 %v239
        %v815 = vunpack.c.l.b16 %v240
        %v816 = vunpack.c.h.b16 %v240
        %v817 = vunpack.c.l.b16 %v241
        %v818 = vunpack.c.h.b16 %v241
        %v819 = vunpack.c.l.b16 %v242
        %v820 = vunpack.c.h.b16 %v242
        %v821 = vunpack.c.l.b16 %v243
        %v822 = vunpack.c.h.b16 %v243
        %v823 = vunpack.c.l.b16 %v244
        %v824 = vunpack.c.h.b16 %v244
        %v825 = vunpack.c.l.b16 %v245
        %v826 = vunpack.c.h.b16 %v245
        %v827 = vunpack.c.l.b16 %v246
        %v828 = vunpack.c.h.b16 %v246
        %v829 = vunpack.c.l.b16 %v247
        %v830 = vunpack.c.h.b16 %v247
        %v831 = vunpack.c.l.b16 %v248
        %v832 = vunpack.c.h.b16 %v248
        %v833 = vunpack.c.l.b16 %v249
        %v834 = vunpack.c.h.b16 %v249
        %v835 = vunpack.c.l.b16 %v250
        %v836 = vunpack.c.h.b16 %v250
        %v837 = vunpack.c.l.b16 %v251
        %v838 = vunpack.c.h.b16 %v251
        %v839 = vunpack.c.l.b16 %v252
        %v840 = vunpack.c.h.b16 %v252
        %v841 = vunpack.c.l.b16 %v253
        %v842 = vunpack.c.h.b16 %v253
        %v843 = vunpack.c.l.b16 %v254
        %v844 = vunpack.c.h.b16 %v254
        %v845 = vunpack.c.l.b16 %v255
        %v846 = vunpack.c.h.b16 %v255
        %v847 = vunpack.c.l.b16 %v256
        %v848 = vunpack.c.h.b16 %v256
        %v849 = vunpack.c.l.b16 %v257
        %v850 = vunpack.c.h.b16 %v257
        %v851 = vunpack.c.l.b16 %v258
        %v852 = vunpack.c.h.b16 %v258
        %v853 = vunpack.c.l.b16 %v259
        %v854 = vunpack.c.h.b16 %v259
        %v855 = vunpack.c.l.b16 %v260
        %v856 = vunpack.c.h.b16 %v260
        %v857 = vunpack.c.l.b16 %v261
        %v858 = vunpack.c.h.b16 %v261
        %v859 = vunpack.c.l.b16 %v262
        %v860 = vunpack.c.h.b16 %v262
        %v861 = vunpack.c.l.b16 %v263
        %v862 = vunpack.c.h.b16 %v263
        %v863 = vunpack.c.l.b16 %v264
        %v864 = vunpack.c.h.b16 %v264
        %v865 = vunpack.c.l.b16 %v265
        %v866 = vunpack.c.h.b16 %v265
        %v867 = vunpack.c.l.b16 %v266
        %v868 = vunpack.c.h.b16 %v266
        %v869 = vunpack.c.l.b16 %v267
        %v870 = vunpack.c.h.b16 %v267
        %v871 = vunpack.c.l.b16 %v268
        %v872 = vunpack.c.h.b16 %v268
        %v873 = vunpack.c.l.b16 %v269
        %v874 = vunpack.c.h.b16 %v269
        %v875 = vunpack.c.l.b16 %v270
        %v876 = vunpack.c.h.b16 %v270
        %v877 = vunpack.c.l.b16 %v271
        %v878 = vunpack.c.h.b16 %v271
        %v879 = vunpack.c.l.b16 %v272
        %v880 = vunpack.c.h.b16 %v272
        %v881 = vunpack.c.l.b16 %v273
        %v882 = vunpack.c.h.b16 %v273
        %v883 = vunpack.c.l.b16 %v274
        %v884 = vunpack.c.h.b16 %v274
        %v885 = vunpack.c.l.b16 %v275
        %v886 = vunpack.c.h.b16 %v275
        %v887 = vunpack.c.l.b16 %v276
        %v888 = vunpack.c.h.b16 %v276
        %v889 = vunpack.c.l.b16 %v277
        %v890 = vunpack.c.h.b16 %v277
        %v891 = vunpack.c.l.b16 %v278
        %v892 = vunpack.c.h.b16 %v278
        %v893 = vunpack.c.l.b16 %v279
        %v894 = vunpack.c.h.b16 %v279
        %v895 = vunpack.c.l.b16 %v280
        %v896 = vunpack.c.h.b16 %v280
        %v897 = vunpack.c.l.b16 %v281
        %v898 = vunpack.c.h.b16 %v281
        %v899 = vunpack.c.l.b16 %v282
        %v900 = vunpack.c.h.b16 %v282
        %v901 = vunpack.c.l.b16 %v283
        %v902 = vunpack.c.h.b16 %v283
        %v903 = vunpack.c.l.b16 %v284
        %v904 = vunpack.c.h.b16 %v284
        %v905 = vunpack.c.l.b16 %v285
        %v906 = vunpack.c.h.b16 %v285
        %v907 = vunpack.c.l.b16 %v286
        %v908 = vunpack.c.h.b16 %v286
        %v909 = vunpack.c.l.b16 %v287
        %v910 = vunpack.c.h.b16 %v287
        %v911 = vunpack.c.l.b16 %v288
        %v912 = vunpack.c.h.b16 %v288
        %v913 = vunpack.c.l.b16 %v289
        %v914 = vunpack.c.h.b16 %v289
        %v915 = vunpack.c.l.b16 %v290
        %v916 = vunpack.c.h.b16 %v290
        %v917 = vunpack.c.l.b16 %v291
        %v918 = vunpack.c.h.b16 %v291
        %v919 = vunpack.c.l.b16 %v292
        %v920 = vunpack.c.h.b16 %v292
        %v921 = vunpack.c.l.b16 %v293
        %v922 = vunpack.c.h.b16 %v293
        %v923 = vunpack.c.l.b16 %v294
        %v924 = vunpack.c.h.b16 %v294
        %v925 = vunpack.c.l.b16 %v295
        %v926 = vunpack.c.h.b16 %v295
        %v927 = vunpack.c.l.b16 %v296
        %v928 = vunpack.c.h.b16 %v296
        %v929 = vunpack.c.l.b16 %v297
        %v930 = vunpack.c.h.b16 %v297
        %v931 = vunpack.c.l.b16 %v298
        %v932 = vunpack.c.h.b16 %v298
        %v933 = vunpack.c.l.b16 %v299
        %v934 = vunpack.c.h.b16 %v299
        %v935 = vunpack.c.l.b16 %v300
        %v936 = vunpack.c.h.b16 %v300
        %v937 = vunpack.c.l.b16 %v301
        %v938 = vunpack.c.h.b16 %v301
        %v939 = vunpack.c.l.b16 %v302
        %v940 = vunpack.c.h.b16 %v302
        %v941 = vunpack.c.l.b16 %v303
        %v942 = vunpack.c.h.b16 %v303
        %v943 = vunpack.c.l.b16 %v304
        %v944 = vunpack.c.h.b16 %v304
        %v945 = vunpack.c.l.b16 %v305
        %v946 = vunpack.c.h.b16 %v305
        %v947 = vunpack.c.l.b16 %v306
        %v948 = vunpack.c.h.b16 %v306
        %v949 = vunpack.c.l.b16 %v307
        %v950 = vunpack.c.h.b16 %v307
        %v951 = vunpack.c.l.b16 %v308
        %v952 = vunpack.c.h.b16 %v308
        %v953 = vunpack.c.l.b16 %v309
        %v954 = vunpack.c.h.b16 %v309
        %v955 = vunpack.c.l.b16 %v310
        %v956 = vunpack.c.h.b16 %v310
        %v957 = vunpack.c.l.b16 %v311
        %v958 = vunpack.c.h.b16 %v311
        %v959 = vunpack.c.l.b16 %v312
        %v960 = vunpack.c.h.b16 %v312
        %v961 = vunpack.c.l.b16 %v313
        %v962 = vunpack.c.h.b16 %v313
        %v963 = vunpack.c.l.b16 %v314
        %v964 = vunpack.c.h.b16 %v314
        %v965 = vunpack.c.l.b16 %v315
        %v966 = vunpack.c.h.b16 %v315
        %v967 = vunpack.c.l.b16 %v316
        %v968 = vunpack.c.h.b16 %v316
        %v969 = vunpack.c.l.b16 %v317
        %v970 = vunpack.c.h.b16 %v317
        %v971 = vunpack.c.l.b16 %v318
        %v972 = vunpack.c.h.b16 %v318
        %v973 = vunpack.c.l.b16 %v319
        %v974 = vunpack.c.h.b16 %v319
        %v975 = vunpack.c.l.b16 %v320
        %v976 = vunpack.c.h.b16 %v320
        %v977 = vunpack.c.l.b16 %v321
        %v978 = vunpack.c.h.b16 %v321
        %v979 = vunpack.c.l.b16 %v322
        %v980 = vunpack.c.h.b16 %v322
        %v981 = vunpack.c.l.b16 %v323
        %v982 = vunpack.c.h.b16 %v323
        %v983 = vunpack.c.l.b16 %v324
        %v984 = vunpack.c.h.b16 %v324
        %v985 = vunpack.c.l.b16 %v325
        %v986 = vunpack.c.h.b16 %v325
        %v987 = vunpack.c.l.b16 %v326
        %v988 = vunpack.c.h.b16 %v326
        %v989 = vunpack.c.l.b16 %v327
        %v990 = vunpack.c.h.b16 %v327
        %v991 = vunpack.c.l.b16 %v328
        %v992 = vunpack.c.h.b16 %v328
        %v993 = vunpack.c.l.b16 %v329
        %v994 = vunpack.c.h.b16 %v329
        %v995 = vunpack.c.l.b16 %v330
        %v996 = vunpack.c.h.b16 %v330
        %v997 = vunpack.c.l.b16 %v331
        %v998 = vunpack.c.h.b16 %v331
        %v999 = vunpack.c.l.b16 %v332
        %v1000 = vunpack.c.h.b16 %v332
        %v1001 = vunpack.c.l.b16 %v333
        %v1002 = vunpack.c.h.b16 %v333
        %v1003 = vunpack.c.l.b16 %v334
        %v1004 = vunpack.c.h.b16 %v334
        %v1005 = vunpack.c.l.b16 %v335
        %v1006 = vunpack.c.h.b16 %v335
        %v1007 = vunpack.c.l.b16 %v336
        %v1008 = vunpack.c.h.b16 %v336
        %v1009 = vunpack.c.l.b16 %v337
        %v1010 = vunpack.c.h.b16 %v337
        %v1011 = vunpack.c.l.b16 %v338
        %v1012 = vunpack.c.h.b16 %v338
        %v1013 = vunpack.c.l.b16 %v339
        %v1014 = vunpack.c.h.b16 %v339
        %v1015 = vunpack.c.l.b16 %v340
        %v1016 = vunpack.c.h.b16 %v340
        %v1017 = vunpack.c.l.b16 %v341
        %v1018 = vunpack.c.h.b16 %v341
        %v1019 = vunpack.c.l.b16 %v342
        %v1020 = vunpack.c.h.b16 %v342
        %v1021 = vunpack.c.l.b16 %v343
        %v1022 = vunpack.c.h.b16 %v343
        %v1023 = vunpack.c.l.b16 %v344
        %v1024 = vunpack.c.h.b16 %v344
        %v1025 = vunpack.c.l.b16 %v345
        %v1026 = vunpack.c.h.b16 %v345
        %v1027 = vunpack.c.l.b16 %v346
        %v1028 = vunpack.c.h.b16 %v346
        %v1029 = vunpack.c.l.b16 %v347
        %v1030 = vunpack.c.h.b16 %v347
        %v1031 = vunpack.c.l.b16 %v348
        %v1032 = vunpack.c.h.b16 %v348
        %v1033 = vunpack.c.l.b16 %v349
        %v1034 = vunpack.c.h.b16 %v349
        %v1035 = vunpack.c.l.b16 %v350
        %v1036 = vunpack.c.h.b16 %v350
        %v1037 = vunpack.c.l.b16 %v351
        %v1038 = vunpack.c.h.b16 %v351
        %v1039 = vunpack.c.l.b16 %v352
        %v1040 = vunpack.c.h.b16 %v352
        %v1041 = vunpack.c.l.b16 %v353
        %v1042 = vunpack.c.h.b16 %v353
        %v1043 = vunpack.c.l.b16 %v354
        %v1044 = vunpack.c.h.b16 %v354
        %v1045 = vunpack.c.l.b16 %v355
        %v1046 = vunpack.c.h.b16 %v355
        %v1047 = vunpack.c.l.b16 %v356
        %v1048 = vunpack.c.h.b16 %v356
        %v1049 = vunpack.c.l.b16 %v357
        %v1050 = vunpack.c.h.b16 %v357
        %v1051 = vunpack.c.l.b16 %v358
        %v1052 = vunpack.c.h.b16 %v358
        %v1053 = vunpack.c.l.b16 %v359
        %v1054 = vunpack.c.h.b16 %v359
        %v1055 = vunpack.c.l.b16 %v360
        %v1056 = vunpack.c.h.b16 %v360
        %v1057 = vunpack.c.l.b16 %v361
        %v1058 = vunpack.c.h.b16 %v361
        %v1059 = vunpack.c.l.b16 %v362
        %v1060 = vunpack.c.h.b16 %v362
        %v1061 = vunpack.c.l.b16 %v363
        %v1062 = vunpack.c.h.b16 %v363
        %v1063 = vunpack.c.l.b16 %v364
        %v1064 = vunpack.c.h.b16 %v364
        %v1065 = vunpack.c.l.b16 %v365
        %v1066 = vunpack.c.h.b16 %v365
        %v1067 = vunpack.c.l.b16 %v366
        %v1068 = vunpack.c.h.b16 %v366
        %v1069 = vunpack.c.l.b16 %v367
        %v1070 = vunpack.c.h.b16 %v367
        %v1071 = vunpack.c.l.b16 %v368
        %v1072 = vunpack.c.h.b16 %v368
        %v1073 = vunpack.c.l.b16 %v369
        %v1074 = vunpack.c.h.b16 %v369
        %v1075 = vunpack.c.l.b16 %v370
        %v1076 = vunpack.c.h.b16 %v370
        %v1077 = vunpack.c.l.b16 %v371
        %v1078 = vunpack.c.h.b16 %v371
        %v1079 = vunpack.c.l.b16 %v372
        %v1080 = vunpack.c.h.b16 %v372
        %v1081 = vunpack.c.l.b16 %v373
        %v1082 = vunpack.c.h.b16 %v373
        %v1083 = vunpack.c.l.b16 %v374
        %v1084 = vunpack.c.h.b16 %v374
        %v1085 = vunpack.c.l.b16 %v375
        %v1086 = vunpack.c.h.b16 %v375
        %v1087 = vunpack.c.l.b16 %v376
        %v1088 = vunpack.c.h.b16 %v376
        %v1089 = vunpack.c.l.b16 %v377
        %v1090 = vunpack.c.h.b16 %v377
        %v1091 = vunpack.c.l.b16 %v378
        %v1092 = vunpack.c.h.b16 %v378
        %v1093 = vunpack.c.l.b16 %v379
        %v1094 = vunpack.c.h.b16 %v379
        %v1095 = vunpack.c.l.b16 %v380
        %v1096 = vunpack.c.h.b16 %v380
        %v1097 = vunpack.c.l.b16 %v381
        %v1098 = vunpack.c.h.b16 %v381
        %v1099 = vunpack.c.l.b16 %v382
        %v1100 = vunpack.c.h.b16 %v382
        %v1101 = vunpack.c.l.b16 %v383
        %v1102 = vunpack.c.h.b16 %v383
        %v1103 = vunpack.c.l.b16 %v384
        %v1104 = vunpack.c.h.b16 %v384
        %v1105 = vunpack.c.l.b16 %v385
        %v1106 = vunpack.c.h.b16 %v385
        %v1107 = vunpack.c.l.b16 %v386
        %v1108 = vunpack.c.h.b16 %v386
        %v1109 = vunpack.c.l.b16 %v387
        %v1110 = vunpack.c.h.b16 %v387
        %v1111 = vunpack.c.l.b16 %v388
        %v1112 = vunpack.c.h.b16 %v388
        %v1113 = vunpack.c.l.b16 %v389
        %v1114 = vunpack.c.h.b16 %v389
        %v1115 = vunpack.c.l.b16 %v390
        %v1116 = vunpack.c.h.b16 %v390
        %v1117 = vunpack.c.l.b16 %v391
        %v1118 = vunpack.c.h.b16 %v391
        %v1119 = vunpack.c.l.b16 %v392
        %v1120 = vunpack.c.h.b16 %v392
        %v1121 = vunpack.c.l.b16 %v393
        %v1122 = vunpack.c.h.b16 %v393
        %v1123 = vunpack.c.l.b16 %v394
        %v1124 = vunpack.c.h.b16 %v394
        %v1125 = vunpack.c.l.b16 %v395
        %v1126 = vunpack.c.h.b16 %v395
        %v1127 = vunpack.c.l.b16 %v396
        %v1128 = vunpack.c.h.b16 %v396
        %v1129 = vunpack.c.l.b16 %v397
        %v1130 = vunpack.c.h.b16 %v397
        %v1131 = vunpack.c.l.b16 %v398
        %v1132 = vunpack.c.h.b16 %v398
        %v1133 = vunpack.c.l.b16 %v399
        %v1134 = vunpack.c.h.b16 %v399
        %v1135 = vpack.c.b16 %v691, %v687
        %v1136 = vpack.c.b16 %v692, %v688
        %v1137 = vpack.c.b16 %v693, %v689
        %v1138 = vpack.c.b16 %v694, %v690
        %v1139 = vpack.c.b16 %v699, %v695
        %v1140 = vpack.c.b16 %v700, %v696
        %v1141 = vpack.c.b16 %v701, %v697
        %v1142 = vpack.c.b16 %v702, %v698
        %v1143 = vpack.c.b16 %v707, %v703
        %v1144 = vpack.c.b16 %v708, %v704
        %v1145 = vpack.c.b16 %v709, %v705
        %v1146 = vpack.c.b16 %v710, %v706
        %v1147 = vpack.c.b16 %v715, %v711
        %v1148 = vpack.c.b16 %v716, %v712
        %v1149 = vpack.c.b16 %v717, %v713
        %v1150 = vpack.c.b16 %v718, %v714
        %v1151 = vpack.c.b16 %v723, %v719
        %v1152 = vpack.c.b16 %v724, %v720
        %v1153 = vpack.c.b16 %v725, %v721
        %v1154 = vpack.c.b16 %v726, %v722
        %v1155 = vpack.c.b16 %v731, %v727
        %v1156 = vpack.c.b16 %v732, %v728
        %v1157 = vpack.c.b16 %v733, %v729
        %v1158 = vpack.c.b16 %v734, %v730
        %v1159 = vpack.c.b16 %v739, %v735
        %v1160 = vpack.c.b16 %v740, %v736
        %v1161 = vpack.c.b16 %v741, %v737
        %v1162 = vpack.c.b16 %v742, %v738
        %v1163 = vpack.c.b16 %v747, %v743
        %v1164 = vpack.c.b16 %v748, %v744
        %v1165 = vpack.c.b16 %v749, %v745
        %v1166 = vpack.c.b16 %v750, %v746
        %v1167 = vpack.c.b16 %v755, %v751
        %v1168 = vpack.c.b16 %v756, %v752
        %v1169 = vpack.c.b16 %v757, %v753
        %v1170 = vpack.c.b16 %v758, %v754
        %v1171 = vpack.c.b16 %v763, %v759
        %v1172 = vpack.c.b16 %v764, %v760
        %v1173 = vpack.c.b16 %v765, %v761
        %v1174 = vpack.c.b16 %v766, %v762
        %v1175 = vpack.c.b16 %v771, %v767
        %v1176 = vpack.c.b16 %v772, %v768
        %v1177 = vpack.c.b16 %v773, %v769
        %v1178 = vpack.c.b16 %v774, %v770
        %v1179 = vpack.c.b16 %v779, %v775
        %v1180 = vpack.c.b16 %v780, %v776
        %v1181 = vpack.c.b16 %v781, %v777
        %v1182 = vpack.c.b16 %v782, %v778
        %v1183 = vpack.c.b16 %v787, %v783
        %v1184 = vpack.c.b16 %v788, %v784
        %v1185 = vpack.c.b16 %v789, %v785
        %v1186 = vpack.c.b16 %v790, %v786
        %v1187 = vpack.c.b16 %v795, %v791
        %v1188 = vpack.c.b16 %v796, %v792
        %v1189 = vpack.c.b16 %v797, %v793
        %v1190 = vpack.c.b16 %v798, %v794
        %v1191 = vpack.c.b16 %v803, %v799
        %v1192 = vpack.c.b16 %v804, %v800
        %v1193 = vpack.c.b16 %v805, %v801
        %v1194 = vpack.c.b16 %v806, %v802
        %v1195 = vpack.c.b16 %v811, %v807
        %v1196 = vpack.c.b16 %v812, %v808
        %v1197 = vpack.c.b16 %v813, %v809
        %v1198 = vpack.c.b16 %v814, %v810
        %v1199 = vpack.c.b16 %v819, %v815
        %v1200 = vpack.c.b16 %v820, %v816
        %v1201 = vpack.c.b16 %v821, %v817
        %v1202 = vpack.c.b16 %v822, %v818
        %v1203 = vpack.c.b16 %v827, %v823
        %v1204 = vpack.c.b16 %v828, %v824
        %v1205 = vpack.c.b16 %v829, %v825
        %v1206 = vpack.c.b16 %v830, %v826
        %v1207 = vpack.c.b16 %v835, %v831
        %v1208 = vpack.c.b16 %v836, %v832
        %v1209 = vpack.c.b16 %v837, %v833
        %v1210 = vpack.c.b16 %v838, %v834
        %v1211 = vpack.c.b16 %v843, %v839
        %v1212 = vpack.c.b16 %v844, %v840
        %v1213 = vpack.c.b16 %v845, %v841
        %v1214 = vpack.c.b16 %v846, %v842
        %v1215 = vpack.c.b16 %v851, %v847
        %v1216 = vpack.c.b16 %v852, %v848
        %v1217 = vpack.c.b16 %v853, %v849
        %v1218 = vpack.c.b16 %v854, %v850
        %v1219 = vpack.c.b16 %v859, %v855
        %v1220 = vpack.c.b16 %v860, %v856
        %v1221 = vpack.c.b16 %v861, %v857
        %v1222 = vpack.c.b16 %v862, %v858
        %v1223 = vpack.c.b16 %v867, %v863
        %v1224 = vpack.c.b16 %v868, %v864
        %v1225 = vpack.c.b16 %v869, %v865
        %v1226 = vpack.c.b16 %v870, %v866
        %v1227 = vpack.c.b16 %v875, %v871
        %v1228 = vpack.c.b16 %v876, %v872
        %v1229 = vpack.c.b16 %v877, %v873
        %v1230 = vpack.c.b16 %v878, %v874
        %v1231 = vpack.c.b16 %v883, %v879
        %v1232 = vpack.c.b16 %v884, %v880
        %v1233 = vpack.c.b16 %v885, %v881
        %v1234 = vpack.c.b16 %v886, %v882
        %v1235 = vpack.c.b16 %v891, %v887
        %v1236 = vpack.c.b16 %v892, %v888
        %v1237 = vpack.c.b16 %v893, %v889
        %v1238 = vpack.c.b16 %v894, %v890
        %v1239 = vpack.c.b16 %v899, %v895
        %v1240 = vpack.c.b16 %v900, %v896
        %v1241 = vpack.c.b16 %v901, %v897
        %v1242 = vpack.c.b16 %v902, %v898
        %v1243 = vpack.c.b16 %v907, %v903
        %v1244 = vpack.c.b16 %v908, %v904
        %v1245 = vpack.c.b16 %v909, %v905
        %v1246 = vpack.c.b16 %v910, %v906
        %v1247 = vpack.c.b16 %v915, %v911
        %v1248 = vpack.c.b16 %v916, %v912
        %v1249 = vpack.c.b16 %v917, %v913
        %v1250 = vpack.c.b16 %v918, %v914
        %v1251 = vpack.c.b16 %v923, %v919
        %v1252 = vpack.c.b16 %v924, %v920
        %v1253 = vpack.c.b16 %v925, %v921
        %v1254 = vpack.c.b16 %v926, %v922
        %v1255 = vpack.c.b16 %v931, %v927
        %v1256 = vpack.c.b16 %v932, %v928
        %v1257 = vpack.c.b16 %v933, %v929
        %v1258 = vpack.c.b16 %v934, %v930
        %v1259 = vpack.c.b16 %v939, %v935
        %v1260 = vpack.c.b16 %v940, %v936
        %v1261 = vpack.c.b16 %v941, %v937
        %v1262 = vpack.c.b16 %v942, %v938
        %v1263 = vpack.c.b16 %v947, %v943
        %v1264 = vpack.c.b16 %v948, %v944
        %v1265 = vpack.c.b16 %v949, %v945
        %v1266 = vpack.c.b16 %v950, %v946
        %v1267 = vpack.c.b16 %v955, %v951
        %v1268 = vpack.c.b16 %v956, %v952
        %v1269 = vpack.c.b16 %v957, %v953
        %v1270 = vpack.c.b16 %v958, %v954
        %v1271 = vpack.c.b16 %v963, %v959
        %v1272 = vpack.c.b16 %v964, %v960
        %v1273 = vpack.c.b16 %v965, %v961
        %v1274 = vpack.c.b16 %v966, %v962
        %v1275 = vpack.c.b16 %v971, %v967
        %v1276 = vpack.c.b16 %v972, %v968
        %v1277 = vpack.c.b16 %v973, %v969
        %v1278 = vpack.c.b16 %v974, %v970
        %v1279 = vpack.c.b16 %v979, %v975
        %v1280 = vpack.c.b16 %v980, %v976
        %v1281 = vpack.c.b16 %v981, %v977
        %v1282 = vpack.c.b16 %v982, %v978
        %v1283 = vpack.c.b16 %v987, %v983
        %v1284 = vpack.c.b16 %v988, %v984
        %v1285 = vpack.c.b16 %v989, %v985
        %v1286 = vpack.c.b16 %v990, %v986
        %v1287 = vpack.c.b16 %v995, %v991
        %v1288 = vpack.c.b16 %v996, %v992
        %v1289 = vpack.c.b16 %v997, %v993
        %v1290 = vpack.c.b16 %v998, %v994
        %v1291 = vpack.c.b16 %v1003, %v999
        %v1292 = vpack.c.b16 %v1004, %v1000
        %v1293 = vpack.c.b16 %v1005, %v1001
        %v1294 = vpack.c.b16 %v1006, %v1002
        %v1295 = vpack.c.b16 %v1011, %v1007
        %v1296 = vpack.c.b16 %v1012, %v1008
        %v1297 = vpack.c.b16 %v1013, %v1009
        %v1298 = vpack.c.b16 %v1014, %v1010
        %v1299 = vpack.c.b16 %v1019, %v1015
        %v1300 = vpack.c.b16 %v1020, %v1016
        %v1301 = vpack.c.b16 %v1021, %v1017
        %v1302 = vpack.c.b16 %v1022, %v1018
        %v1303 = vpack.c.b16 %v1027, %v1023
        %v1304 = vpack.c.b16 %v1028, %v1024
        %v1305 = vpack.c.b16 %v1029, %v1025
        %v1306 = vpack.c.b16 %v1030, %v1026
        %v1307 = vpack.c.b16 %v1035, %v1031
        %v1308 = vpack.c.b16 %v1036, %v1032
        %v1309 = vpack.c.b16 %v1037, %v1033
        %v1310 = vpack.c.b16 %v1038, %v1034
        %v1311 = vpack.c.b16 %v1043, %v1039
        %v1312 = vpack.c.b16 %v1044, %v1040
        %v1313 = vpack.c.b16 %v1045, %v1041
        %v1314 = vpack.c.b16 %v1046, %v1042
        %v1315 = vpack.c.b16 %v1051, %v1047
        %v1316 = vpack.c.b16 %v1052, %v1048
        %v1317 = vpack.c.b16 %v1053, %v1049
        %v1318 = vpack.c.b16 %v1054, %v1050
        %v1319 = vpack.c.b16 %v1059, %v1055
        %v1320 = vpack.c.b16 %v1060, %v1056
        %v1321 = vpack.c.b16 %v1061, %v1057
        %v1322 = vpack.c.b16 %v1062, %v1058
        %v1323 = vpack.c.b16 %v1067, %v1063
        %v1324 = vpack.c.b16 %v1068, %v1064
        %v1325 = vpack.c.b16 %v1069, %v1065
        %v1326 = vpack.c.b16 %v1070, %v1066
        %v1327 = vpack.c.b16 %v1075, %v1071
        %v1328 = vpack.c.b16 %v1076, %v1072
        %v1329 = vpack.c.b16 %v1077, %v1073
        %v1330 = vpack.c.b16 %v1078, %v1074
        %v1331 = vpack.c.b16 %v1083, %v1079
        %v1332 = vpack.c.b16 %v1084, %v1080
        %v1333 = vpack.c.b16 %v1085, %v1081
        %v1334 = vpack.c.b16 %v1086, %v1082
        %v1335 = vpack.c.b16 %v1091, %v1087
        %v1336 = vpack.c.b16 %v1092, %v1088
        %v1337 = vpack.c.b16 %v1093, %v1089
        %v1338 = vpack.c.b16 %v1094, %v1090
        %v1339 = vpack.c.b16 %v1099, %v1095
        %v1340 = vpack.c.b16 %v1100, %v1096
        %v1341 = vpack.c.b16 %v1101, %v1097
        %v1342 = vpack.c.b16 %v1102, %v1098
        %v1343 = vpack.c.b16 %v1107, %v1103
        %v1344 = vpack.c.b16 %v1108, %v1104
        %v1345 = vpack.c.b16 %v1109, %v1105
        %v1346 = vpack.c.b16 %v1110, %v1106
        %v1347 = vpack.c.b16 %v1115, %v1111
        %v1348 = vpack.c.b16 %v1116, %v1112
        %v1349 = vpack.c.b16 %v1117, %v1113
        %v1350 = vpack.c.b16 %v1118, %v1114
        %v1351 = vpack.c.b16 %v1123, %v1119
        %v1352 = vpack.c.b16 %v1124, %v1120
        %v1353 = vpack.c.b16 %v1125, %v1121
        %v1354 = vpack.c.b16 %v1126, %v1122
        %v1355 = vpack.c.b16 %v1131, %v1127
        %v1356 = vpack.c.b16 %v1132, %v1128
        %v1357 = vpack.c.b16 %v1133, %v1129
        %v1358 = vpack.c.b16 %v1134, %v1130
        %v1583 = vunpack.c.l.b16 %v400
        %v1584 = vunpack.c.l.b16 %v401
        %v1585 = vunpack.c.l.b16 %v402
        %v1586 = vunpack.c.l.b16 %v403
        %v1587 = vunpack.c.l.b16 %v404
        %v1588 = vunpack.c.l.b16 %v405
        %v1589 = vunpack.c.l.b16 %v406
        %v1590 = vunpack.c.l.b16 %v407
        %v1591 = vunpack.c.l.b16 %v408
        %v1592 = vunpack.c.l.b16 %v409
        %v1593 = vunpack.c.l.b16 %v410
        %v1594 = vunpack.c.l.b16 %v411
        %v1595 = vunpack.c.l.b16 %v412
        %v1596 = vunpack.c.l.b16 %v413
        %v1597 = vunpack.c.l.b16 %v414
        %v1598 = vunpack.c.l.b16 %v415
        %v1599 = vunpack.c.l.b16 %v416
        %v1600 = vunpack.c.l.b16 %v417
        %v1601 = vunpack.c.l.b16 %v418
        %v1602 = vunpack.c.l.b16 %v419
        %v1603 = vunpack.c.l.b16 %v420
        %v1604 = vunpack.c.l.b16 %v421
        %v1605 = vunpack.c.l.b16 %v422
        %v1606 = vunpack.c.l.b16 %v423
        %v1607 = vunpack.c.l.b16 %v424
        %v1608 = vunpack.c.l.b16 %v425
        %v1609 = vunpack.c.l.b16 %v426
        %v1610 = vunpack.c.l.b16 %v427
        %v1611 = vunpack.c.l.b16 %v428
        %v1612 = vunpack.c.l.b16 %v429
        %v1613 = vunpack.c.l.b16 %v430
        %v1614 = vunpack.c.l.b16 %v431
        %v1615 = vunpack.c.l.b16 %v432
        %v1616 = vunpack.c.l.b16 %v433
        %v1617 = vunpack.c.l.b16 %v434
        %v1618 = vunpack.c.l.b16 %v435
        %v1619 = vunpack.c.l.b16 %v436
        %v1620 = vunpack.c.l.b16 %v437
        %v1621 = vunpack.c.l.b16 %v438
        %v1622 = vunpack.c.l.b16 %v439
        %v1623 = vunpack.c.l.b16 %v440
        %v1624 = vunpack.c.l.b16 %v441
        %v1625 = vunpack.c.l.b16 %v442
        %v1626 = vunpack.c.l.b16 %v443
        %v1627 = vunpack.c.l.b16 %v444
        %v1628 = vunpack.c.l.b16 %v445
        %v1629 = vunpack.c.l.b16 %v446
        %v1630 = vunpack.c.l.b16 %v447
        %v1631 = vunpack.c.l.b16 %v448
        %v1632 = vunpack.c.l.b16 %v449
        %v1633 = vunpack.c.l.b16 %v450
        %v1634 = vunpack.c.l.b16 %v451
        %v1635 = vunpack.c.l.b16 %v452
        %v1636 = vunpack.c.l.b16 %v453
        %v1637 = vunpack.c.l.b16 %v454
        %v1638 = vunpack.c.l.b16 %v455
        %v1639 = vpack.c.b16 %v1584, %v1583
        %v1640 = vpack.c.b16 %v1586, %v1585
        %v1641 = vpack.c.b16 %v1588, %v1587
        %v1642 = vpack.c.b16 %v1590, %v1589
        %v1643 = vpack.c.b16 %v1592, %v1591
        %v1644 = vpack.c.b16 %v1594, %v1593
        %v1645 = vpack.c.b16 %v1596, %v1595
        %v1646 = vpack.c.b16 %v1598, %v1597
        %v1647 = vpack.c.b16 %v1600, %v1599
        %v1648 = vpack.c.b16 %v1602, %v1601
        %v1649 = vpack.c.b16 %v1604, %v1603
        %v1650 = vpack.c.b16 %v1606, %v1605
        %v1651 = vpack.c.b16 %v1608, %v1607
        %v1652 = vpack.c.b16 %v1610, %v1609
        %v1653 = vpack.c.b16 %v1612, %v1611
        %v1654 = vpack.c.b16 %v1614, %v1613
        %v1655 = vpack.c.b16 %v1616, %v1615
        %v1656 = vpack.c.b16 %v1618, %v1617
        %v1657 = vpack.c.b16 %v1620, %v1619
        %v1658 = vpack.c.b16 %v1622, %v1621
        %v1659 = vpack.c.b16 %v1624, %v1623
        %v1660 = vpack.c.b16 %v1626, %v1625
        %v1661 = vpack.c.b16 %v1628, %v1627
        %v1662 = vpack.c.b16 %v1630, %v1629
        %v1663 = vpack.c.b16 %v1632, %v1631
        %v1664 = vpack.c.b16 %v1634, %v1633
        %v1665 = vpack.c.b16 %v1636, %v1635
        %v1666 = vpack.c.b16 %v1638, %v1637
        %vm1694 = vcmask 465920
        %v1696 = vsel %vm1694, %v1138, 0
        %v1699 = vsel %vm1694, %v1142, 0
        %v1702 = vsel %vm1694, %v1146, 0
        %v1705 = vsel %vm1694, %v1150, 0
        %v1708 = vsel %vm1694, %v1154, 0
        %v1711 = vsel %vm1694, %v1158, 0
        %v1714 = vsel %vm1694, %v1162, 0
        %v1717 = vsel %vm1694, %v1166, 0
        %v1720 = vsel %vm1694, %v1170, 0
        %v1723 = vsel %vm1694, %v1174, 0
        %v1726 = vsel %vm1694, %v1178, 0
        %v1729 = vsel %vm1694, %v1182, 0
        %v1732 = vsel %vm1694, %v1186, 0
        %v1735 = vsel %vm1694, %v1190, 0
        %v1738 = vsel %vm1694, %v1194, 0
        %v1741 = vsel %vm1694, %v1198, 0
        %v1744 = vsel %vm1694, %v1202, 0
        %v1747 = vsel %vm1694, %v1206, 0
        %v1750 = vsel %vm1694, %v1210, 0
        %v1753 = vsel %vm1694, %v1214, 0
        %v1756 = vsel %vm1694, %v1218, 0
        %v1759 = vsel %vm1694, %v1222, 0
        %v1762 = vsel %vm1694, %v1226, 0
        %v1765 = vsel %vm1694, %v1230, 0
        %v1768 = vsel %vm1694, %v1234, 0
        %v1771 = vsel %vm1694, %v1238, 0
        %v1774 = vsel %vm1694, %v1242, 0
        %v1777 = vsel %vm1694, %v1246, 0
        %v1780 = vsel %vm1694, %v1250, 0
        %v1783 = vsel %vm1694, %v1254, 0
        %v1786 = vsel %vm1694, %v1258, 0
        %v1789 = vsel %vm1694, %v1262, 0
        %v1792 = vsel %vm1694, %v1266, 0
        %v1795 = vsel %vm1694, %v1270, 0
        %v1798 = vsel %vm1694, %v1274, 0
        %v1801 = vsel %vm1694, %v1278, 0
        %v1804 = vsel %vm1694, %v1282, 0
        %v1807 = vsel %vm1694, %v1286, 0
        %v1810 = vsel %vm1694, %v1290, 0
        %v1813 = vsel %vm1694, %v1294, 0
        %v1816 = vsel %vm1694, %v1298, 0
        %v1819 = vsel %vm1694, %v1302, 0
        %v1822 = vsel %vm1694, %v1306, 0
        %v1825 = vsel %vm1694, %v1310, 0
        %v1828 = vsel %vm1694, %v1314, 0
        %v1831 = vsel %vm1694, %v1318, 0
        %v1834 = vsel %vm1694, %v1322, 0
        %v1837 = vsel %vm1694, %v1326, 0
        %v1840 = vsel %vm1694, %v1330, 0
        %v1843 = vsel %vm1694, %v1334, 0
        %v1846 = vsel %vm1694, %v1338, 0
        %v1849 = vsel %vm1694, %v1342, 0
        %v1852 = vsel %vm1694, %v1346, 0
        %v1855 = vsel %vm1694, %v1350, 0
        %v1858 = vsel %vm1694, %v1354, 0
        %v1861 = vsel %vm1694, %v1358, 0
        %vm1863 = vcmask 1043456
        %vm1864 = vcmask 1044480
        %v1865 = vsel %vm1863, 4294967295, 65535
        %v1866 = vsel %vm1864, %v1865, 0
        %v1868 = vand.u32 %v1666, %v1866
        %1870 = vmatprep.subr.bf16.mxu0 0
        %1871 = vmatpush1.bf16.msra.mxu0 %v1639
        %1872 = vmatprep.subr.bf16.mxu0 0
        %1873 = vmatpush1.bf16.msra.mxu0 %v1640
        %1874 = vmatprep.subr.bf16.mxu0 0
        %1875 = vmatpush1.bf16.msra.mxu0 %v1641
        %1876 = vmatprep.subr.bf16.mxu0 0
        %1877 = vmatpush1.bf16.msra.mxu0 %v1642
        %1878 = vmatprep.subr.bf16.mxu0 0
        %1879 = vmatpush1.bf16.msra.mxu0 %v1643
        %1880 = vmatprep.subr.bf16.mxu0 0
        %1881 = vmatpush1.bf16.msra.mxu0 %v1644
        %1882 = vmatprep.subr.bf16.mxu0 0
        %1883 = vmatpush1.bf16.msra.mxu0 %v1645
        %1884 = vmatprep.subr.bf16.mxu0 0
        %1885 = vmatpush1.bf16.msra.mxu0 %v1646
        %1886 = vmatprep.subr.bf16.mxu0 0
        %1887 = vmatpush1.bf16.msra.mxu0 %v1647
        %1888 = vmatprep.subr.bf16.mxu0 0
        %1889 = vmatpush1.bf16.msra.mxu0 %v1648
        %1890 = vmatprep.subr.bf16.mxu0 0
        %1891 = vmatpush1.bf16.msra.mxu0 %v1649
        %1892 = vmatprep.subr.bf16.mxu0 0
        %1893 = vmatpush1.bf16.msra.mxu0 %v1650
        %1894 = vmatprep.subr.bf16.mxu0 0
        %1895 = vmatpush1.bf16.msra.mxu0 %v1651
        %1896 = vmatprep.subr.bf16.mxu0 0
        %1897 = vmatpush1.bf16.msra.mxu0 %v1652
        %1898 = vmatprep.subr.bf16.mxu0 0
        %1899 = vmatpush1.bf16.msra.mxu0 %v1653
        %1900 = vmatprep.subr.bf16.mxu0 0
        %1901 = vmatpush1.bf16.msra.mxu0 %v1654
        %1902 = vmatprep.mubr.bf16.mxu0 %v1136
        %1903 = vmatmul.mubr.bf16.gmra.mrb[0].mxu0 %v1135
        %v1904 = vpop.f32.mrb[0].mxu0
        %v1905 = vadd.f32 %v461, %v1904
        %v1906 = vpop.f32.mrb[0].mxu0
        %v1907 = vpop.f32.mrb[0].mxu0
        %v1908 = vadd.f32 %v461, %v1907
        %v1909 = vpop.f32.mrb[0].mxu0
        %1910 = vmatprep.mubr.bf16.mxu0 %v1140
        %1911 = vmatmul.mubr.bf16.gmra.mrb[0].mxu0 %v1139
        %v1912 = vpop.f32.mrb[0].mxu0
        %v1913 = vadd.f32 %v461, %v1912
        %v1914 = vpop.f32.mrb[0].mxu0
        %v1915 = vpop.f32.mrb[0].mxu0
        %v1916 = vadd.f32 %v461, %v1915
        %v1917 = vpop.f32.mrb[0].mxu0
        %1918 = vmatprep.mubr.bf16.mxu0 %v1144
        %1919 = vmatmul.mubr.bf16.gmra.mrb[0].mxu0 %v1143
        %v1920 = vpop.f32.mrb[0].mxu0
        %v1921 = vadd.f32 %v461, %v1920
        %v1922 = vpop.f32.mrb[0].mxu0
        %v1923 = vpop.f32.mrb[0].mxu0
        %v1924 = vadd.f32 %v461, %v1923
        %v1925 = vpop.f32.mrb[0].mxu0
        %1926 = vmatprep.mubr.bf16.mxu0 %v1148
        %1927 = vmatmul.mubr.bf16.gmra.mrb[0].mxu0 %v1147
        %v1928 = vpop.f32.mrb[0].mxu0
        %v1929 = vadd.f32 %v461, %v1928
        %v1930 = vpop.f32.mrb[0].mxu0
        %v1931 = vpop.f32.mrb[0].mxu0
        %v1932 = vadd.f32 %v461, %v1931
        %v1933 = vpop.f32.mrb[0].mxu0
        %1934 = vmatprep.mubr.bf16.mxu0 %v1152
        %1935 = vmatmul.mubr.bf16.gmra.mrb[0].mxu0 %v1151
        %v1936 = vpop.f32.mrb[0].mxu0
        %v1937 = vadd.f32 %v461, %v1936
        %v1938 = vpop.f32.mrb[0].mxu0
        %v1939 = vpop.f32.mrb[0].mxu0
        %v1940 = vadd.f32 %v461, %v1939
        %v1941 = vpop.f32.mrb[0].mxu0
        %1942 = vmatprep.mubr.bf16.mxu0 %v1156
        %1943 = vmatmul.mubr.bf16.gmra.mrb[0].mxu0 %v1155
        %v1944 = vpop.f32.mrb[0].mxu0
        %v1945 = vadd.f32 %v461, %v1944
        %v1946 = vpop.f32.mrb[0].mxu0
        %v1947 = vpop.f32.mrb[0].mxu0
        %v1948 = vadd.f32 %v461, %v1947
        %v1949 = vpop.f32.mrb[0].mxu0
        %1950 = vmatprep.mubr.bf16.mxu0 %v1160
        %1951 = vmatmul.mubr.bf16.gmra.mrb[0].mxu0 %v1159
        %v1952 = vpop.f32.mrb[0].mxu0
        %v1953 = vadd.f32 %v461, %v1952
        %v1954 = vpop.f32.mrb[0].mxu0
        %v1955 = vpop.f32.mrb[0].mxu0
        %v1956 = vadd.f32 %v461, %v1955
        %v1957 = vpop.f32.mrb[0].mxu0
        %1958 = vmatprep.mubr.bf16.mxu0 %v1164
        %1959 = vmatmul.mubr.bf16.gmra.mrb[0].mxu0 %v1163
        %v1960 = vpop.f32.mrb[0].mxu0
        %v1961 = vadd.f32 %v461, %v1960
        %v1962 = vpop.f32.mrb[0].mxu0
        %v1963 = vpop.f32.mrb[0].mxu0
        %v1964 = vadd.f32 %v461, %v1963
        %v1965 = vpop.f32.mrb[0].mxu0
        %1966 = vmatprep.mubr.bf16.mxu0 %v1168
        %1967 = vmatmul.mubr.bf16.gmra.mrb[0].mxu0 %v1167
        %v1968 = vpop.f32.mrb[0].mxu0
        %v1969 = vadd.f32 %v461, %v1968
        %v1970 = vpop.f32.mrb[0].mxu0
        %v1971 = vpop.f32.mrb[0].mxu0
        %v1972 = vadd.f32 %v461, %v1971
        %v1973 = vpop.f32.mrb[0].mxu0
        %1974 = vmatprep.mubr.bf16.mxu0 %v1172
        %1975 = vmatmul.mubr.bf16.gmra.mrb[0].mxu0 %v1171
        %v1976 = vpop.f32.mrb[0].mxu0
        %v1977 = vadd.f32 %v461, %v1976
        %v1978 = vpop.f32.mrb[0].mxu0
        %v1979 = vpop.f32.mrb[0].mxu0
        %v1980 = vadd.f32 %v461, %v1979
        %v1981 = vpop.f32.mrb[0].mxu0
        %1982 = vmatprep.mubr.bf16.mxu0 %v1176
        %1983 = vmatmul.mubr.bf16.gmra.mrb[0].mxu0 %v1175
        %v1984 = vpop.f32.mrb[0].mxu0
        %v1985 = vadd.f32 %v461, %v1984
        %v1986 = vpop.f32.mrb[0].mxu0
        %v1987 = vpop.f32.mrb[0].mxu0
        %v1988 = vadd.f32 %v461, %v1987
        %v1989 = vpop.f32.mrb[0].mxu0
        %1990 = vmatprep.mubr.bf16.mxu0 %v1180
        %1991 = vmatmul.mubr.bf16.gmra.mrb[0].mxu0 %v1179
        %v1992 = vpop.f32.mrb[0].mxu0
        %v1993 = vadd.f32 %v461, %v1992
        %v1994 = vpop.f32.mrb[0].mxu0
        %v1995 = vpop.f32.mrb[0].mxu0
        %v1996 = vadd.f32 %v461, %v1995
        %v1997 = vpop.f32.mrb[0].mxu0
        %1998 = vmatprep.mubr.bf16.mxu0 %v1184
        %1999 = vmatmul.mubr.bf16.gmra.mrb[0].mxu0 %v1183
        %v2000 = vpop.f32.mrb[0].mxu0
        %v2001 = vadd.f32 %v461, %v2000
        %v2002 = vpop.f32.mrb[0].mxu0
        %v2003 = vpop.f32.mrb[0].mxu0
        %v2004 = vadd.f32 %v461, %v2003
        %v2005 = vpop.f32.mrb[0].mxu0
        %2006 = vmatprep.mubr.bf16.mxu0 %v1188
        %2007 = vmatmul.mubr.bf16.gmra.mrb[0].mxu0 %v1187
        %v2008 = vpop.f32.mrb[0].mxu0
        %v2009 = vadd.f32 %v461, %v2008
        %v2010 = vpop.f32.mrb[0].mxu0
        %v2011 = vpop.f32.mrb[0].mxu0
        %v2012 = vadd.f32 %v461, %v2011
        %v2013 = vpop.f32.mrb[0].mxu0
        %2014 = vmatprep.mubr.bf16.mxu0 %v1192
        %2015 = vmatmul.mubr.bf16.gmra.mrb[0].mxu0 %v1191
        %v2016 = vpop.f32.mrb[0].mxu0
        %v2017 = vadd.f32 %v461, %v2016
        %v2018 = vpop.f32.mrb[0].mxu0
        %v2019 = vpop.f32.mrb[0].mxu0
        %v2020 = vadd.f32 %v461, %v2019
        %v2021 = vpop.f32.mrb[0].mxu0
        %2022 = vmatprep.mubr.bf16.mxu0 %v1196
        %2023 = vmatmul.mubr.bf16.gmra.mrb[0].mxu0 %v1195
        %v2024 = vpop.f32.mrb[0].mxu0
        %v2025 = vadd.f32 %v461, %v2024
        %v2026 = vpop.f32.mrb[0].mxu0
        %v2027 = vpop.f32.mrb[0].mxu0
        %v2028 = vadd.f32 %v461, %v2027
        %v2029 = vpop.f32.mrb[0].mxu0
        %2030 = vmatprep.mubr.bf16.mxu0 %v1200
        %2031 = vmatmul.mubr.bf16.gmra.mrb[0].mxu0 %v1199
        %v2032 = vpop.f32.mrb[0].mxu0
        %v2033 = vadd.f32 %v461, %v2032
        %v2034 = vpop.f32.mrb[0].mxu0
        %v2035 = vpop.f32.mrb[0].mxu0
        %v2036 = vadd.f32 %v461, %v2035
        %v2037 = vpop.f32.mrb[0].mxu0
        %2038 = vmatprep.mubr.bf16.mxu0 %v1204
        %2039 = vmatmul.mubr.bf16.gmra.mrb[0].mxu0 %v1203
        %v2040 = vpop.f32.mrb[0].mxu0
        %v2041 = vadd.f32 %v461, %v2040
        %v2042 = vpop.f32.mrb[0].mxu0
        %v2043 = vpop.f32.mrb[0].mxu0
        %v2044 = vadd.f32 %v461, %v2043
        %v2045 = vpop.f32.mrb[0].mxu0
        %2046 = vmatprep.mubr.bf16.mxu0 %v1208
        %2047 = vmatmul.mubr.bf16.gmra.mrb[0].mxu0 %v1207
        %v2048 = vpop.f32.mrb[0].mxu0
        %v2049 = vadd.f32 %v461, %v2048
        %v2050 = vpop.f32.mrb[0].mxu0
        %v2051 = vpop.f32.mrb[0].mxu0
        %v2052 = vadd.f32 %v461, %v2051
        %v2053 = vpop.f32.mrb[0].mxu0
        %2054 = vmatprep.mubr.bf16.mxu0 %v1212
        %2055 = vmatmul.mubr.bf16.gmra.mrb[0].mxu0 %v1211
        %v2056 = vpop.f32.mrb[0].mxu0
        %v2057 = vadd.f32 %v461, %v2056
        %v2058 = vpop.f32.mrb[0].mxu0
        %v2059 = vpop.f32.mrb[0].mxu0
        %v2060 = vadd.f32 %v461, %v2059
        %v2061 = vpop.f32.mrb[0].mxu0
        %2062 = vmatprep.mubr.bf16.mxu0 %v1216
        %2063 = vmatmul.mubr.bf16.gmra.mrb[0].mxu0 %v1215
        %v2064 = vpop.f32.mrb[0].mxu0
        %v2065 = vadd.f32 %v461, %v2064
        %v2066 = vpop.f32.mrb[0].mxu0
        %v2067 = vpop.f32.mrb[0].mxu0
        %v2068 = vadd.f32 %v461, %v2067
        %v2069 = vpop.f32.mrb[0].mxu0
        %2070 = vmatprep.mubr.bf16.mxu0 %v1220
        %2071 = vmatmul.mubr.bf16.gmra.mrb[0].mxu0 %v1219
        %v2072 = vpop.f32.mrb[0].mxu0
        %v2073 = vadd.f32 %v461, %v2072
        %v2074 = vpop.f32.mrb[0].mxu0
        %v2075 = vpop.f32.mrb[0].mxu0
        %v2076 = vadd.f32 %v461, %v2075
        %v2077 = vpop.f32.mrb[0].mxu0
        %2078 = vmatprep.mubr.bf16.mxu0 %v1224
        %2079 = vmatmul.mubr.bf16.gmra.mrb[0].mxu0 %v1223
        %v2080 = vpop.f32.mrb[0].mxu0
        %v2081 = vadd.f32 %v461, %v2080
        %v2082 = vpop.f32.mrb[0].mxu0
        %v2083 = vpop.f32.mrb[0].mxu0
        %v2084 = vadd.f32 %v461, %v2083
        %v2085 = vpop.f32.mrb[0].mxu0
        %2086 = vmatprep.mubr.bf16.mxu0 %v1228
        %2087 = vmatmul.mubr.bf16.gmra.mrb[0].mxu0 %v1227
        %v2088 = vpop.f32.mrb[0].mxu0
        %v2089 = vadd.f32 %v461, %v2088
        %v2090 = vpop.f32.mrb[0].mxu0
        %v2091 = vpop.f32.mrb[0].mxu0
        %v2092 = vadd.f32 %v461, %v2091
        %v2093 = vpop.f32.mrb[0].mxu0
        %2094 = vmatprep.mubr.bf16.mxu0 %v1232
        %2095 = vmatmul.mubr.bf16.gmra.mrb[0].mxu0 %v1231
        %v2096 = vpop.f32.mrb[0].mxu0
        %v2097 = vadd.f32 %v461, %v2096
        %v2098 = vpop.f32.mrb[0].mxu0
        %v2099 = vpop.f32.mrb[0].mxu0
        %v2100 = vadd.f32 %v461, %v2099
        %v2101 = vpop.f32.mrb[0].mxu0
        %2102 = vmatprep.mubr.bf16.mxu0 %v1236
        %2103 = vmatmul.mubr.bf16.gmra.mrb[0].mxu0 %v1235
        %v2104 = vpop.f32.mrb[0].mxu0
        %v2105 = vadd.f32 %v461, %v2104
        %v2106 = vpop.f32.mrb[0].mxu0
        %v2107 = vpop.f32.mrb[0].mxu0
        %v2108 = vadd.f32 %v461, %v2107
        %v2109 = vpop.f32.mrb[0].mxu0
        %2110 = vmatprep.mubr.bf16.mxu0 %v1240
        %2111 = vmatmul.mubr.bf16.gmra.mrb[0].mxu0 %v1239
        %v2112 = vpop.f32.mrb[0].mxu0
        %v2113 = vadd.f32 %v461, %v2112
        %v2114 = vpop.f32.mrb[0].mxu0
        %v2115 = vpop.f32.mrb[0].mxu0
        %v2116 = vadd.f32 %v461, %v2115
        %v2117 = vpop.f32.mrb[0].mxu0
        %2118 = vmatprep.mubr.bf16.mxu0 %v1244
        %2119 = vmatmul.mubr.bf16.gmra.mrb[0].mxu0 %v1243
        %v2120 = vpop.f32.mrb[0].mxu0
        %v2121 = vadd.f32 %v461, %v2120
        %v2122 = vpop.f32.mrb[0].mxu0
        %v2123 = vpop.f32.mrb[0].mxu0
        %v2124 = vadd.f32 %v461, %v2123
        %v2125 = vpop.f32.mrb[0].mxu0
        %2126 = vmatprep.mubr.bf16.mxu0 %v1248
        %2127 = vmatmul.mubr.bf16.gmra.mrb[0].mxu0 %v1247
        %v2128 = vpop.f32.mrb[0].mxu0
        %v2129 = vadd.f32 %v461, %v2128
        %v2130 = vpop.f32.mrb[0].mxu0
        %v2131 = vpop.f32.mrb[0].mxu0
        %v2132 = vadd.f32 %v461, %v2131
        %v2133 = vpop.f32.mrb[0].mxu0
        %2134 = vmatprep.mubr.bf16.mxu0 %v1252
        %2135 = vmatmul.mubr.bf16.gmra.mrb[0].mxu0 %v1251
        %v2136 = vpop.f32.mrb[0].mxu0
        %v2137 = vadd.f32 %v461, %v2136
        %v2138 = vpop.f32.mrb[0].mxu0
        %v2139 = vpop.f32.mrb[0].mxu0
        %v2140 = vadd.f32 %v461, %v2139
        %v2141 = vpop.f32.mrb[0].mxu0
        %2142 = vmatprep.mubr.bf16.mxu0 %v1256
        %2143 = vmatmul.mubr.bf16.gmra.mrb[0].mxu0 %v1255
        %v2144 = vpop.f32.mrb[0].mxu0
        %v2145 = vadd.f32 %v461, %v2144
        %v2146 = vpop.f32.mrb[0].mxu0
        %v2147 = vpop.f32.mrb[0].mxu0
        %v2148 = vadd.f32 %v461, %v2147
        %v2149 = vpop.f32.mrb[0].mxu0
        %2150 = vmatprep.mubr.bf16.mxu0 %v1260
        %2151 = vmatmul.mubr.bf16.gmra.mrb[0].mxu0 %v1259
        %v2152 = vpop.f32.mrb[0].mxu0
        %v2153 = vadd.f32 %v461, %v2152
        %v2154 = vpop.f32.mrb[0].mxu0
        %v2155 = vpop.f32.mrb[0].mxu0
        %v2156 = vadd.f32 %v461, %v2155
        %v2157 = vpop.f32.mrb[0].mxu0
        %2158 = vmatprep.mubr.bf16.mxu0 %v1264
        %2159 = vmatmul.mubr.bf16.gmra.mrb[0].mxu0 %v1263
        %v2160 = vpop.f32.mrb[0].mxu0
        %v2161 = vadd.f32 %v461, %v2160
        %v2162 = vpop.f32.mrb[0].mxu0
        %v2163 = vpop.f32.mrb[0].mxu0
        %v2164 = vadd.f32 %v461, %v2163
        %v2165 = vpop.f32.mrb[0].mxu0
        %2166 = vmatprep.mubr.bf16.mxu0 %v1268
        %2167 = vmatmul.mubr.bf16.gmra.mrb[0].mxu0 %v1267
        %v2168 = vpop.f32.mrb[0].mxu0
        %v2169 = vadd.f32 %v461, %v2168
        %v2170 = vpop.f32.mrb[0].mxu0
        %v2171 = vpop.f32.mrb[0].mxu0
        %v2172 = vadd.f32 %v461, %v2171
        %v2173 = vpop.f32.mrb[0].mxu0
        %2174 = vmatprep.mubr.bf16.mxu0 %v1272
        %2175 = vmatmul.mubr.bf16.gmra.mrb[0].mxu0 %v1271
        %v2176 = vpop.f32.mrb[0].mxu0
        %v2177 = vadd.f32 %v461, %v2176
        %v2178 = vpop.f32.mrb[0].mxu0
        %v2179 = vpop.f32.mrb[0].mxu0
        %v2180 = vadd.f32 %v461, %v2179
        %v2181 = vpop.f32.mrb[0].mxu0
        %2182 = vmatprep.mubr.bf16.mxu0 %v1276
        %2183 = vmatmul.mubr.bf16.gmra.mrb[0].mxu0 %v1275
        %v2184 = vpop.f32.mrb[0].mxu0
        %v2185 = vadd.f32 %v461, %v2184
        %v2186 = vpop.f32.mrb[0].mxu0
        %v2187 = vpop.f32.mrb[0].mxu0
        %v2188 = vadd.f32 %v461, %v2187
        %v2189 = vpop.f32.mrb[0].mxu0
        %2190 = vmatprep.mubr.bf16.mxu0 %v1280
        %2191 = vmatmul.mubr.bf16.gmra.mrb[0].mxu0 %v1279
        %v2192 = vpop.f32.mrb[0].mxu0
        %v2193 = vadd.f32 %v461, %v2192
        %v2194 = vpop.f32.mrb[0].mxu0
        %v2195 = vpop.f32.mrb[0].mxu0
        %v2196 = vadd.f32 %v461, %v2195
        %v2197 = vpop.f32.mrb[0].mxu0
        %2198 = vmatprep.mubr.bf16.mxu0 %v1284
        %2199 = vmatmul.mubr.bf16.gmra.mrb[0].mxu0 %v1283
        %v2200 = vpop.f32.mrb[0].mxu0
        %v2201 = vadd.f32 %v461, %v2200
        %v2202 = vpop.f32.mrb[0].mxu0
        %v2203 = vpop.f32.mrb[0].mxu0
        %v2204 = vadd.f32 %v461, %v2203
        %v2205 = vpop.f32.mrb[0].mxu0
        %2206 = vmatprep.mubr.bf16.mxu0 %v1288
        %2207 = vmatmul.mubr.bf16.gmra.mrb[0].mxu0 %v1287
        %v2208 = vpop.f32.mrb[0].mxu0
        %v2209 = vadd.f32 %v461, %v2208
        %v2210 = vpop.f32.mrb[0].mxu0
        %v2211 = vpop.f32.mrb[0].mxu0
        %v2212 = vadd.f32 %v461, %v2211
        %v2213 = vpop.f32.mrb[0].mxu0
        %2214 = vmatprep.mubr.bf16.mxu0 %v1292
        %2215 = vmatmul.mubr.bf16.gmra.mrb[0].mxu0 %v1291
        %v2216 = vpop.f32.mrb[0].mxu0
        %v2217 = vadd.f32 %v461, %v2216
        %v2218 = vpop.f32.mrb[0].mxu0
        %v2219 = vpop.f32.mrb[0].mxu0
        %v2220 = vadd.f32 %v461, %v2219
        %v2221 = vpop.f32.mrb[0].mxu0
        %2222 = vmatprep.mubr.bf16.mxu0 %v1296
        %2223 = vmatmul.mubr.bf16.gmra.mrb[0].mxu0 %v1295
        %v2224 = vpop.f32.mrb[0].mxu0
        %v2225 = vadd.f32 %v461, %v2224
        %v2226 = vpop.f32.mrb[0].mxu0
        %v2227 = vpop.f32.mrb[0].mxu0
        %v2228 = vadd.f32 %v461, %v2227
        %v2229 = vpop.f32.mrb[0].mxu0
        %2230 = vmatprep.mubr.bf16.mxu0 %v1300
        %2231 = vmatmul.mubr.bf16.gmra.mrb[0].mxu0 %v1299
        %v2232 = vpop.f32.mrb[0].mxu0
        %v2233 = vadd.f32 %v461, %v2232
        %v2234 = vpop.f32.mrb[0].mxu0
        %v2235 = vpop.f32.mrb[0].mxu0
        %v2236 = vadd.f32 %v461, %v2235
        %v2237 = vpop.f32.mrb[0].mxu0
        %2238 = vmatprep.mubr.bf16.mxu0 %v1304
        %2239 = vmatmul.mubr.bf16.gmra.mrb[0].mxu0 %v1303
        %v2240 = vpop.f32.mrb[0].mxu0
        %v2241 = vadd.f32 %v461, %v2240
        %v2242 = vpop.f32.mrb[0].mxu0
        %v2243 = vpop.f32.mrb[0].mxu0
        %v2244 = vadd.f32 %v461, %v2243
        %v2245 = vpop.f32.mrb[0].mxu0
        %2246 = vmatprep.mubr.bf16.mxu0 %v1308
        %2247 = vmatmul.mubr.bf16.gmra.mrb[0].mxu0 %v1307
        %v2248 = vpop.f32.mrb[0].mxu0
        %v2249 = vadd.f32 %v461, %v2248
        %v2250 = vpop.f32.mrb[0].mxu0
        %v2251 = vpop.f32.mrb[0].mxu0
        %v2252 = vadd.f32 %v461, %v2251
        %v2253 = vpop.f32.mrb[0].mxu0
        %2254 = vmatprep.mubr.bf16.mxu0 %v1312
        %2255 = vmatmul.mubr.bf16.gmra.mrb[0].mxu0 %v1311
        %v2256 = vpop.f32.mrb[0].mxu0
        %v2257 = vadd.f32 %v461, %v2256
        %v2258 = vpop.f32.mrb[0].mxu0
        %v2259 = vpop.f32.mrb[0].mxu0
        %v2260 = vadd.f32 %v461, %v2259
        %v2261 = vpop.f32.mrb[0].mxu0
        %2262 = vmatprep.mubr.bf16.mxu0 %v1316
        %2263 = vmatmul.mubr.bf16.gmra.mrb[0].mxu0 %v1315
        %v2264 = vpop.f32.mrb[0].mxu0
        %v2265 = vadd.f32 %v461, %v2264
        %v2266 = vpop.f32.mrb[0].mxu0
        %v2267 = vpop.f32.mrb[0].mxu0
        %v2268 = vadd.f32 %v461, %v2267
        %v2269 = vpop.f32.mrb[0].mxu0
        %2270 = vmatprep.mubr.bf16.mxu0 %v1320
        %2271 = vmatmul.mubr.bf16.gmra.mrb[0].mxu0 %v1319
        %v2272 = vpop.f32.mrb[0].mxu0
        %v2273 = vadd.f32 %v461, %v2272
        %v2274 = vpop.f32.mrb[0].mxu0
        %v2275 = vpop.f32.mrb[0].mxu0
        %v2276 = vadd.f32 %v461, %v2275
        %v2277 = vpop.f32.mrb[0].mxu0
        %2278 = vmatprep.mubr.bf16.mxu0 %v1324
        %2279 = vmatmul.mubr.bf16.gmra.mrb[0].mxu0 %v1323
        %v2280 = vpop.f32.mrb[0].mxu0
        %v2281 = vadd.f32 %v461, %v2280
        %v2282 = vpop.f32.mrb[0].mxu0
        %v2283 = vpop.f32.mrb[0].mxu0
        %v2284 = vadd.f32 %v461, %v2283
        %v2285 = vpop.f32.mrb[0].mxu0
        %2286 = vmatprep.mubr.bf16.mxu0 %v1328
        %2287 = vmatmul.mubr.bf16.gmra.mrb[0].mxu0 %v1327
        %v2288 = vpop.f32.mrb[0].mxu0
        %v2289 = vadd.f32 %v461, %v2288
        %v2290 = vpop.f32.mrb[0].mxu0
        %v2291 = vpop.f32.mrb[0].mxu0
        %v2292 = vadd.f32 %v461, %v2291
        %v2293 = vpop.f32.mrb[0].mxu0
        %2294 = vmatprep.mubr.bf16.mxu0 %v1332
        %2295 = vmatmul.mubr.bf16.gmra.mrb[0].mxu0 %v1331
        %v2296 = vpop.f32.mrb[0].mxu0
        %v2297 = vadd.f32 %v461, %v2296
        %v2298 = vpop.f32.mrb[0].mxu0
        %v2299 = vpop.f32.mrb[0].mxu0
        %v2300 = vadd.f32 %v461, %v2299
        %v2301 = vpop.f32.mrb[0].mxu0
        %2302 = vmatprep.mubr.bf16.mxu0 %v1336
        %2303 = vmatmul.mubr.bf16.gmra.mrb[0].mxu0 %v1335
        %v2304 = vpop.f32.mrb[0].mxu0
        %v2305 = vadd.f32 %v461, %v2304
        %v2306 = vpop.f32.mrb[0].mxu0
        %v2307 = vpop.f32.mrb[0].mxu0
        %v2308 = vadd.f32 %v461, %v2307
        %v2309 = vpop.f32.mrb[0].mxu0
        %2310 = vmatprep.mubr.bf16.mxu0 %v1340
        %2311 = vmatmul.mubr.bf16.gmra.mrb[0].mxu0 %v1339
        %v2312 = vpop.f32.mrb[0].mxu0
        %v2313 = vadd.f32 %v461, %v2312
        %v2314 = vpop.f32.mrb[0].mxu0
        %v2315 = vpop.f32.mrb[0].mxu0
        %v2316 = vadd.f32 %v461, %v2315
        %v2317 = vpop.f32.mrb[0].mxu0
        %2318 = vmatprep.mubr.bf16.mxu0 %v1344
        %2319 = vmatmul.mubr.bf16.gmra.mrb[0].mxu0 %v1343
        %v2320 = vpop.f32.mrb[0].mxu0
        %v2321 = vadd.f32 %v461, %v2320
        %v2322 = vpop.f32.mrb[0].mxu0
        %v2323 = vpop.f32.mrb[0].mxu0
        %v2324 = vadd.f32 %v461, %v2323
        %v2325 = vpop.f32.mrb[0].mxu0
        %2326 = vmatprep.mubr.bf16.mxu0 %v1348
        %2327 = vmatmul.mubr.bf16.gmra.mrb[0].mxu0 %v1347
        %v2328 = vpop.f32.mrb[0].mxu0
        %v2329 = vadd.f32 %v461, %v2328
        %v2330 = vpop.f32.mrb[0].mxu0
        %v2331 = vpop.f32.mrb[0].mxu0
        %v2332 = vadd.f32 %v461, %v2331
        %v2333 = vpop.f32.mrb[0].mxu0
        %2334 = vmatprep.mubr.bf16.mxu0 %v1352
        %2335 = vmatmul.mubr.bf16.gmra.mrb[0].mxu0 %v1351
        %v2336 = vpop.f32.mrb[0].mxu0
        %v2337 = vadd.f32 %v461, %v2336
        %v2338 = vpop.f32.mrb[0].mxu0
        %v2339 = vpop.f32.mrb[0].mxu0
        %v2340 = vadd.f32 %v461, %v2339
        %v2341 = vpop.f32.mrb[0].mxu0
        %2342 = vmatprep.mubr.bf16.mxu0 %v1356
        %2343 = vmatmul.mubr.bf16.gmra.mrb[0].mxu0 %v1355
        %v2344 = vpop.f32.mrb[0].mxu0
        %v2345 = vadd.f32 %v461, %v2344
        %v2346 = vpop.f32.mrb[0].mxu0
        %v2347 = vpop.f32.mrb[0].mxu0
        %v2348 = vadd.f32 %v461, %v2347
        %v2349 = vpop.f32.mrb[0].mxu0
        %2350 = vdwg.mxu0
        %2351 = vmatprep.subr.bf16.mxu0 0
        %2352 = vmatpush1.bf16.msra.mxu0 %v1655
        %2353 = vmatprep.subr.bf16.mxu0 0
        %2354 = vmatpush1.bf16.msra.mxu0 %v1656
        %2355 = vmatprep.subr.bf16.mxu0 0
        %2356 = vmatpush1.bf16.msra.mxu0 %v1657
        %2357 = vmatprep.subr.bf16.mxu0 0
        %2358 = vmatpush1.bf16.msra.mxu0 %v1658
        %2359 = vmatprep.subr.bf16.mxu0 0
        %2360 = vmatpush1.bf16.msra.mxu0 %v1659
        %2361 = vmatprep.subr.bf16.mxu0 0
        %2362 = vmatpush1.bf16.msra.mxu0 %v1660
        %2363 = vmatprep.subr.bf16.mxu0 0
        %2364 = vmatpush1.bf16.msra.mxu0 %v1661
        %2365 = vmatprep.subr.bf16.mxu0 0
        %2366 = vmatpush1.bf16.msra.mxu0 %v1662
        %2367 = vmatprep.subr.bf16.mxu0 0
        %2368 = vmatpush1.bf16.msra.mxu0 %v1663
        %2369 = vmatprep.subr.bf16.mxu0 0
        %2370 = vmatpush1.bf16.msra.mxu0 %v1664
        %2371 = vmatprep.subr.bf16.mxu0 0
        %2372 = vmatpush1.bf16.msra.mxu0 %v1665
        %2373 = vmatprep.subr.bf16.mxu0 0
        %2374 = vmatpush1.bf16.msra.mxu0 %v1868
        %2375 = vmatprep.subr.bf16.mxu0 0
        %2376 = vmatpush1.bf16.msra.mxu0 0
        %2377 = vmatprep.subr.bf16.mxu0 0
        %2378 = vmatpush1.bf16.msra.mxu0 0
        %2379 = vmatprep.subr.bf16.mxu0 0
        %2380 = vmatpush1.bf16.msra.mxu0 0
        %2381 = vmatprep.subr.bf16.mxu0 0
        %2382 = vmatpush1.bf16.msra.mxu0 0
        %2383 = vmatprep.mubr.bf16.mxu0 %v1696
        %2384 = vmatmul.mubr.bf16.gmra.mrb[0].mxu0 %v1137
        %v2385 = vpop.f32.mrb[0].mxu0
        %v2386 = vadd.f32 %v1905, %v2385
        %v2387 = vpop.f32.mrb[0].mxu0
        %v2388 = vpop.f32.mrb[0].mxu0
        %v2389 = vadd.f32 %v1908, %v2388
        %v2390 = vpop.f32.mrb[0].mxu0
        %2391 = vmatprep.mubr.bf16.mxu0 %v1699
        %2392 = vmatmul.mubr.bf16.gmra.mrb[0].mxu0 %v1141
        %v2393 = vpop.f32.mrb[0].mxu0
        %v2394 = vadd.f32 %v1913, %v2393
        %v2395 = vpop.f32.mrb[0].mxu0
        %v2396 = vpop.f32.mrb[0].mxu0
        %v2397 = vadd.f32 %v1916, %v2396
        %v2398 = vpop.f32.mrb[0].mxu0
        %2399 = vmatprep.mubr.bf16.mxu0 %v1702
        %2400 = vmatmul.mubr.bf16.gmra.mrb[0].mxu0 %v1145
        %v2401 = vpop.f32.mrb[0].mxu0
        %v2402 = vadd.f32 %v1921, %v2401
        %v2403 = vpop.f32.mrb[0].mxu0
        %v2404 = vpop.f32.mrb[0].mxu0
        %v2405 = vadd.f32 %v1924, %v2404
        %v2406 = vpop.f32.mrb[0].mxu0
        %2407 = vmatprep.mubr.bf16.mxu0 %v1705
        %2408 = vmatmul.mubr.bf16.gmra.mrb[0].mxu0 %v1149
        %v2409 = vpop.f32.mrb[0].mxu0
        %v2410 = vadd.f32 %v1929, %v2409
        %v2411 = vpop.f32.mrb[0].mxu0
        %v2412 = vpop.f32.mrb[0].mxu0
        %v2413 = vadd.f32 %v1932, %v2412
        %v2414 = vpop.f32.mrb[0].mxu0
        %2415 = vmatprep.mubr.bf16.mxu0 %v1708
        %2416 = vmatmul.mubr.bf16.gmra.mrb[0].mxu0 %v1153
        %v2417 = vpop.f32.mrb[0].mxu0
        %v2418 = vadd.f32 %v1937, %v2417
        %v2419 = vpop.f32.mrb[0].mxu0
        %v2420 = vpop.f32.mrb[0].mxu0
        %v2421 = vadd.f32 %v1940, %v2420
        %v2422 = vpop.f32.mrb[0].mxu0
        %2423 = vmatprep.mubr.bf16.mxu0 %v1711
        %2424 = vmatmul.mubr.bf16.gmra.mrb[0].mxu0 %v1157
        %v2425 = vpop.f32.mrb[0].mxu0
        %v2426 = vadd.f32 %v1945, %v2425
        %v2427 = vpop.f32.mrb[0].mxu0
        %v2428 = vpop.f32.mrb[0].mxu0
        %v2429 = vadd.f32 %v1948, %v2428
        %v2430 = vpop.f32.mrb[0].mxu0
        %2431 = vmatprep.mubr.bf16.mxu0 %v1714
        %2432 = vmatmul.mubr.bf16.gmra.mrb[0].mxu0 %v1161
        %v2433 = vpop.f32.mrb[0].mxu0
        %v2434 = vadd.f32 %v1953, %v2433
        %v2435 = vpop.f32.mrb[0].mxu0
        %v2436 = vpop.f32.mrb[0].mxu0
        %v2437 = vadd.f32 %v1956, %v2436
        %v2438 = vpop.f32.mrb[0].mxu0
        %2439 = vmatprep.mubr.bf16.mxu0 %v1717
        %2440 = vmatmul.mubr.bf16.gmra.mrb[0].mxu0 %v1165
        %v2441 = vpop.f32.mrb[0].mxu0
        %v2442 = vadd.f32 %v1961, %v2441
        %v2443 = vpop.f32.mrb[0].mxu0
        %v2444 = vpop.f32.mrb[0].mxu0
        %v2445 = vadd.f32 %v1964, %v2444
        %v2446 = vpop.f32.mrb[0].mxu0
        %2447 = vmatprep.mubr.bf16.mxu0 %v1720
        %2448 = vmatmul.mubr.bf16.gmra.mrb[0].mxu0 %v1169
        %v2449 = vpop.f32.mrb[0].mxu0
        %v2450 = vadd.f32 %v1969, %v2449
        %v2451 = vpop.f32.mrb[0].mxu0
        %v2452 = vpop.f32.mrb[0].mxu0
        %v2453 = vadd.f32 %v1972, %v2452
        %v2454 = vpop.f32.mrb[0].mxu0
        %2455 = vmatprep.mubr.bf16.mxu0 %v1723
        %2456 = vmatmul.mubr.bf16.gmra.mrb[0].mxu0 %v1173
        %v2457 = vpop.f32.mrb[0].mxu0
        %v2458 = vadd.f32 %v1977, %v2457
        %v2459 = vpop.f32.mrb[0].mxu0
        %v2460 = vpop.f32.mrb[0].mxu0
        %v2461 = vadd.f32 %v1980, %v2460
        %v2462 = vpop.f32.mrb[0].mxu0
        %2463 = vmatprep.mubr.bf16.mxu0 %v1726
        %2464 = vmatmul.mubr.bf16.gmra.mrb[0].mxu0 %v1177
        %v2465 = vpop.f32.mrb[0].mxu0
        %v2466 = vadd.f32 %v1985, %v2465
        %v2467 = vpop.f32.mrb[0].mxu0
        %v2468 = vpop.f32.mrb[0].mxu0
        %v2469 = vadd.f32 %v1988, %v2468
        %v2470 = vpop.f32.mrb[0].mxu0
        %2471 = vmatprep.mubr.bf16.mxu0 %v1729
        %2472 = vmatmul.mubr.bf16.gmra.mrb[0].mxu0 %v1181
        %v2473 = vpop.f32.mrb[0].mxu0
        %v2474 = vadd.f32 %v1993, %v2473
        %v2475 = vpop.f32.mrb[0].mxu0
        %v2476 = vpop.f32.mrb[0].mxu0
        %v2477 = vadd.f32 %v1996, %v2476
        %v2478 = vpop.f32.mrb[0].mxu0
        %2479 = vmatprep.mubr.bf16.mxu0 %v1732
        %2480 = vmatmul.mubr.bf16.gmra.mrb[0].mxu0 %v1185
        %v2481 = vpop.f32.mrb[0].mxu0
        %v2482 = vadd.f32 %v2001, %v2481
        %v2483 = vpop.f32.mrb[0].mxu0
        %v2484 = vpop.f32.mrb[0].mxu0
        %v2485 = vadd.f32 %v2004, %v2484
        %v2486 = vpop.f32.mrb[0].mxu0
        %2487 = vmatprep.mubr.bf16.mxu0 %v1735
        %2488 = vmatmul.mubr.bf16.gmra.mrb[0].mxu0 %v1189
        %v2489 = vpop.f32.mrb[0].mxu0
        %v2490 = vadd.f32 %v2009, %v2489
        %v2491 = vpop.f32.mrb[0].mxu0
        %v2492 = vpop.f32.mrb[0].mxu0
        %v2493 = vadd.f32 %v2012, %v2492
        %v2494 = vpop.f32.mrb[0].mxu0
        %2495 = vmatprep.mubr.bf16.mxu0 %v1738
        %2496 = vmatmul.mubr.bf16.gmra.mrb[0].mxu0 %v1193
        %v2497 = vpop.f32.mrb[0].mxu0
        %v2498 = vadd.f32 %v2017, %v2497
        %v2499 = vpop.f32.mrb[0].mxu0
        %v2500 = vpop.f32.mrb[0].mxu0
        %v2501 = vadd.f32 %v2020, %v2500
        %v2502 = vpop.f32.mrb[0].mxu0
        %2503 = vmatprep.mubr.bf16.mxu0 %v1741
        %2504 = vmatmul.mubr.bf16.gmra.mrb[0].mxu0 %v1197
        %v2505 = vpop.f32.mrb[0].mxu0
        %v2506 = vadd.f32 %v2025, %v2505
        %v2507 = vpop.f32.mrb[0].mxu0
        %v2508 = vpop.f32.mrb[0].mxu0
        %v2509 = vadd.f32 %v2028, %v2508
        %v2510 = vpop.f32.mrb[0].mxu0
        %2511 = vmatprep.mubr.bf16.mxu0 %v1744
        %2512 = vmatmul.mubr.bf16.gmra.mrb[0].mxu0 %v1201
        %v2513 = vpop.f32.mrb[0].mxu0
        %v2514 = vadd.f32 %v2033, %v2513
        %v2515 = vpop.f32.mrb[0].mxu0
        %v2516 = vpop.f32.mrb[0].mxu0
        %v2517 = vadd.f32 %v2036, %v2516
        %v2518 = vpop.f32.mrb[0].mxu0
        %2519 = vmatprep.mubr.bf16.mxu0 %v1747
        %2520 = vmatmul.mubr.bf16.gmra.mrb[0].mxu0 %v1205
        %v2521 = vpop.f32.mrb[0].mxu0
        %v2522 = vadd.f32 %v2041, %v2521
        %v2523 = vpop.f32.mrb[0].mxu0
        %v2524 = vpop.f32.mrb[0].mxu0
        %v2525 = vadd.f32 %v2044, %v2524
        %v2526 = vpop.f32.mrb[0].mxu0
        %2527 = vmatprep.mubr.bf16.mxu0 %v1750
        %2528 = vmatmul.mubr.bf16.gmra.mrb[0].mxu0 %v1209
        %v2529 = vpop.f32.mrb[0].mxu0
        %v2530 = vadd.f32 %v2049, %v2529
        %v2531 = vpop.f32.mrb[0].mxu0
        %v2532 = vpop.f32.mrb[0].mxu0
        %v2533 = vadd.f32 %v2052, %v2532
        %v2534 = vpop.f32.mrb[0].mxu0
        %2535 = vmatprep.mubr.bf16.mxu0 %v1753
        %2536 = vmatmul.mubr.bf16.gmra.mrb[0].mxu0 %v1213
        %v2537 = vpop.f32.mrb[0].mxu0
        %v2538 = vadd.f32 %v2057, %v2537
        %v2539 = vpop.f32.mrb[0].mxu0
        %v2540 = vpop.f32.mrb[0].mxu0
        %v2541 = vadd.f32 %v2060, %v2540
        %v2542 = vpop.f32.mrb[0].mxu0
        %2543 = vmatprep.mubr.bf16.mxu0 %v1756
        %2544 = vmatmul.mubr.bf16.gmra.mrb[0].mxu0 %v1217
        %v2545 = vpop.f32.mrb[0].mxu0
        %v2546 = vadd.f32 %v2065, %v2545
        %v2547 = vpop.f32.mrb[0].mxu0
        %v2548 = vpop.f32.mrb[0].mxu0
        %v2549 = vadd.f32 %v2068, %v2548
        %v2550 = vpop.f32.mrb[0].mxu0
        %2551 = vmatprep.mubr.bf16.mxu0 %v1759
        %2552 = vmatmul.mubr.bf16.gmra.mrb[0].mxu0 %v1221
        %v2553 = vpop.f32.mrb[0].mxu0
        %v2554 = vadd.f32 %v2073, %v2553
        %v2555 = vpop.f32.mrb[0].mxu0
        %v2556 = vpop.f32.mrb[0].mxu0
        %v2557 = vadd.f32 %v2076, %v2556
        %v2558 = vpop.f32.mrb[0].mxu0
        %2559 = vmatprep.mubr.bf16.mxu0 %v1762
        %2560 = vmatmul.mubr.bf16.gmra.mrb[0].mxu0 %v1225
        %v2561 = vpop.f32.mrb[0].mxu0
        %v2562 = vadd.f32 %v2081, %v2561
        %v2563 = vpop.f32.mrb[0].mxu0
        %v2564 = vpop.f32.mrb[0].mxu0
        %v2565 = vadd.f32 %v2084, %v2564
        %v2566 = vpop.f32.mrb[0].mxu0
        %2567 = vmatprep.mubr.bf16.mxu0 %v1765
        %2568 = vmatmul.mubr.bf16.gmra.mrb[0].mxu0 %v1229
        %v2569 = vpop.f32.mrb[0].mxu0
        %v2570 = vadd.f32 %v2089, %v2569
        %v2571 = vpop.f32.mrb[0].mxu0
        %v2572 = vpop.f32.mrb[0].mxu0
        %v2573 = vadd.f32 %v2092, %v2572
        %v2574 = vpop.f32.mrb[0].mxu0
        %2575 = vmatprep.mubr.bf16.mxu0 %v1768
        %2576 = vmatmul.mubr.bf16.gmra.mrb[0].mxu0 %v1233
        %v2577 = vpop.f32.mrb[0].mxu0
        %v2578 = vadd.f32 %v2097, %v2577
        %v2579 = vpop.f32.mrb[0].mxu0
        %v2580 = vpop.f32.mrb[0].mxu0
        %v2581 = vadd.f32 %v2100, %v2580
        %v2582 = vpop.f32.mrb[0].mxu0
        %2583 = vmatprep.mubr.bf16.mxu0 %v1771
        %2584 = vmatmul.mubr.bf16.gmra.mrb[0].mxu0 %v1237
        %v2585 = vpop.f32.mrb[0].mxu0
        %v2586 = vadd.f32 %v2105, %v2585
        %v2587 = vpop.f32.mrb[0].mxu0
        %v2588 = vpop.f32.mrb[0].mxu0
        %v2589 = vadd.f32 %v2108, %v2588
        %v2590 = vpop.f32.mrb[0].mxu0
        %2591 = vmatprep.mubr.bf16.mxu0 %v1774
        %2592 = vmatmul.mubr.bf16.gmra.mrb[0].mxu0 %v1241
        %v2593 = vpop.f32.mrb[0].mxu0
        %v2594 = vadd.f32 %v2113, %v2593
        %v2595 = vpop.f32.mrb[0].mxu0
        %v2596 = vpop.f32.mrb[0].mxu0
        %v2597 = vadd.f32 %v2116, %v2596
        %v2598 = vpop.f32.mrb[0].mxu0
        %2599 = vmatprep.mubr.bf16.mxu0 %v1777
        %2600 = vmatmul.mubr.bf16.gmra.mrb[0].mxu0 %v1245
        %v2601 = vpop.f32.mrb[0].mxu0
        %v2602 = vadd.f32 %v2121, %v2601
        %v2603 = vpop.f32.mrb[0].mxu0
        %v2604 = vpop.f32.mrb[0].mxu0
        %v2605 = vadd.f32 %v2124, %v2604
        %v2606 = vpop.f32.mrb[0].mxu0
        %2607 = vmatprep.mubr.bf16.mxu0 %v1780
        %2608 = vmatmul.mubr.bf16.gmra.mrb[0].mxu0 %v1249
        %v2609 = vpop.f32.mrb[0].mxu0
        %v2610 = vadd.f32 %v2129, %v2609
        %v2611 = vpop.f32.mrb[0].mxu0
        %v2612 = vpop.f32.mrb[0].mxu0
        %v2613 = vadd.f32 %v2132, %v2612
        %v2614 = vpop.f32.mrb[0].mxu0
        %2615 = vmatprep.mubr.bf16.mxu0 %v1783
        %2616 = vmatmul.mubr.bf16.gmra.mrb[0].mxu0 %v1253
        %v2617 = vpop.f32.mrb[0].mxu0
        %v2618 = vadd.f32 %v2137, %v2617
        %v2619 = vpop.f32.mrb[0].mxu0
        %v2620 = vpop.f32.mrb[0].mxu0
        %v2621 = vadd.f32 %v2140, %v2620
        %v2622 = vpop.f32.mrb[0].mxu0
        %2623 = vmatprep.mubr.bf16.mxu0 %v1786
        %2624 = vmatmul.mubr.bf16.gmra.mrb[0].mxu0 %v1257
        %v2625 = vpop.f32.mrb[0].mxu0
        %v2626 = vadd.f32 %v2145, %v2625
        %v2627 = vpop.f32.mrb[0].mxu0
        %v2628 = vpop.f32.mrb[0].mxu0
        %v2629 = vadd.f32 %v2148, %v2628
        %v2630 = vpop.f32.mrb[0].mxu0
        %2631 = vmatprep.mubr.bf16.mxu0 %v1789
        %2632 = vmatmul.mubr.bf16.gmra.mrb[0].mxu0 %v1261
        %v2633 = vpop.f32.mrb[0].mxu0
        %v2634 = vadd.f32 %v2153, %v2633
        %v2635 = vpop.f32.mrb[0].mxu0
        %v2636 = vpop.f32.mrb[0].mxu0
        %v2637 = vadd.f32 %v2156, %v2636
        %v2638 = vpop.f32.mrb[0].mxu0
        %2639 = vmatprep.mubr.bf16.mxu0 %v1792
        %2640 = vmatmul.mubr.bf16.gmra.mrb[0].mxu0 %v1265
        %v2641 = vpop.f32.mrb[0].mxu0
        %v2642 = vadd.f32 %v2161, %v2641
        %v2643 = vpop.f32.mrb[0].mxu0
        %v2644 = vpop.f32.mrb[0].mxu0
        %v2645 = vadd.f32 %v2164, %v2644
        %v2646 = vpop.f32.mrb[0].mxu0
        %2647 = vmatprep.mubr.bf16.mxu0 %v1795
        %2648 = vmatmul.mubr.bf16.gmra.mrb[0].mxu0 %v1269
        %v2649 = vpop.f32.mrb[0].mxu0
        %v2650 = vadd.f32 %v2169, %v2649
        %v2651 = vpop.f32.mrb[0].mxu0
        %v2652 = vpop.f32.mrb[0].mxu0
        %v2653 = vadd.f32 %v2172, %v2652
        %v2654 = vpop.f32.mrb[0].mxu0
        %2655 = vmatprep.mubr.bf16.mxu0 %v1798
        %2656 = vmatmul.mubr.bf16.gmra.mrb[0].mxu0 %v1273
        %v2657 = vpop.f32.mrb[0].mxu0
        %v2658 = vadd.f32 %v2177, %v2657
        %v2659 = vpop.f32.mrb[0].mxu0
        %v2660 = vpop.f32.mrb[0].mxu0
        %v2661 = vadd.f32 %v2180, %v2660
        %v2662 = vpop.f32.mrb[0].mxu0
        %2663 = vmatprep.mubr.bf16.mxu0 %v1801
        %2664 = vmatmul.mubr.bf16.gmra.mrb[0].mxu0 %v1277
        %v2665 = vpop.f32.mrb[0].mxu0
        %v2666 = vadd.f32 %v2185, %v2665
        %v2667 = vpop.f32.mrb[0].mxu0
        %v2668 = vpop.f32.mrb[0].mxu0
        %v2669 = vadd.f32 %v2188, %v2668
        %v2670 = vpop.f32.mrb[0].mxu0
        %2671 = vmatprep.mubr.bf16.mxu0 %v1804
        %2672 = vmatmul.mubr.bf16.gmra.mrb[0].mxu0 %v1281
        %v2673 = vpop.f32.mrb[0].mxu0
        %v2674 = vadd.f32 %v2193, %v2673
        %v2675 = vpop.f32.mrb[0].mxu0
        %v2676 = vpop.f32.mrb[0].mxu0
        %v2677 = vadd.f32 %v2196, %v2676
        %v2678 = vpop.f32.mrb[0].mxu0
        %2679 = vmatprep.mubr.bf16.mxu0 %v1807
        %2680 = vmatmul.mubr.bf16.gmra.mrb[0].mxu0 %v1285
        %v2681 = vpop.f32.mrb[0].mxu0
        %v2682 = vadd.f32 %v2201, %v2681
        %v2683 = vpop.f32.mrb[0].mxu0
        %v2684 = vpop.f32.mrb[0].mxu0
        %v2685 = vadd.f32 %v2204, %v2684
        %v2686 = vpop.f32.mrb[0].mxu0
        %2687 = vmatprep.mubr.bf16.mxu0 %v1810
        %2688 = vmatmul.mubr.bf16.gmra.mrb[0].mxu0 %v1289
        %v2689 = vpop.f32.mrb[0].mxu0
        %v2690 = vadd.f32 %v2209, %v2689
        %v2691 = vpop.f32.mrb[0].mxu0
        %v2692 = vpop.f32.mrb[0].mxu0
        %v2693 = vadd.f32 %v2212, %v2692
        %v2694 = vpop.f32.mrb[0].mxu0
        %2695 = vmatprep.mubr.bf16.mxu0 %v1813
        %2696 = vmatmul.mubr.bf16.gmra.mrb[0].mxu0 %v1293
        %v2697 = vpop.f32.mrb[0].mxu0
        %v2698 = vadd.f32 %v2217, %v2697
        %v2699 = vpop.f32.mrb[0].mxu0
        %v2700 = vpop.f32.mrb[0].mxu0
        %v2701 = vadd.f32 %v2220, %v2700
        %v2702 = vpop.f32.mrb[0].mxu0
        %2703 = vmatprep.mubr.bf16.mxu0 %v1816
        %2704 = vmatmul.mubr.bf16.gmra.mrb[0].mxu0 %v1297
        %v2705 = vpop.f32.mrb[0].mxu0
        %v2706 = vadd.f32 %v2225, %v2705
        %v2707 = vpop.f32.mrb[0].mxu0
        %v2708 = vpop.f32.mrb[0].mxu0
        %v2709 = vadd.f32 %v2228, %v2708
        %v2710 = vpop.f32.mrb[0].mxu0
        %2711 = vmatprep.mubr.bf16.mxu0 %v1819
        %2712 = vmatmul.mubr.bf16.gmra.mrb[0].mxu0 %v1301
        %v2713 = vpop.f32.mrb[0].mxu0
        %v2714 = vadd.f32 %v2233, %v2713
        %v2715 = vpop.f32.mrb[0].mxu0
        %v2716 = vpop.f32.mrb[0].mxu0
        %v2717 = vadd.f32 %v2236, %v2716
        %v2718 = vpop.f32.mrb[0].mxu0
        %2719 = vmatprep.mubr.bf16.mxu0 %v1822
        %2720 = vmatmul.mubr.bf16.gmra.mrb[0].mxu0 %v1305
        %v2721 = vpop.f32.mrb[0].mxu0
        %v2722 = vadd.f32 %v2241, %v2721
        %v2723 = vpop.f32.mrb[0].mxu0
        %v2724 = vpop.f32.mrb[0].mxu0
        %v2725 = vadd.f32 %v2244, %v2724
        %v2726 = vpop.f32.mrb[0].mxu0
        %2727 = vmatprep.mubr.bf16.mxu0 %v1825
        %2728 = vmatmul.mubr.bf16.gmra.mrb[0].mxu0 %v1309
        %v2729 = vpop.f32.mrb[0].mxu0
        %v2730 = vadd.f32 %v2249, %v2729
        %v2731 = vpop.f32.mrb[0].mxu0
        %v2732 = vpop.f32.mrb[0].mxu0
        %v2733 = vadd.f32 %v2252, %v2732
        %v2734 = vpop.f32.mrb[0].mxu0
        %2735 = vmatprep.mubr.bf16.mxu0 %v1828
        %2736 = vmatmul.mubr.bf16.gmra.mrb[0].mxu0 %v1313
        %v2737 = vpop.f32.mrb[0].mxu0
        %v2738 = vadd.f32 %v2257, %v2737
        %v2739 = vpop.f32.mrb[0].mxu0
        %v2740 = vpop.f32.mrb[0].mxu0
        %v2741 = vadd.f32 %v2260, %v2740
        %v2742 = vpop.f32.mrb[0].mxu0
        %2743 = vmatprep.mubr.bf16.mxu0 %v1831
        %2744 = vmatmul.mubr.bf16.gmra.mrb[0].mxu0 %v1317
        %v2745 = vpop.f32.mrb[0].mxu0
        %v2746 = vadd.f32 %v2265, %v2745
        %v2747 = vpop.f32.mrb[0].mxu0
        %v2748 = vpop.f32.mrb[0].mxu0
        %v2749 = vadd.f32 %v2268, %v2748
        %v2750 = vpop.f32.mrb[0].mxu0
        %2751 = vmatprep.mubr.bf16.mxu0 %v1834
        %2752 = vmatmul.mubr.bf16.gmra.mrb[0].mxu0 %v1321
        %v2753 = vpop.f32.mrb[0].mxu0
        %v2754 = vadd.f32 %v2273, %v2753
        %v2755 = vpop.f32.mrb[0].mxu0
        %v2756 = vpop.f32.mrb[0].mxu0
        %v2757 = vadd.f32 %v2276, %v2756
        %v2758 = vpop.f32.mrb[0].mxu0
        %2759 = vmatprep.mubr.bf16.mxu0 %v1837
        %2760 = vmatmul.mubr.bf16.gmra.mrb[0].mxu0 %v1325
        %v2761 = vpop.f32.mrb[0].mxu0
        %v2762 = vadd.f32 %v2281, %v2761
        %v2763 = vpop.f32.mrb[0].mxu0
        %v2764 = vpop.f32.mrb[0].mxu0
        %v2765 = vadd.f32 %v2284, %v2764
        %v2766 = vpop.f32.mrb[0].mxu0
        %2767 = vmatprep.mubr.bf16.mxu0 %v1840
        %2768 = vmatmul.mubr.bf16.gmra.mrb[0].mxu0 %v1329
        %v2769 = vpop.f32.mrb[0].mxu0
        %v2770 = vadd.f32 %v2289, %v2769
        %v2771 = vpop.f32.mrb[0].mxu0
        %v2772 = vpop.f32.mrb[0].mxu0
        %v2773 = vadd.f32 %v2292, %v2772
        %v2774 = vpop.f32.mrb[0].mxu0
        %2775 = vmatprep.mubr.bf16.mxu0 %v1843
        %2776 = vmatmul.mubr.bf16.gmra.mrb[0].mxu0 %v1333
        %v2777 = vpop.f32.mrb[0].mxu0
        %v2778 = vadd.f32 %v2297, %v2777
        %v2779 = vpop.f32.mrb[0].mxu0
        %v2780 = vpop.f32.mrb[0].mxu0
        %v2781 = vadd.f32 %v2300, %v2780
        %v2782 = vpop.f32.mrb[0].mxu0
        %2783 = vmatprep.mubr.bf16.mxu0 %v1846
        %2784 = vmatmul.mubr.bf16.gmra.mrb[0].mxu0 %v1337
        %v2785 = vpop.f32.mrb[0].mxu0
        %v2786 = vadd.f32 %v2305, %v2785
        %v2787 = vpop.f32.mrb[0].mxu0
        %v2788 = vpop.f32.mrb[0].mxu0
        %v2789 = vadd.f32 %v2308, %v2788
        %v2790 = vpop.f32.mrb[0].mxu0
        %2791 = vmatprep.mubr.bf16.mxu0 %v1849
        %2792 = vmatmul.mubr.bf16.gmra.mrb[0].mxu0 %v1341
        %v2793 = vpop.f32.mrb[0].mxu0
        %v2794 = vadd.f32 %v2313, %v2793
        %v2795 = vpop.f32.mrb[0].mxu0
        %v2796 = vpop.f32.mrb[0].mxu0
        %v2797 = vadd.f32 %v2316, %v2796
        %v2798 = vpop.f32.mrb[0].mxu0
        %2799 = vmatprep.mubr.bf16.mxu0 %v1852
        %2800 = vmatmul.mubr.bf16.gmra.mrb[0].mxu0 %v1345
        %v2801 = vpop.f32.mrb[0].mxu0
        %v2802 = vadd.f32 %v2321, %v2801
        %v2803 = vpop.f32.mrb[0].mxu0
        %v2804 = vpop.f32.mrb[0].mxu0
        %v2805 = vadd.f32 %v2324, %v2804
        %v2806 = vpop.f32.mrb[0].mxu0
        %2807 = vmatprep.mubr.bf16.mxu0 %v1855
        %2808 = vmatmul.mubr.bf16.gmra.mrb[0].mxu0 %v1349
        %v2809 = vpop.f32.mrb[0].mxu0
        %v2810 = vadd.f32 %v2329, %v2809
        %v2811 = vpop.f32.mrb[0].mxu0
        %v2812 = vpop.f32.mrb[0].mxu0
        %v2813 = vadd.f32 %v2332, %v2812
        %v2814 = vpop.f32.mrb[0].mxu0
        %2815 = vmatprep.mubr.bf16.mxu0 %v1858
        %2816 = vmatmul.mubr.bf16.gmra.mrb[0].mxu0 %v1353
        %v2817 = vpop.f32.mrb[0].mxu0
        %v2818 = vadd.f32 %v2337, %v2817
        %v2819 = vpop.f32.mrb[0].mxu0
        %v2820 = vpop.f32.mrb[0].mxu0
        %v2821 = vadd.f32 %v2340, %v2820
        %v2822 = vpop.f32.mrb[0].mxu0
        %2823 = vmatprep.mubr.bf16.mxu0 %v1861
        %2824 = vmatmul.mubr.bf16.gmra.mrb[0].mxu0 %v1357
        %v2825 = vpop.f32.mrb[0].mxu0
        %v2826 = vadd.f32 %v2345, %v2825
        %v2827 = vpop.f32.mrb[0].mxu0
        %v2828 = vpop.f32.mrb[0].mxu0
        %v2829 = vadd.f32 %v2348, %v2828
        %v2830 = vpop.f32.mrb[0].mxu0
        %2831 = vdwg.mxu0
        %v2832 = vpack.c.bf16 %v2389, %v2386
        %v2833 = vpack.c.bf16 %v2397, %v2394
        %v2834 = vpack.c.bf16 %v2405, %v2402
        %v2835 = vpack.c.bf16 %v2413, %v2410
        %v2836 = vpack.c.bf16 %v2421, %v2418
        %v2837 = vpack.c.bf16 %v2429, %v2426
        %v2838 = vpack.c.bf16 %v2437, %v2434
        %v2839 = vpack.c.bf16 %v2445, %v2442
        %v2840 = vpack.c.bf16 %v2453, %v2450
        %v2841 = vpack.c.bf16 %v2461, %v2458
        %v2842 = vpack.c.bf16 %v2469, %v2466
        %v2843 = vpack.c.bf16 %v2477, %v2474
        %v2844 = vpack.c.bf16 %v2485, %v2482
        %v2845 = vpack.c.bf16 %v2493, %v2490
        %v2846 = vpack.c.bf16 %v2501, %v2498
        %v2847 = vpack.c.bf16 %v2509, %v2506
        %v2848 = vpack.c.bf16 %v2517, %v2514
        %v2849 = vpack.c.bf16 %v2525, %v2522
        %v2850 = vpack.c.bf16 %v2533, %v2530
        %v2851 = vpack.c.bf16 %v2541, %v2538
        %v2852 = vpack.c.bf16 %v2549, %v2546
        %v2853 = vpack.c.bf16 %v2557, %v2554
        %v2854 = vpack.c.bf16 %v2565, %v2562
        %v2855 = vpack.c.bf16 %v2573, %v2570
        %v2856 = vpack.c.bf16 %v2581, %v2578
        %v2857 = vpack.c.bf16 %v2589, %v2586
        %v2858 = vpack.c.bf16 %v2597, %v2594
        %v2859 = vpack.c.bf16 %v2605, %v2602
        %v2860 = vpack.c.bf16 %v2613, %v2610
        %v2861 = vpack.c.bf16 %v2621, %v2618
        %v2862 = vpack.c.bf16 %v2629, %v2626
        %v2863 = vpack.c.bf16 %v2637, %v2634
        %v2864 = vpack.c.bf16 %v2645, %v2642
        %v2865 = vpack.c.bf16 %v2653, %v2650
        %v2866 = vpack.c.bf16 %v2661, %v2658
        %v2867 = vpack.c.bf16 %v2669, %v2666
        %v2868 = vpack.c.bf16 %v2677, %v2674
        %v2869 = vpack.c.bf16 %v2685, %v2682
        %v2870 = vpack.c.bf16 %v2693, %v2690
        %v2871 = vpack.c.bf16 %v2701, %v2698
        %v2872 = vpack.c.bf16 %v2709, %v2706
        %v2873 = vpack.c.bf16 %v2717, %v2714
        %v2874 = vpack.c.bf16 %v2725, %v2722
        %v2875 = vpack.c.bf16 %v2733, %v2730
        %v2876 = vpack.c.bf16 %v2741, %v2738
        %v2877 = vpack.c.bf16 %v2749, %v2746
        %v2878 = vpack.c.bf16 %v2757, %v2754
        %v2879 = vpack.c.bf16 %v2765, %v2762
        %v2880 = vpack.c.bf16 %v2773, %v2770
        %v2881 = vpack.c.bf16 %v2781, %v2778
        %v2882 = vpack.c.bf16 %v2789, %v2786
        %v2883 = vpack.c.bf16 %v2797, %v2794
        %v2884 = vpack.c.bf16 %v2805, %v2802
        %v2885 = vpack.c.bf16 %v2813, %v2810
        %v2886 = vpack.c.bf16 %v2821, %v2818
        %v2887 = vpack.c.bf16 %v2829, %v2826
        %v2944 = vunpack.c.l.b16 %v2832
        %v2945 = vunpack.c.h.b16 %v2832
        %v2946 = vunpack.c.l.b16 %v2833
        %v2947 = vunpack.c.h.b16 %v2833
        %v2948 = vunpack.c.l.b16 %v2834
        %v2949 = vunpack.c.h.b16 %v2834
        %v2950 = vunpack.c.l.b16 %v2835
        %v2951 = vunpack.c.h.b16 %v2835
        %v2952 = vunpack.c.l.b16 %v2836
        %v2953 = vunpack.c.h.b16 %v2836
        %v2954 = vunpack.c.l.b16 %v2837
        %v2955 = vunpack.c.h.b16 %v2837
        %v2956 = vunpack.c.l.b16 %v2838
        %v2957 = vunpack.c.h.b16 %v2838
        %v2958 = vunpack.c.l.b16 %v2839
        %v2959 = vunpack.c.h.b16 %v2839
        %v2960 = vunpack.c.l.b16 %v2840
        %v2961 = vunpack.c.h.b16 %v2840
        %v2962 = vunpack.c.l.b16 %v2841
        %v2963 = vunpack.c.h.b16 %v2841
        %v2964 = vunpack.c.l.b16 %v2842
        %v2965 = vunpack.c.h.b16 %v2842
        %v2966 = vunpack.c.l.b16 %v2843
        %v2967 = vunpack.c.h.b16 %v2843
        %v2968 = vunpack.c.l.b16 %v2844
        %v2969 = vunpack.c.h.b16 %v2844
        %v2970 = vunpack.c.l.b16 %v2845
        %v2971 = vunpack.c.h.b16 %v2845
        %v2972 = vunpack.c.l.b16 %v2846
        %v2973 = vunpack.c.h.b16 %v2846
        %v2974 = vunpack.c.l.b16 %v2847
        %v2975 = vunpack.c.h.b16 %v2847
        %v2976 = vunpack.c.l.b16 %v2848
        %v2977 = vunpack.c.h.b16 %v2848
        %v2978 = vunpack.c.l.b16 %v2849
        %v2979 = vunpack.c.h.b16 %v2849
        %v2980 = vunpack.c.l.b16 %v2850
        %v2981 = vunpack.c.h.b16 %v2850
        %v2982 = vunpack.c.l.b16 %v2851
        %v2983 = vunpack.c.h.b16 %v2851
        %v2984 = vunpack.c.l.b16 %v2852
        %v2985 = vunpack.c.h.b16 %v2852
        %v2986 = vunpack.c.l.b16 %v2853
        %v2987 = vunpack.c.h.b16 %v2853
        %v2988 = vunpack.c.l.b16 %v2854
        %v2989 = vunpack.c.h.b16 %v2854
        %v2990 = vunpack.c.l.b16 %v2855
        %v2991 = vunpack.c.h.b16 %v2855
        %v2992 = vunpack.c.l.b16 %v2856
        %v2993 = vunpack.c.h.b16 %v2856
        %v2994 = vunpack.c.l.b16 %v2857
        %v2995 = vunpack.c.h.b16 %v2857
        %v2996 = vunpack.c.l.b16 %v2858
        %v2997 = vunpack.c.h.b16 %v2858
        %v2998 = vunpack.c.l.b16 %v2859
        %v2999 = vunpack.c.h.b16 %v2859
        %v3000 = vunpack.c.l.b16 %v2860
        %v3001 = vunpack.c.h.b16 %v2860
        %v3002 = vunpack.c.l.b16 %v2861
        %v3003 = vunpack.c.h.b16 %v2861
        %v3004 = vunpack.c.l.b16 %v2862
        %v3005 = vunpack.c.h.b16 %v2862
        %v3006 = vunpack.c.l.b16 %v2863
        %v3007 = vunpack.c.h.b16 %v2863
        %v3008 = vunpack.c.l.b16 %v2864
        %v3009 = vunpack.c.h.b16 %v2864
        %v3010 = vunpack.c.l.b16 %v2865
        %v3011 = vunpack.c.h.b16 %v2865
        %v3012 = vunpack.c.l.b16 %v2866
        %v3013 = vunpack.c.h.b16 %v2866
        %v3014 = vunpack.c.l.b16 %v2867
        %v3015 = vunpack.c.h.b16 %v2867
        %v3016 = vunpack.c.l.b16 %v2868
        %v3017 = vunpack.c.h.b16 %v2868
        %v3018 = vunpack.c.l.b16 %v2869
        %v3019 = vunpack.c.h.b16 %v2869
        %v3020 = vunpack.c.l.b16 %v2870
        %v3021 = vunpack.c.h.b16 %v2870
        %v3022 = vunpack.c.l.b16 %v2871
        %v3023 = vunpack.c.h.b16 %v2871
        %v3024 = vunpack.c.l.b16 %v2872
        %v3025 = vunpack.c.h.b16 %v2872
        %v3026 = vunpack.c.l.b16 %v2873
        %v3027 = vunpack.c.h.b16 %v2873
        %v3028 = vunpack.c.l.b16 %v2874
        %v3029 = vunpack.c.h.b16 %v2874
        %v3030 = vunpack.c.l.b16 %v2875
        %v3031 = vunpack.c.h.b16 %v2875
        %v3032 = vunpack.c.l.b16 %v2876
        %v3033 = vunpack.c.h.b16 %v2876
        %v3034 = vunpack.c.l.b16 %v2877
        %v3035 = vunpack.c.h.b16 %v2877
        %v3036 = vunpack.c.l.b16 %v2878
        %v3037 = vunpack.c.h.b16 %v2878
        %v3038 = vunpack.c.l.b16 %v2879
        %v3039 = vunpack.c.h.b16 %v2879
        %v3040 = vunpack.c.l.b16 %v2880
        %v3041 = vunpack.c.h.b16 %v2880
        %v3042 = vunpack.c.l.b16 %v2881
        %v3043 = vunpack.c.h.b16 %v2881
        %v3044 = vunpack.c.l.b16 %v2882
        %v3045 = vunpack.c.h.b16 %v2882
        %v3046 = vunpack.c.l.b16 %v2883
        %v3047 = vunpack.c.h.b16 %v2883
        %v3048 = vunpack.c.l.b16 %v2884
        %v3049 = vunpack.c.h.b16 %v2884
        %v3050 = vunpack.c.l.b16 %v2885
        %v3051 = vunpack.c.h.b16 %v2885
        %v3052 = vunpack.c.l.b16 %v2886
        %v3053 = vunpack.c.h.b16 %v2886
        %v3054 = vunpack.c.l.b16 %v2887
        %v3055 = vunpack.c.h.b16 %v2887
        %v3056 = vpack.c.b16 %v2944, %v2944
        %v3057 = vpack.c.b16 %v2945, %v2945
        %v3058 = vpack.c.b16 %v2946, %v2946
        %v3059 = vpack.c.b16 %v2947, %v2947
        %v3060 = vpack.c.b16 %v2948, %v2948
        %v3061 = vpack.c.b16 %v2949, %v2949
        %v3062 = vpack.c.b16 %v2950, %v2950
        %v3063 = vpack.c.b16 %v2951, %v2951
        %v3064 = vpack.c.b16 %v2952, %v2952
        %v3065 = vpack.c.b16 %v2953, %v2953
        %v3066 = vpack.c.b16 %v2954, %v2954
        %v3067 = vpack.c.b16 %v2955, %v2955
        %v3068 = vpack.c.b16 %v2956, %v2956
        %v3069 = vpack.c.b16 %v2957, %v2957
        %v3070 = vpack.c.b16 %v2958, %v2958
        %v3071 = vpack.c.b16 %v2959, %v2959
        %v3072 = vpack.c.b16 %v2960, %v2960
        %v3073 = vpack.c.b16 %v2961, %v2961
        %v3074 = vpack.c.b16 %v2962, %v2962
        %v3075 = vpack.c.b16 %v2963, %v2963
        %v3076 = vpack.c.b16 %v2964, %v2964
        %v3077 = vpack.c.b16 %v2965, %v2965
        %v3078 = vpack.c.b16 %v2966, %v2966
        %v3079 = vpack.c.b16 %v2967, %v2967
        %v3080 = vpack.c.b16 %v2968, %v2968
        %v3081 = vpack.c.b16 %v2969, %v2969
        %v3082 = vpack.c.b16 %v2970, %v2970
        %v3083 = vpack.c.b16 %v2971, %v2971
        %v3084 = vpack.c.b16 %v2972, %v2972
        %v3085 = vpack.c.b16 %v2973, %v2973
        %v3086 = vpack.c.b16 %v2974, %v2974
        %v3087 = vpack.c.b16 %v2975, %v2975
        %v3088 = vpack.c.b16 %v2976, %v2976
        %v3089 = vpack.c.b16 %v2977, %v2977
        %v3090 = vpack.c.b16 %v2978, %v2978
        %v3091 = vpack.c.b16 %v2979, %v2979
        %v3092 = vpack.c.b16 %v2980, %v2980
        %v3093 = vpack.c.b16 %v2981, %v2981
        %v3094 = vpack.c.b16 %v2982, %v2982
        %v3095 = vpack.c.b16 %v2983, %v2983
        %v3096 = vpack.c.b16 %v2984, %v2984
        %v3097 = vpack.c.b16 %v2985, %v2985
        %v3098 = vpack.c.b16 %v2986, %v2986
        %v3099 = vpack.c.b16 %v2987, %v2987
        %v3100 = vpack.c.b16 %v2988, %v2988
        %v3101 = vpack.c.b16 %v2989, %v2989
        %v3102 = vpack.c.b16 %v2990, %v2990
        %v3103 = vpack.c.b16 %v2991, %v2991
        %v3104 = vpack.c.b16 %v2992, %v2992
        %v3105 = vpack.c.b16 %v2993, %v2993
        %v3106 = vpack.c.b16 %v2994, %v2994
        %v3107 = vpack.c.b16 %v2995, %v2995
        %v3108 = vpack.c.b16 %v2996, %v2996
        %v3109 = vpack.c.b16 %v2997, %v2997
        %v3110 = vpack.c.b16 %v2998, %v2998
        %v3111 = vpack.c.b16 %v2999, %v2999
        %v3112 = vpack.c.b16 %v3000, %v3000
        %v3113 = vpack.c.b16 %v3001, %v3001
        %v3114 = vpack.c.b16 %v3002, %v3002
        %v3115 = vpack.c.b16 %v3003, %v3003
        %v3116 = vpack.c.b16 %v3004, %v3004
        %v3117 = vpack.c.b16 %v3005, %v3005
        %v3118 = vpack.c.b16 %v3006, %v3006
        %v3119 = vpack.c.b16 %v3007, %v3007
        %v3120 = vpack.c.b16 %v3008, %v3008
        %v3121 = vpack.c.b16 %v3009, %v3009
        %v3122 = vpack.c.b16 %v3010, %v3010
        %v3123 = vpack.c.b16 %v3011, %v3011
        %v3124 = vpack.c.b16 %v3012, %v3012
        %v3125 = vpack.c.b16 %v3013, %v3013
        %v3126 = vpack.c.b16 %v3014, %v3014
        %v3127 = vpack.c.b16 %v3015, %v3015
        %v3128 = vpack.c.b16 %v3016, %v3016
        %v3129 = vpack.c.b16 %v3017, %v3017
        %v3130 = vpack.c.b16 %v3018, %v3018
        %v3131 = vpack.c.b16 %v3019, %v3019
        %v3132 = vpack.c.b16 %v3020, %v3020
        %v3133 = vpack.c.b16 %v3021, %v3021
        %v3134 = vpack.c.b16 %v3022, %v3022
        %v3135 = vpack.c.b16 %v3023, %v3023
        %v3136 = vpack.c.b16 %v3024, %v3024
        %v3137 = vpack.c.b16 %v3025, %v3025
        %v3138 = vpack.c.b16 %v3026, %v3026
        %v3139 = vpack.c.b16 %v3027, %v3027
        %v3140 = vpack.c.b16 %v3028, %v3028
        %v3141 = vpack.c.b16 %v3029, %v3029
        %v3142 = vpack.c.b16 %v3030, %v3030
        %v3143 = vpack.c.b16 %v3031, %v3031
        %v3144 = vpack.c.b16 %v3032, %v3032
        %v3145 = vpack.c.b16 %v3033, %v3033
        %v3146 = vpack.c.b16 %v3034, %v3034
        %v3147 = vpack.c.b16 %v3035, %v3035
        %v3148 = vpack.c.b16 %v3036, %v3036
        %v3149 = vpack.c.b16 %v3037, %v3037
        %v3150 = vpack.c.b16 %v3038, %v3038
        %v3151 = vpack.c.b16 %v3039, %v3039
        %v3152 = vpack.c.b16 %v3040, %v3040
        %v3153 = vpack.c.b16 %v3041, %v3041
        %v3154 = vpack.c.b16 %v3042, %v3042
        %v3155 = vpack.c.b16 %v3043, %v3043
        %v3156 = vpack.c.b16 %v3044, %v3044
        %v3157 = vpack.c.b16 %v3045, %v3045
        %v3158 = vpack.c.b16 %v3046, %v3046
        %v3159 = vpack.c.b16 %v3047, %v3047
        %v3160 = vpack.c.b16 %v3048, %v3048
        %v3161 = vpack.c.b16 %v3049, %v3049
        %v3162 = vpack.c.b16 %v3050, %v3050
        %v3163 = vpack.c.b16 %v3051, %v3051
        %v3164 = vpack.c.b16 %v3052, %v3052
        %v3165 = vpack.c.b16 %v3053, %v3053
        %v3166 = vpack.c.b16 %v3054, %v3054
        %v3167 = vpack.c.b16 %v3055, %v3055
        %3280 = vst [vmem:[%s166] sm:$0xf] %v3056
        %3281 = vst [vmem:[%s166 + $0x4] sm:$0xf] %v3057
        %3282 = vst [vmem:[%s166 + $0x8] sm:$0xf] %v3058
        %3283 = vst [vmem:[%s166 + $0xc] sm:$0xf] %v3059
        %3284 = vst [vmem:[%s166 + $0x10] sm:$0xf] %v3060
        %3285 = vst [vmem:[%s166 + $0x14] sm:$0xf] %v3061
        %3286 = vst [vmem:[%s166 + $0x18] sm:$0xf] %v3062
        %3287 = vst [vmem:[%s166 + $0x1c] sm:$0xf] %v3063
        %3288 = vst [vmem:[%s166 + $0x20] sm:$0xf] %v3064
        %3289 = vst [vmem:[%s166 + $0x24] sm:$0xf] %v3065
        %3290 = vst [vmem:[%s166 + $0x28] sm:$0xf] %v3066
        %3291 = vst [vmem:[%s166 + $0x2c] sm:$0xf] %v3067
        %3292 = vst [vmem:[%s166 + $0x30] sm:$0xf] %v3068
        %3293 = vst [vmem:[%s166 + $0x34] sm:$0xf] %v3069
        %3294 = vst [vmem:[%s166 + $0x38] sm:$0xf] %v3070
        %3295 = vst [vmem:[%s166 + $0x3c] sm:$0xf] %v3071
        %3296 = vst [vmem:[%s166 + $0x40] sm:$0xf] %v3072
        %3297 = vst [vmem:[%s166 + $0x44] sm:$0xf] %v3073
        %3298 = vst [vmem:[%s166 + $0x48] sm:$0xf] %v3074
        %3299 = vst [vmem:[%s166 + $0x4c] sm:$0xf] %v3075
        %3300 = vst [vmem:[%s166 + $0x50] sm:$0xf] %v3076
        %3301 = vst [vmem:[%s166 + $0x54] sm:$0xf] %v3077
        %3302 = vst [vmem:[%s166 + $0x58] sm:$0xf] %v3078
        %3303 = vst [vmem:[%s166 + $0x5c] sm:$0xf] %v3079
        %3304 = vst [vmem:[%s166 + $0x60] sm:$0xf] %v3080
        %3305 = vst [vmem:[%s166 + $0x64] sm:$0xf] %v3081
        %3306 = vst [vmem:[%s166 + $0x68] sm:$0xf] %v3082
        %3307 = vst [vmem:[%s166 + $0x6c] sm:$0xf] %v3083
        %3308 = vst [vmem:[%s166 + $0x70] sm:$0xf] %v3084
        %3309 = vst [vmem:[%s166 + $0x74] sm:$0xf] %v3085
        %3310 = vst [vmem:[%s166 + $0x78] sm:$0xf] %v3086
        %3311 = vst [vmem:[%s166 + $0x7c] sm:$0xf] %v3087
        %3312 = vst [vmem:[%s166 + $0x80] sm:$0xf] %v3088
        %3313 = vst [vmem:[%s166 + $0x84] sm:$0xf] %v3089
        %3314 = vst [vmem:[%s166 + $0x88] sm:$0xf] %v3090
        %3315 = vst [vmem:[%s166 + $0x8c] sm:$0xf] %v3091
        %3316 = vst [vmem:[%s166 + $0x90] sm:$0xf] %v3092
        %3317 = vst [vmem:[%s166 + $0x94] sm:$0xf] %v3093
        %3318 = vst [vmem:[%s166 + $0x98] sm:$0xf] %v3094
        %3319 = vst [vmem:[%s166 + $0x9c] sm:$0xf] %v3095
        %3320 = vst [vmem:[%s166 + $0xa0] sm:$0xf] %v3096
        %3321 = vst [vmem:[%s166 + $0xa4] sm:$0xf] %v3097
        %3322 = vst [vmem:[%s166 + $0xa8] sm:$0xf] %v3098
        %3323 = vst [vmem:[%s166 + $0xac] sm:$0xf] %v3099
        %3324 = vst [vmem:[%s166 + $0xb0] sm:$0xf] %v3100
        %3325 = vst [vmem:[%s166 + $0xb4] sm:$0xf] %v3101
        %3326 = vst [vmem:[%s166 + $0xb8] sm:$0xf] %v3102
        %3327 = vst [vmem:[%s166 + $0xbc] sm:$0xf] %v3103
        %3328 = vst [vmem:[%s166 + $0xc0] sm:$0xf] %v3104
        %3329 = vst [vmem:[%s166 + $0xc4] sm:$0xf] %v3105
        %3330 = vst [vmem:[%s166 + $0xc8] sm:$0xf] %v3106
        %3331 = vst [vmem:[%s166 + $0xcc] sm:$0xf] %v3107
        %3332 = vst [vmem:[%s166 + $0xd0] sm:$0xf] %v3108
        %3333 = vst [vmem:[%s166 + $0xd4] sm:$0xf] %v3109
        %3334 = vst [vmem:[%s166 + $0xd8] sm:$0xf] %v3110
        %3335 = vst [vmem:[%s166 + $0xdc] sm:$0xf] %v3111
        %3336 = vst [vmem:[%s166 + $0xe0] sm:$0xf] %v3112
        %3337 = vst [vmem:[%s166 + $0xe4] sm:$0xf] %v3113
        %3338 = vst [vmem:[%s166 + $0xe8] sm:$0xf] %v3114
        %3339 = vst [vmem:[%s166 + $0xec] sm:$0xf] %v3115
        %3340 = vst [vmem:[%s166 + $0xf0] sm:$0xf] %v3116
        %3341 = vst [vmem:[%s166 + $0xf4] sm:$0xf] %v3117
        %3342 = vst [vmem:[%s166 + $0xf8] sm:$0xf] %v3118
        %3343 = vst [vmem:[%s166 + $0xfc] sm:$0xf] %v3119
        %3344 = vst [vmem:[%s166 + $0x100] sm:$0xf] %v3120
        %3345 = vst [vmem:[%s166 + $0x104] sm:$0xf] %v3121
        %3346 = vst [vmem:[%s166 + $0x108] sm:$0xf] %v3122
        %3347 = vst [vmem:[%s166 + $0x10c] sm:$0xf] %v3123
        %3348 = vst [vmem:[%s166 + $0x110] sm:$0xf] %v3124
        %3349 = vst [vmem:[%s166 + $0x114] sm:$0xf] %v3125
        %3350 = vst [vmem:[%s166 + $0x118] sm:$0xf] %v3126
        %3351 = vst [vmem:[%s166 + $0x11c] sm:$0xf] %v3127
        %3352 = vst [vmem:[%s166 + $0x120] sm:$0xf] %v3128
        %3353 = vst [vmem:[%s166 + $0x124] sm:$0xf] %v3129
        %3354 = vst [vmem:[%s166 + $0x128] sm:$0xf] %v3130
        %3355 = vst [vmem:[%s166 + $0x12c] sm:$0xf] %v3131
        %3356 = vst [vmem:[%s166 + $0x130] sm:$0xf] %v3132
        %3357 = vst [vmem:[%s166 + $0x134] sm:$0xf] %v3133
        %3358 = vst [vmem:[%s166 + $0x138] sm:$0xf] %v3134
        %3359 = vst [vmem:[%s166 + $0x13c] sm:$0xf] %v3135
        %3360 = vst [vmem:[%s166 + $0x140] sm:$0xf] %v3136
        %3361 = vst [vmem:[%s166 + $0x144] sm:$0xf] %v3137
        %3362 = vst [vmem:[%s166 + $0x148] sm:$0xf] %v3138
        %3363 = vst [vmem:[%s166 + $0x14c] sm:$0xf] %v3139
        %3364 = vst [vmem:[%s166 + $0x150] sm:$0xf] %v3140
        %3365 = vst [vmem:[%s166 + $0x154] sm:$0xf] %v3141
        %3366 = vst [vmem:[%s166 + $0x158] sm:$0xf] %v3142
        %3367 = vst [vmem:[%s166 + $0x15c] sm:$0xf] %v3143
        %3368 = vst [vmem:[%s166 + $0x160] sm:$0xf] %v3144
        %3369 = vst [vmem:[%s166 + $0x164] sm:$0xf] %v3145
        %3370 = vst [vmem:[%s166 + $0x168] sm:$0xf] %v3146
        %3371 = vst [vmem:[%s166 + $0x16c] sm:$0xf] %v3147
        %3372 = vst [vmem:[%s166 + $0x170] sm:$0xf] %v3148
        %3373 = vst [vmem:[%s166 + $0x174] sm:$0xf] %v3149
        %3374 = vst [vmem:[%s166 + $0x178] sm:$0xf] %v3150
        %3375 = vst [vmem:[%s166 + $0x17c] sm:$0xf] %v3151
        %3376 = vst [vmem:[%s166 + $0x180] sm:$0xf] %v3152
        %3377 = vst [vmem:[%s166 + $0x184] sm:$0xf] %v3153
        %3378 = vst [vmem:[%s166 + $0x188] sm:$0xf] %v3154
        %3379 = vst [vmem:[%s166 + $0x18c] sm:$0xf] %v3155
        %3380 = vst [vmem:[%s166 + $0x190] sm:$0xf] %v3156
        %3381 = vst [vmem:[%s166 + $0x194] sm:$0xf] %v3157
        %3382 = vst [vmem:[%s166 + $0x198] sm:$0xf] %v3158
        %3383 = vst [vmem:[%s166 + $0x19c] sm:$0xf] %v3159
        %3384 = vst [vmem:[%s166 + $0x1a0] sm:$0xf] %v3160
        %3385 = vst [vmem:[%s166 + $0x1a4] sm:$0xf] %v3161
        %3386 = vst [vmem:[%s166 + $0x1a8] sm:$0xf] %v3162
        %3387 = vst [vmem:[%s166 + $0x1ac] sm:$0xf] %v3163
        %3388 = vst [vmem:[%s166 + $0x1b0] sm:$0xf] %v3164
        %3389 = vst [vmem:[%s166 + $0x1b4] sm:$0xf] %v3165
        %3390 = vst [vmem:[%s166 + $0x1b8] sm:$0xf] %v3166
        %3391 = vst [vmem:[%s166 + $0x1bc] sm:$0xf] %v3167
        %s3392 = sand.u32 %s93, 1
        %s3393 = scalar_lea.sflag [#allocation3], %s3392
        %s3394 = sand.u32 %s93, 1
        %s3395 = smul.addr %s3394, 448
        %s3396 = scalar_lea.vmem [#allocation2], %s3395
        // Predicated region
        $region33: #{_conv3d_im2col_impl.1} parent=31 // pred_check
          %p3397 = pneg %p103
        $region34: #{_conv3d_im2col_impl.1} parent=31 // pred_check_branch
          %3399 = sbr.rel (%p3397) target = $region36
        $region35: #{_conv3d_im2col_impl.1} parent=31 // pred_region
          %s3400 = smul.u32 112, %s17
          %s3402 = ssub.s32 7168, 7168
          %3403 = vsyncadd %s3393, %s3402
          %s3404 = smul.addr %s3400, 64
          %s3405 = scalar_lea.hbm %s3, %s3404
          %s3406 = sshll.u32 %s3396, 4
          %s3407 = int_to_ptr.vmem [resolvable:$true] %s3406
          %3412 = dma.vmem_to_hbm [thread:$0]  %s3407, 7168, %s3405, %s3393, 64, 64, 4
        $region36: #{_conv3d_im2col_impl.1} parent=31 // pred_fallthru
          _
      $region32: #{_conv3d_im2col_impl.1} parent=5 // pred_fallthru
        _
      %p3413 = scmp.le.s32.totalorder 2, %s12
      // Predicated region
      $region37: #{_conv3d_im2col_impl.1} parent=5 // pred_check
        %p3414 = pneg %p3413
      $region38: #{_conv3d_im2col_impl.1} parent=5 // pred_check_branch
        %3416 = sbr.rel (%p3414) target = $region40
      $region39: #{_conv3d_im2col_impl.1} parent=5 // pred_region
        %s3417 = ssub.s32 %s12, 2
        // Predicated region
        $region41: #{_conv3d_im2col_impl.1} parent=39 // pred_check
          %p3418 = pneg %p109
        $region42: #{_conv3d_im2col_impl.1} parent=39 // pred_check_branch
          %3420 = sbr.rel (%p3418) target = $region44
        $region43: #{_conv3d_im2col_impl.1} parent=39 // pred_region
          %s3421 = sand.u32 %s94, 1
          %s3422 = scalar_lea.sflag [#allocation3], %s3421
          %s3423 = sand.u32 %s94, 1
          %s3424 = smul.addr %s3423, 448
          %s3425 = scalar_lea.vmem [#allocation2], %s3424
          %3426 = dma.done %s3422, 7168
        $region44: #{_conv3d_im2col_impl.1} parent=39 // pred_fallthru
          _
      $region40: #{_conv3d_im2col_impl.1} parent=5 // pred_fallthru
        _
    $region6: #{_conv3d_im2col_impl.1} parent=1 // loop_footer
      %s16 = sadd.s32 1, %s12
    $region7: #{_conv3d_im2col_impl.1} parent=1 // loop_footer_branch
      %11 = sbr.rel target = $region3
    $region8: #{_conv3d_im2col_impl.1} parent=1 // loop_exit
      _
    %3427 = vsyncpa [#allocation3], 1
    %s3428 = scalar_lea.sflag [#allocation3], 1
    %3429 = vsyncpa %s3428, 1

</llo_original>
